<compile_context>
chip_gen: v7x
topology: tpu7x:2x2x1
jax: 0.10.0
libtpu: 0.0.40
codegen_flags: <defaults>
</compile_context>

<pallas_src>
import functools
import math

import jax
import jax.numpy as jnp
from jax.experimental import pallas as pl
from jax.experimental.pallas import tpu as pltpu


def _layer_norm(x, gamma, beta, eps=1e-5):
    mean = jnp.mean(x, axis=-1, keepdims=True)
    var = jnp.mean((x - mean) ** 2, axis=-1, keepdims=True)
    return (x - mean) * jax.lax.rsqrt(var + eps) * gamma + beta


def encoder_layer_kernel(
    x_ref, mask_ref,
    wqkv_ref, bqkv_ref, wo_ref, bo_ref,
    g1_ref, be1_ref,
    w1_ref, b1_ref, w2_ref, b2_ref,
    g2_ref, be2_ref,
    o_ref,
    *, num_heads, head_dim,
):
    bblk, S, D = x_ref.shape
    H, dk = num_heads, head_dim
    HDK = H * dk
    inv_scale = 1.0 / math.sqrt(float(dk))      # scale = dim_q ** 0.5

    x = x_ref[...]                               # (bblk, S, D) fp32
    x2 = x.reshape(bblk * S, D)                  # row-flat (contiguous, S % 8 == 0)
    xb = x2.astype(jnp.bfloat16)
    mask = mask_ref[...]                         # (S, S) additive fp32 mask

    # ---- fused Q/K/V projection: one full-width bf16 matmul, fp32 accumulation ----
    qkv = jnp.dot(xb, wqkv_ref[...], preferred_element_type=jnp.float32) + bqkv_ref[...]

    # ---- attention: per-head scores/softmax/PV, output projection folded in (no concat) ----
    attn = jnp.zeros((bblk * S, D), jnp.float32)
    for h in range(H):                           # static unroll; projections already fused above
        q = (qkv[:, h * dk:(h + 1) * dk] * inv_scale)
        q = q.reshape(bblk, S, dk).astype(jnp.bfloat16)
        k = qkv[:, HDK + h * dk: HDK + (h + 1) * dk]
        k = k.reshape(bblk, S, dk).astype(jnp.bfloat16)
        v = qkv[:, 2 * HDK + h * dk: 2 * HDK + (h + 1) * dk]
        v = v.reshape(bblk, S, dk).astype(jnp.bfloat16)

        # batched matmul contracting dk (no explicit transpose of k)
        s = jnp.einsum("bqd,bkd->bqk", q, k, preferred_element_type=jnp.float32)
        s = s + mask[None]                       # (bblk, S, S) fp32

        m = jnp.max(s, axis=-1, keepdims=True)
        e = jnp.exp(s - m)
        p = e * pl.reciprocal(jnp.sum(e, axis=-1, keepdims=True), approx=True)

        ctx = jnp.einsum("bqk,bkd->bqd", p.astype(jnp.bfloat16), v,
                         preferred_element_type=jnp.float32)      # (bblk, S, dk)
        attn = attn + jnp.dot(ctx.reshape(bblk * S, dk).astype(jnp.bfloat16),
                              wo_ref[h * dk:(h + 1) * dk, :],
                              preferred_element_type=jnp.float32)
    attn = attn + bo_ref[...]

    # ---- residual + LayerNorm 1 (dropout == identity in eval mode) ----
    y1 = _layer_norm(x2 + attn, g1_ref[...], be1_ref[...])

    # ---- feed-forward: Linear -> ReLU -> Linear (bf16 matmuls, fp32 accum) ----
    h1 = jnp.dot(y1.astype(jnp.bfloat16), w1_ref[...],
                 preferred_element_type=jnp.float32) + b1_ref[...]
    h1 = jnp.maximum(h1, 0.0)
    ff = jnp.dot(h1.astype(jnp.bfloat16), w2_ref[...],
                 preferred_element_type=jnp.float32) + b2_ref[...]

    # ---- residual + LayerNorm 2 ----
    y2 = _layer_norm(y1 + ff, g2_ref[...], be2_ref[...])

    o_ref[...] = y2.reshape(bblk, S, D).astype(o_ref.dtype)


def transformer_encoder_layer(x, mask, params, *, block_b=None):
    B, S, D = x.shape
    H, _, dk = params["wq"].shape
    HDK = H * dk
    F = params["w1"].shape[1]

    if block_b is None:
        block_b = 2 if B % 2 == 0 else 1
    assert B % block_b == 0

    # Fuse per-head Q/K/V weights into one (D, 3*H*dk) matrix; store matmul weights in bf16.
    def stack_w(w):   # (H, D, dk) -> (D, H*dk)
        return jnp.transpose(w, (1, 0, 2)).reshape(D, HDK)

    def stack_b(b):   # (H, 1, dk) -> (1, H*dk)
        return jnp.transpose(b, (1, 0, 2)).reshape(1, HDK)

    wqkv = jnp.concatenate(
        [stack_w(params["wq"]), stack_w(params["wk"]), stack_w(params["wv"])],
        axis=1).astype(jnp.bfloat16)
    bqkv = jnp.concatenate(
        [stack_b(params["bq"]), stack_b(params["bk"]), stack_b(params["bv"])],
        axis=1).astype(jnp.float32)
    wo = params["wo"].astype(jnp.bfloat16)
    w1 = params["w1"].astype(jnp.bfloat16)
    w2 = params["w2"].astype(jnp.bfloat16)

    # single (S, S) mask shared across batch (constant index_map -> streamed once)
    mask2 = (mask[0] if mask.ndim == 3 else mask).astype(jnp.float32)

    def rep_spec(shape):
        return pl.BlockSpec(shape, lambda b, _n=len(shape): (0,) * _n)

    in_specs = [
        pl.BlockSpec((block_b, S, D), lambda b: (b, 0, 0)),   # x
        rep_spec((S, S)),           # mask
        rep_spec((D, 3 * HDK)),     # wqkv  (bf16)
        rep_spec((1, 3 * HDK)),     # bqkv
        rep_spec((HDK, D)),         # wo    (bf16)
        rep_spec((1, D)),           # bo
        rep_spec((1, D)),           # ln1 gamma
        rep_spec((1, D)),           # ln1 beta
        rep_spec((D, F)),           # w1    (bf16)
        rep_spec((1, F)),           # b1
        rep_spec((F, D)),           # w2    (bf16)
        rep_spec((1, D)),           # b2
        rep_spec((1, D)),           # ln2 gamma
        rep_spec((1, D)),           # ln2 beta
    ]

    # advisory cost estimate for XLA scheduling
    flops = int(2 * B * S * D * 3 * HDK          # QKV projection
                + 4 * B * H * S * S * dk         # scores + PV
                + 2 * B * S * HDK * D            # output projection
                + 4 * B * S * D * F)             # FFN
    bytes_accessed = int(
        B * S * D * 4                            # x
        + S * S * 4                              # mask
        + (wqkv.size + wo.size + w1.size + w2.size) * 2
        + (bqkv.size + 5 * D + F) * 4            # biases + LN params
        + B * S * D * 4)                         # output
    cost = pl.CostEstimate(flops=flops, transcendentals=int(B * H * S * S),
                           bytes_accessed=bytes_accessed)

    # rough VMEM working-set bound (double-buffered blocks + fp32 intermediates), with floor/cap
    block_bytes = int(2 * block_b * S * D * 4 + S * S * 4
                      + (wqkv.size + wo.size + w1.size + w2.size) * 2
                      + (3 * HDK + 5 * D + F) * 4)
    interm_bytes = int(block_b * S * (3 * HDK + 2 * S + 2 * F + 4 * D) * 4)
    vmem_limit = int(min(max(2 * block_bytes + interm_bytes + (4 << 20), 32 << 20), 64 << 20))

    kernel = functools.partial(encoder_layer_kernel, num_heads=H, head_dim=dk)

    return pl.pallas_call(
        kernel,
        out_shape=jax.ShapeDtypeStruct((B, S, D), jnp.float32),
        grid_spec=pltpu.PrefetchScalarGridSpec(
            num_scalar_prefetch=0,
            grid=(B // block_b,),
            in_specs=in_specs,
            out_specs=pl.BlockSpec((block_b, S, D), lambda b: (b, 0, 0)),
        ),
        compiler_params=pltpu.CompilerParams(
            dimension_semantics=("parallel",),
            vmem_limit_bytes=vmem_limit,
        ),
        cost_estimate=cost,
    )(
        x, mask2,
        wqkv, bqkv, wo, params["bo"],
        params["g1"], params["be1"],
        w1, params["b1"], w2, params["b2"],
        params["g2"], params["be2"],
    )


# ---------------- pure-JAX fp32 reference (matches the PyTorch module) ----------------
def reference(x, mask, p):
    H, _, dk = p["wq"].shape
    scale = math.sqrt(float(dk))
    heads = []
    for h in range(H):
        q = x @ p["wq"][h] + p["bq"][h]
        k = x @ p["wk"][h] + p["bk"][h]
        v = x @ p["wv"][h] + p["bv"][h]
        s = jnp.einsum("bqd,bkd->bqk", q, k) / scale + mask
        a = jax.nn.softmax(s, axis=-1)
        heads.append(jnp.einsum("bqk,bkd->bqd", a, v))
    cat = jnp.concatenate(heads, axis=-1)
    attn = cat @ p["wo"] + p["bo"]
    y1 = _layer_norm(x + attn, p["g1"], p["be1"])
    ff = jnp.maximum(y1 @ p["w1"] + p["b1"], 0.0) @ p["w2"] + p["b2"]
    return _layer_norm(y1 + ff, p["g2"], p["be2"])


def init_params(key, dim_model, num_heads, dim_ff):
    dk = dim_model // num_heads
    keys = jax.random.split(key, 16)

    def uni(k, shape, fan_in):
        bound = 1.0 / math.sqrt(fan_in)
        return jax.random.uniform(k, shape, jnp.float32, -bound, bound)

    return {
        "wq": uni(keys[0], (num_heads, dim_model, dk), dim_model),
        "bq": uni(keys[1], (num_heads, 1, dk), dim_model),
        "wk": uni(keys[2], (num_heads, dim_model, dk), dim_model),
        "bk": uni(keys[3], (num_heads, 1, dk), dim_model),
        "wv": uni(keys[4], (num_heads, dim_model, dk), dim_model),
        "bv": uni(keys[5], (num_heads, 1, dk), dim_model),
        "wo": uni(keys[6], (num_heads * dk, dim_model), num_heads * dk),
        "bo": uni(keys[7], (1, dim_model), num_heads * dk),
        "g1": jnp.ones((1, dim_model), jnp.float32),
        "be1": jnp.zeros((1, dim_model), jnp.float32),
        "w1": uni(keys[8], (dim_model, dim_ff), dim_model),
        "b1": uni(keys[9], (1, dim_ff), dim_model),
        "w2": uni(keys[10], (dim_ff, dim_model), dim_ff),
        "b2": uni(keys[11], (1, dim_model), dim_ff),
        "g2": jnp.ones((1, dim_model), jnp.float32),
        "be2": jnp.zeros((1, dim_model), jnp.float32),
    }


if __name__ == "__main__":
    # small config consistent with the module (dim_model divisible by num_heads),
    # chosen lane/sublane friendly: D multiple of 128, S multiple of 8.
    B, S, D, H, F = 4, 16, 128, 4, 256

    key = jax.random.PRNGKey(0)
    kx, kp = jax.random.split(key)
    x = jax.random.normal(kx, (B, S, D), jnp.float32)

    # additive causal mask (0 on/below diagonal, large negative above), shared across batch
    causal = jnp.tril(jnp.ones((S, S), jnp.float32))
    mask = jnp.where(causal > 0, 0.0, -1e9).astype(jnp.float32)

    params = init_params(kp, D, H, F)

    out = jax.block_until_ready(transformer_encoder_layer(x, mask, params))
    ref = jax.block_until_ready(reference(x, mask, params))

    assert out.shape == (B, S, D)
    err = float(jnp.max(jnp.abs(out - ref)))
    # bf16 matmul operands + approx reciprocal vs. fp32 reference
    assert err < 3e-2, f"mismatch vs JAX reference: max abs err {err}"

    print("KERNEL_OK")
</pallas_src>

<mosaic_0001>
module attributes {stable_mosaic.version = 11 : i64} {
  func.func @encoder_layer_kernel(%arg0: i32, %arg1: memref<2x16x128xf32, #tpu.memory_space<vmem>>, %arg2: memref<16x16xf32, #tpu.memory_space<vmem>>, %arg3: memref<128x384xbf16, #tpu.memory_space<vmem>>, %arg4: memref<1x384xf32, #tpu.memory_space<vmem>>, %arg5: memref<128x128xbf16, #tpu.memory_space<vmem>>, %arg6: memref<1x128xf32, #tpu.memory_space<vmem>>, %arg7: memref<1x128xf32, #tpu.memory_space<vmem>>, %arg8: memref<1x128xf32, #tpu.memory_space<vmem>>, %arg9: memref<128x256xbf16, #tpu.memory_space<vmem>>, %arg10: memref<1x256xf32, #tpu.memory_space<vmem>>, %arg11: memref<256x128xbf16, #tpu.memory_space<vmem>>, %arg12: memref<1x128xf32, #tpu.memory_space<vmem>>, %arg13: memref<1x128xf32, #tpu.memory_space<vmem>>, %arg14: memref<1x128xf32, #tpu.memory_space<vmem>>, %arg15: memref<2x16x128xf32, #tpu.memory_space<vmem>>) attributes {dimension_semantics = [#tpu.dimension_semantics<parallel>], iteration_bounds = array<i64: 2>, scalar_prefetch = 0 : i64, scratch_operands = 0 : i64, tpu.core_type = #tpu.core_type<tc>, window_params = [{transform_indices = @transform_0, window_bounds = array<i64: 2, 16, 128>}, {pipeline_mode = #tpu.pipeline_mode<synchronous>, transform_indices = @transform_1, window_bounds = array<i64: 16, 16>}, {pipeline_mode = #tpu.pipeline_mode<synchronous>, transform_indices = @transform_2, window_bounds = array<i64: 128, 384>}, {pipeline_mode = #tpu.pipeline_mode<synchronous>, transform_indices = @transform_3, window_bounds = array<i64: 1, 384>}, {pipeline_mode = #tpu.pipeline_mode<synchronous>, transform_indices = @transform_4, window_bounds = array<i64: 128, 128>}, {pipeline_mode = #tpu.pipeline_mode<synchronous>, transform_indices = @transform_5, window_bounds = array<i64: 1, 128>}, {pipeline_mode = #tpu.pipeline_mode<synchronous>, transform_indices = @transform_6, window_bounds = array<i64: 1, 128>}, {pipeline_mode = #tpu.pipeline_mode<synchronous>, transform_indices = @transform_7, window_bounds = array<i64: 1, 128>}, {pipeline_mode = #tpu.pipeline_mode<synchronous>, transform_indices = @transform_8, window_bounds = array<i64: 128, 256>}, {pipeline_mode = #tpu.pipeline_mode<synchronous>, transform_indices = @transform_9, window_bounds = array<i64: 1, 256>}, {pipeline_mode = #tpu.pipeline_mode<synchronous>, transform_indices = @transform_10, window_bounds = array<i64: 256, 128>}, {pipeline_mode = #tpu.pipeline_mode<synchronous>, transform_indices = @transform_11, window_bounds = array<i64: 1, 128>}, {pipeline_mode = #tpu.pipeline_mode<synchronous>, transform_indices = @transform_12, window_bounds = array<i64: 1, 128>}, {pipeline_mode = #tpu.pipeline_mode<synchronous>, transform_indices = @transform_13, window_bounds = array<i64: 1, 128>}, {transform_indices = @transform_14, window_bounds = array<i64: 2, 16, 128>}]} {
    %c0 = arith.constant 0 : index
    %c0_0 = arith.constant 0 : index
    %c0_1 = arith.constant 0 : index
    %0 = vector.load %arg1[%c0, %c0_0, %c0_1] : memref<2x16x128xf32, #tpu.memory_space<vmem>>, vector<2x16x128xf32>
    %1 = vector.shape_cast %0 : vector<2x16x128xf32> to vector<32x128xf32>
    %2 = arith.truncf %1 : vector<32x128xf32> to vector<32x128xbf16>
    %c0_2 = arith.constant 0 : index
    %c0_3 = arith.constant 0 : index
    %3 = vector.load %arg2[%c0_2, %c0_3] : memref<16x16xf32, #tpu.memory_space<vmem>>, vector<16x16xf32>
    %c0_4 = arith.constant 0 : index
    %c0_5 = arith.constant 0 : index
    %4 = vector.load %arg3[%c0_4, %c0_5] : memref<128x384xbf16, #tpu.memory_space<vmem>>, vector<128x384xbf16>
    %cst = arith.constant dense<0.000000e+00> : vector<32x384xf32>
    %5 = tpu.matmul %2, %4, %cst {dimension_numbers = #tpu.dot_dimension_numbers<[1], [0], [0], [1], [0, 0, 1, 1], [], []>} : vector<32x128xbf16>, vector<128x384xbf16>, vector<32x384xf32> -> vector<32x384xf32>
    %c0_6 = arith.constant 0 : index
    %c0_7 = arith.constant 0 : index
    %6 = vector.load %arg4[%c0_6, %c0_7] : memref<1x384xf32, #tpu.memory_space<vmem>>, vector<1x384xf32>
    %7 = vector.broadcast %6 : vector<1x384xf32> to vector<32x384xf32>
    %8 = arith.addf %5, %7 : vector<32x384xf32>
    %cst_8 = arith.constant 0.000000e+00 : f32
    %9 = vector.broadcast %cst_8 : f32 to vector<32x128xf32>
    %10 = vector.extract_strided_slice %8 {offsets = [0, 0], sizes = [32, 32], strides = [1, 1]} : vector<32x384xf32> to vector<32x32xf32>
    %cst_9 = arith.constant 0.176776692 : f32
    %11 = vector.broadcast %cst_9 : f32 to vector<32x32xf32>
    %12 = arith.mulf %10, %11 : vector<32x32xf32>
    %13 = vector.shape_cast %12 : vector<32x32xf32> to vector<2x16x32xf32>
    %14 = arith.truncf %13 : vector<2x16x32xf32> to vector<2x16x32xbf16>
    %15 = vector.extract_strided_slice %8 {offsets = [0, 128], sizes = [32, 32], strides = [1, 1]} : vector<32x384xf32> to vector<32x32xf32>
    %16 = vector.shape_cast %15 : vector<32x32xf32> to vector<2x16x32xf32>
    %17 = arith.truncf %16 : vector<2x16x32xf32> to vector<2x16x32xbf16>
    %18 = vector.extract_strided_slice %8 {offsets = [0, 256], sizes = [32, 32], strides = [1, 1]} : vector<32x384xf32> to vector<32x32xf32>
    %19 = vector.shape_cast %18 : vector<32x32xf32> to vector<2x16x32xf32>
    %20 = arith.truncf %19 : vector<2x16x32xf32> to vector<2x16x32xbf16>
    "tpu.trace_start"() <{level = 10 : i32, message = "bqd,bkd->bqk"}> : () -> ()
    %cst_10 = arith.constant dense<0.000000e+00> : vector<2x16x16xf32>
    %21 = tpu.matmul %14, %17, %cst_10 {dimension_numbers = #tpu.dot_dimension_numbers<[2], [2], [1], [1], [0, 0, 0, 1, 1, 1], [0], [0]>} : vector<2x16x32xbf16>, vector<2x16x32xbf16>, vector<2x16x16xf32> -> vector<2x16x16xf32>
    "tpu.trace_stop"() : () -> ()
    %22 = vector.shape_cast %3 : vector<16x16xf32> to vector<1x16x16xf32>
    %23 = vector.broadcast %22 : vector<1x16x16xf32> to vector<2x16x16xf32>
    %24 = arith.addf %21, %23 : vector<2x16x16xf32>
    %cst_11 = arith.constant dense<0xFF800000> : vector<2x16xf32>
    %25 = vector.multi_reduction <maximumf>, %24, %cst_11 [2] : vector<2x16x16xf32> to vector<2x16xf32>
    %26 = vector.shape_cast %25 : vector<2x16xf32> to vector<2x16x1xf32>
    %27 = vector.broadcast %26 : vector<2x16x1xf32> to vector<2x16x16xf32>
    %28 = arith.subf %24, %27 : vector<2x16x16xf32>
    %29 = math.exp %28 : vector<2x16x16xf32>
    %cst_12 = arith.constant dense<0.000000e+00> : vector<2x16xf32>
    %30 = vector.multi_reduction <add>, %29, %cst_12 [2] : vector<2x16x16xf32> to vector<2x16xf32>
    %31 = vector.shape_cast %30 : vector<2x16xf32> to vector<2x16x1xf32>
    %32 = tpu.reciprocal %31 {approx = true} : vector<2x16x1xf32> -> vector<2x16x1xf32>
    %33 = vector.broadcast %32 : vector<2x16x1xf32> to vector<2x16x16xf32>
    %34 = arith.mulf %29, %33 : vector<2x16x16xf32>
    %35 = arith.truncf %34 : vector<2x16x16xf32> to vector<2x16x16xbf16>
    "tpu.trace_start"() <{level = 10 : i32, message = "bqk,bkd->bqd"}> : () -> ()
    %cst_13 = arith.constant dense<0.000000e+00> : vector<2x16x32xf32>
    %36 = tpu.matmul %35, %20, %cst_13 {dimension_numbers = #tpu.dot_dimension_numbers<[2], [1], [1], [2], [0, 0, 0, 1, 1, 2], [0], [0]>} : vector<2x16x16xbf16>, vector<2x16x32xbf16>, vector<2x16x32xf32> -> vector<2x16x32xf32>
    "tpu.trace_stop"() : () -> ()
    %37 = vector.shape_cast %36 : vector<2x16x32xf32> to vector<32x32xf32>
    %38 = arith.truncf %37 : vector<32x32xf32> to vector<32x32xbf16>
    %c0_14 = arith.constant 0 : index
    %c0_15 = arith.constant 0 : index
    %39 = vector.load %arg5[%c0_14, %c0_15] : memref<128x128xbf16, #tpu.memory_space<vmem>>, vector<32x128xbf16>
    %cst_16 = arith.constant dense<0.000000e+00> : vector<32x128xf32>
    %40 = tpu.matmul %38, %39, %cst_16 {dimension_numbers = #tpu.dot_dimension_numbers<[1], [0], [0], [1], [0, 0, 1, 1], [], []>} : vector<32x32xbf16>, vector<32x128xbf16>, vector<32x128xf32> -> vector<32x128xf32>
    %41 = arith.addf %9, %40 : vector<32x128xf32>
    %42 = vector.extract_strided_slice %8 {offsets = [0, 32], sizes = [32, 32], strides = [1, 1]} : vector<32x384xf32> to vector<32x32xf32>
    %cst_17 = arith.constant 0.176776692 : f32
    %43 = vector.broadcast %cst_17 : f32 to vector<32x32xf32>
    %44 = arith.mulf %42, %43 : vector<32x32xf32>
    %45 = vector.shape_cast %44 : vector<32x32xf32> to vector<2x16x32xf32>
    %46 = arith.truncf %45 : vector<2x16x32xf32> to vector<2x16x32xbf16>
    %47 = vector.extract_strided_slice %8 {offsets = [0, 160], sizes = [32, 32], strides = [1, 1]} : vector<32x384xf32> to vector<32x32xf32>
    %48 = vector.shape_cast %47 : vector<32x32xf32> to vector<2x16x32xf32>
    %49 = arith.truncf %48 : vector<2x16x32xf32> to vector<2x16x32xbf16>
    %50 = vector.extract_strided_slice %8 {offsets = [0, 288], sizes = [32, 32], strides = [1, 1]} : vector<32x384xf32> to vector<32x32xf32>
    %51 = vector.shape_cast %50 : vector<32x32xf32> to vector<2x16x32xf32>
    %52 = arith.truncf %51 : vector<2x16x32xf32> to vector<2x16x32xbf16>
    "tpu.trace_start"() <{level = 10 : i32, message = "bqd,bkd->bqk"}> : () -> ()
    %cst_18 = arith.constant dense<0.000000e+00> : vector<2x16x16xf32>
    %53 = tpu.matmul %46, %49, %cst_18 {dimension_numbers = #tpu.dot_dimension_numbers<[2], [2], [1], [1], [0, 0, 0, 1, 1, 1], [0], [0]>} : vector<2x16x32xbf16>, vector<2x16x32xbf16>, vector<2x16x16xf32> -> vector<2x16x16xf32>
    "tpu.trace_stop"() : () -> ()
    %54 = vector.shape_cast %3 : vector<16x16xf32> to vector<1x16x16xf32>
    %55 = vector.broadcast %54 : vector<1x16x16xf32> to vector<2x16x16xf32>
    %56 = arith.addf %53, %55 : vector<2x16x16xf32>
    %cst_19 = arith.constant dense<0xFF800000> : vector<2x16xf32>
    %57 = vector.multi_reduction <maximumf>, %56, %cst_19 [2] : vector<2x16x16xf32> to vector<2x16xf32>
    %58 = vector.shape_cast %57 : vector<2x16xf32> to vector<2x16x1xf32>
    %59 = vector.broadcast %58 : vector<2x16x1xf32> to vector<2x16x16xf32>
    %60 = arith.subf %56, %59 : vector<2x16x16xf32>
    %61 = math.exp %60 : vector<2x16x16xf32>
    %cst_20 = arith.constant dense<0.000000e+00> : vector<2x16xf32>
    %62 = vector.multi_reduction <add>, %61, %cst_20 [2] : vector<2x16x16xf32> to vector<2x16xf32>
    %63 = vector.shape_cast %62 : vector<2x16xf32> to vector<2x16x1xf32>
    %64 = tpu.reciprocal %63 {approx = true} : vector<2x16x1xf32> -> vector<2x16x1xf32>
    %65 = vector.broadcast %64 : vector<2x16x1xf32> to vector<2x16x16xf32>
    %66 = arith.mulf %61, %65 : vector<2x16x16xf32>
    %67 = arith.truncf %66 : vector<2x16x16xf32> to vector<2x16x16xbf16>
    "tpu.trace_start"() <{level = 10 : i32, message = "bqk,bkd->bqd"}> : () -> ()
    %cst_21 = arith.constant dense<0.000000e+00> : vector<2x16x32xf32>
    %68 = tpu.matmul %67, %52, %cst_21 {dimension_numbers = #tpu.dot_dimension_numbers<[2], [1], [1], [2], [0, 0, 0, 1, 1, 2], [0], [0]>} : vector<2x16x16xbf16>, vector<2x16x32xbf16>, vector<2x16x32xf32> -> vector<2x16x32xf32>
    "tpu.trace_stop"() : () -> ()
    %69 = vector.shape_cast %68 : vector<2x16x32xf32> to vector<32x32xf32>
    %70 = arith.truncf %69 : vector<32x32xf32> to vector<32x32xbf16>
    %c32 = arith.constant 32 : index
    %c0_22 = arith.constant 0 : index
    %71 = vector.load %arg5[%c32, %c0_22] : memref<128x128xbf16, #tpu.memory_space<vmem>>, vector<32x128xbf16>
    %cst_23 = arith.constant dense<0.000000e+00> : vector<32x128xf32>
    %72 = tpu.matmul %70, %71, %cst_23 {dimension_numbers = #tpu.dot_dimension_numbers<[1], [0], [0], [1], [0, 0, 1, 1], [], []>} : vector<32x32xbf16>, vector<32x128xbf16>, vector<32x128xf32> -> vector<32x128xf32>
    %73 = arith.addf %41, %72 : vector<32x128xf32>
    %74 = vector.extract_strided_slice %8 {offsets = [0, 64], sizes = [32, 32], strides = [1, 1]} : vector<32x384xf32> to vector<32x32xf32>
    %cst_24 = arith.constant 0.176776692 : f32
    %75 = vector.broadcast %cst_24 : f32 to vector<32x32xf32>
    %76 = arith.mulf %74, %75 : vector<32x32xf32>
    %77 = vector.shape_cast %76 : vector<32x32xf32> to vector<2x16x32xf32>
    %78 = arith.truncf %77 : vector<2x16x32xf32> to vector<2x16x32xbf16>
    %79 = vector.extract_strided_slice %8 {offsets = [0, 192], sizes = [32, 32], strides = [1, 1]} : vector<32x384xf32> to vector<32x32xf32>
    %80 = vector.shape_cast %79 : vector<32x32xf32> to vector<2x16x32xf32>
    %81 = arith.truncf %80 : vector<2x16x32xf32> to vector<2x16x32xbf16>
    %82 = vector.extract_strided_slice %8 {offsets = [0, 320], sizes = [32, 32], strides = [1, 1]} : vector<32x384xf32> to vector<32x32xf32>
    %83 = vector.shape_cast %82 : vector<32x32xf32> to vector<2x16x32xf32>
    %84 = arith.truncf %83 : vector<2x16x32xf32> to vector<2x16x32xbf16>
    "tpu.trace_start"() <{level = 10 : i32, message = "bqd,bkd->bqk"}> : () -> ()
    %cst_25 = arith.constant dense<0.000000e+00> : vector<2x16x16xf32>
    %85 = tpu.matmul %78, %81, %cst_25 {dimension_numbers = #tpu.dot_dimension_numbers<[2], [2], [1], [1], [0, 0, 0, 1, 1, 1], [0], [0]>} : vector<2x16x32xbf16>, vector<2x16x32xbf16>, vector<2x16x16xf32> -> vector<2x16x16xf32>
    "tpu.trace_stop"() : () -> ()
    %86 = vector.shape_cast %3 : vector<16x16xf32> to vector<1x16x16xf32>
    %87 = vector.broadcast %86 : vector<1x16x16xf32> to vector<2x16x16xf32>
    %88 = arith.addf %85, %87 : vector<2x16x16xf32>
    %cst_26 = arith.constant dense<0xFF800000> : vector<2x16xf32>
    %89 = vector.multi_reduction <maximumf>, %88, %cst_26 [2] : vector<2x16x16xf32> to vector<2x16xf32>
    %90 = vector.shape_cast %89 : vector<2x16xf32> to vector<2x16x1xf32>
    %91 = vector.broadcast %90 : vector<2x16x1xf32> to vector<2x16x16xf32>
    %92 = arith.subf %88, %91 : vector<2x16x16xf32>
    %93 = math.exp %92 : vector<2x16x16xf32>
    %cst_27 = arith.constant dense<0.000000e+00> : vector<2x16xf32>
    %94 = vector.multi_reduction <add>, %93, %cst_27 [2] : vector<2x16x16xf32> to vector<2x16xf32>
    %95 = vector.shape_cast %94 : vector<2x16xf32> to vector<2x16x1xf32>
    %96 = tpu.reciprocal %95 {approx = true} : vector<2x16x1xf32> -> vector<2x16x1xf32>
    %97 = vector.broadcast %96 : vector<2x16x1xf32> to vector<2x16x16xf32>
    %98 = arith.mulf %93, %97 : vector<2x16x16xf32>
    %99 = arith.truncf %98 : vector<2x16x16xf32> to vector<2x16x16xbf16>
    "tpu.trace_start"() <{level = 10 : i32, message = "bqk,bkd->bqd"}> : () -> ()
    %cst_28 = arith.constant dense<0.000000e+00> : vector<2x16x32xf32>
    %100 = tpu.matmul %99, %84, %cst_28 {dimension_numbers = #tpu.dot_dimension_numbers<[2], [1], [1], [2], [0, 0, 0, 1, 1, 2], [0], [0]>} : vector<2x16x16xbf16>, vector<2x16x32xbf16>, vector<2x16x32xf32> -> vector<2x16x32xf32>
    "tpu.trace_stop"() : () -> ()
    %101 = vector.shape_cast %100 : vector<2x16x32xf32> to vector<32x32xf32>
    %102 = arith.truncf %101 : vector<32x32xf32> to vector<32x32xbf16>
    %c64 = arith.constant 64 : index
    %c0_29 = arith.constant 0 : index
    %103 = vector.load %arg5[%c64, %c0_29] : memref<128x128xbf16, #tpu.memory_space<vmem>>, vector<32x128xbf16>
    %cst_30 = arith.constant dense<0.000000e+00> : vector<32x128xf32>
    %104 = tpu.matmul %102, %103, %cst_30 {dimension_numbers = #tpu.dot_dimension_numbers<[1], [0], [0], [1], [0, 0, 1, 1], [], []>} : vector<32x32xbf16>, vector<32x128xbf16>, vector<32x128xf32> -> vector<32x128xf32>
    %105 = arith.addf %73, %104 : vector<32x128xf32>
    %106 = vector.extract_strided_slice %8 {offsets = [0, 96], sizes = [32, 32], strides = [1, 1]} : vector<32x384xf32> to vector<32x32xf32>
    %cst_31 = arith.constant 0.176776692 : f32
    %107 = vector.broadcast %cst_31 : f32 to vector<32x32xf32>
    %108 = arith.mulf %106, %107 : vector<32x32xf32>
    %109 = vector.shape_cast %108 : vector<32x32xf32> to vector<2x16x32xf32>
    %110 = arith.truncf %109 : vector<2x16x32xf32> to vector<2x16x32xbf16>
    %111 = vector.extract_strided_slice %8 {offsets = [0, 224], sizes = [32, 32], strides = [1, 1]} : vector<32x384xf32> to vector<32x32xf32>
    %112 = vector.shape_cast %111 : vector<32x32xf32> to vector<2x16x32xf32>
    %113 = arith.truncf %112 : vector<2x16x32xf32> to vector<2x16x32xbf16>
    %114 = vector.extract_strided_slice %8 {offsets = [0, 352], sizes = [32, 32], strides = [1, 1]} : vector<32x384xf32> to vector<32x32xf32>
    %115 = vector.shape_cast %114 : vector<32x32xf32> to vector<2x16x32xf32>
    %116 = arith.truncf %115 : vector<2x16x32xf32> to vector<2x16x32xbf16>
    "tpu.trace_start"() <{level = 10 : i32, message = "bqd,bkd->bqk"}> : () -> ()
    %cst_32 = arith.constant dense<0.000000e+00> : vector<2x16x16xf32>
    %117 = tpu.matmul %110, %113, %cst_32 {dimension_numbers = #tpu.dot_dimension_numbers<[2], [2], [1], [1], [0, 0, 0, 1, 1, 1], [0], [0]>} : vector<2x16x32xbf16>, vector<2x16x32xbf16>, vector<2x16x16xf32> -> vector<2x16x16xf32>
    "tpu.trace_stop"() : () -> ()
    %118 = vector.shape_cast %3 : vector<16x16xf32> to vector<1x16x16xf32>
    %119 = vector.broadcast %118 : vector<1x16x16xf32> to vector<2x16x16xf32>
    %120 = arith.addf %117, %119 : vector<2x16x16xf32>
    %cst_33 = arith.constant dense<0xFF800000> : vector<2x16xf32>
    %121 = vector.multi_reduction <maximumf>, %120, %cst_33 [2] : vector<2x16x16xf32> to vector<2x16xf32>
    %122 = vector.shape_cast %121 : vector<2x16xf32> to vector<2x16x1xf32>
    %123 = vector.broadcast %122 : vector<2x16x1xf32> to vector<2x16x16xf32>
    %124 = arith.subf %120, %123 : vector<2x16x16xf32>
    %125 = math.exp %124 : vector<2x16x16xf32>
    %cst_34 = arith.constant dense<0.000000e+00> : vector<2x16xf32>
    %126 = vector.multi_reduction <add>, %125, %cst_34 [2] : vector<2x16x16xf32> to vector<2x16xf32>
    %127 = vector.shape_cast %126 : vector<2x16xf32> to vector<2x16x1xf32>
    %128 = tpu.reciprocal %127 {approx = true} : vector<2x16x1xf32> -> vector<2x16x1xf32>
    %129 = vector.broadcast %128 : vector<2x16x1xf32> to vector<2x16x16xf32>
    %130 = arith.mulf %125, %129 : vector<2x16x16xf32>
    %131 = arith.truncf %130 : vector<2x16x16xf32> to vector<2x16x16xbf16>
    "tpu.trace_start"() <{level = 10 : i32, message = "bqk,bkd->bqd"}> : () -> ()
    %cst_35 = arith.constant dense<0.000000e+00> : vector<2x16x32xf32>
    %132 = tpu.matmul %131, %116, %cst_35 {dimension_numbers = #tpu.dot_dimension_numbers<[2], [1], [1], [2], [0, 0, 0, 1, 1, 2], [0], [0]>} : vector<2x16x16xbf16>, vector<2x16x32xbf16>, vector<2x16x32xf32> -> vector<2x16x32xf32>
    "tpu.trace_stop"() : () -> ()
    %133 = vector.shape_cast %132 : vector<2x16x32xf32> to vector<32x32xf32>
    %134 = arith.truncf %133 : vector<32x32xf32> to vector<32x32xbf16>
    %c96 = arith.constant 96 : index
    %c0_36 = arith.constant 0 : index
    %135 = vector.load %arg5[%c96, %c0_36] : memref<128x128xbf16, #tpu.memory_space<vmem>>, vector<32x128xbf16>
    %cst_37 = arith.constant dense<0.000000e+00> : vector<32x128xf32>
    %136 = tpu.matmul %134, %135, %cst_37 {dimension_numbers = #tpu.dot_dimension_numbers<[1], [0], [0], [1], [0, 0, 1, 1], [], []>} : vector<32x32xbf16>, vector<32x128xbf16>, vector<32x128xf32> -> vector<32x128xf32>
    %137 = arith.addf %105, %136 : vector<32x128xf32>
    %c0_38 = arith.constant 0 : index
    %c0_39 = arith.constant 0 : index
    %138 = vector.load %arg6[%c0_38, %c0_39] : memref<1x128xf32, #tpu.memory_space<vmem>>, vector<1x128xf32>
    %139 = vector.broadcast %138 : vector<1x128xf32> to vector<32x128xf32>
    %140 = arith.addf %137, %139 : vector<32x128xf32>
    %141 = arith.addf %1, %140 : vector<32x128xf32>
    %c0_40 = arith.constant 0 : index
    %c0_41 = arith.constant 0 : index
    %142 = vector.load %arg7[%c0_40, %c0_41] : memref<1x128xf32, #tpu.memory_space<vmem>>, vector<1x128xf32>
    %c0_42 = arith.constant 0 : index
    %c0_43 = arith.constant 0 : index
    %143 = vector.load %arg8[%c0_42, %c0_43] : memref<1x128xf32, #tpu.memory_space<vmem>>, vector<1x128xf32>
    %cst_44 = arith.constant dense<0.000000e+00> : vector<32xf32>
    %144 = vector.multi_reduction <add>, %141, %cst_44 [1] : vector<32x128xf32> to vector<32xf32>
    %145 = vector.shape_cast %144 : vector<32xf32> to vector<32x1xf32>
    %cst_45 = arith.constant 1.280000e+02 : f32
    %146 = vector.broadcast %cst_45 : f32 to vector<32x1xf32>
    %147 = arith.divf %145, %146 : vector<32x1xf32>
    %148 = vector.broadcast %147 : vector<32x1xf32> to vector<32x128xf32>
    %149 = arith.subf %141, %148 : vector<32x128xf32>
    %150 = arith.mulf %149, %149 : vector<32x128xf32>
    %cst_46 = arith.constant dense<0.000000e+00> : vector<32xf32>
    %151 = vector.multi_reduction <add>, %150, %cst_46 [1] : vector<32x128xf32> to vector<32xf32>
    %152 = vector.shape_cast %151 : vector<32xf32> to vector<32x1xf32>
    %cst_47 = arith.constant 1.280000e+02 : f32
    %153 = vector.broadcast %cst_47 : f32 to vector<32x1xf32>
    %154 = arith.divf %152, %153 : vector<32x1xf32>
    %155 = vector.broadcast %147 : vector<32x1xf32> to vector<32x128xf32>
    %156 = arith.subf %141, %155 : vector<32x128xf32>
    %cst_48 = arith.constant 9.99999974E-6 : f32
    %157 = vector.broadcast %cst_48 : f32 to vector<32x1xf32>
    %158 = arith.addf %154, %157 : vector<32x1xf32>
    %159 = math.rsqrt %158 : vector<32x1xf32>
    %160 = vector.broadcast %159 : vector<32x1xf32> to vector<32x128xf32>
    %161 = arith.mulf %156, %160 : vector<32x128xf32>
    %162 = vector.broadcast %142 : vector<1x128xf32> to vector<32x128xf32>
    %163 = arith.mulf %161, %162 : vector<32x128xf32>
    %164 = vector.broadcast %143 : vector<1x128xf32> to vector<32x128xf32>
    %165 = arith.addf %163, %164 : vector<32x128xf32>
    %166 = arith.truncf %165 : vector<32x128xf32> to vector<32x128xbf16>
    %c0_49 = arith.constant 0 : index
    %c0_50 = arith.constant 0 : index
    %167 = vector.load %arg9[%c0_49, %c0_50] : memref<128x256xbf16, #tpu.memory_space<vmem>>, vector<128x256xbf16>
    %cst_51 = arith.constant dense<0.000000e+00> : vector<32x256xf32>
    %168 = tpu.matmul %166, %167, %cst_51 {dimension_numbers = #tpu.dot_dimension_numbers<[1], [0], [0], [1], [0, 0, 1, 1], [], []>} : vector<32x128xbf16>, vector<128x256xbf16>, vector<32x256xf32> -> vector<32x256xf32>
    %c0_52 = arith.constant 0 : index
    %c0_53 = arith.constant 0 : index
    %169 = vector.load %arg10[%c0_52, %c0_53] : memref<1x256xf32, #tpu.memory_space<vmem>>, vector<1x256xf32>
    %170 = vector.broadcast %169 : vector<1x256xf32> to vector<32x256xf32>
    %171 = arith.addf %168, %170 : vector<32x256xf32>
    %cst_54 = arith.constant 0.000000e+00 : f32
    %172 = vector.broadcast %cst_54 : f32 to vector<32x256xf32>
    %173 = arith.maximumf %171, %172 : vector<32x256xf32>
    %174 = arith.truncf %173 : vector<32x256xf32> to vector<32x256xbf16>
    %c0_55 = arith.constant 0 : index
    %c0_56 = arith.constant 0 : index
    %175 = vector.load %arg11[%c0_55, %c0_56] : memref<256x128xbf16, #tpu.memory_space<vmem>>, vector<256x128xbf16>
    %cst_57 = arith.constant dense<0.000000e+00> : vector<32x128xf32>
    %176 = tpu.matmul %174, %175, %cst_57 {dimension_numbers = #tpu.dot_dimension_numbers<[1], [0], [0], [1], [0, 0, 1, 1], [], []>} : vector<32x256xbf16>, vector<256x128xbf16>, vector<32x128xf32> -> vector<32x128xf32>
    %c0_58 = arith.constant 0 : index
    %c0_59 = arith.constant 0 : index
    %177 = vector.load %arg12[%c0_58, %c0_59] : memref<1x128xf32, #tpu.memory_space<vmem>>, vector<1x128xf32>
    %178 = vector.broadcast %177 : vector<1x128xf32> to vector<32x128xf32>
    %179 = arith.addf %176, %178 : vector<32x128xf32>
    %180 = arith.addf %165, %179 : vector<32x128xf32>
    %c0_60 = arith.constant 0 : index
    %c0_61 = arith.constant 0 : index
    %181 = vector.load %arg13[%c0_60, %c0_61] : memref<1x128xf32, #tpu.memory_space<vmem>>, vector<1x128xf32>
    %c0_62 = arith.constant 0 : index
    %c0_63 = arith.constant 0 : index
    %182 = vector.load %arg14[%c0_62, %c0_63] : memref<1x128xf32, #tpu.memory_space<vmem>>, vector<1x128xf32>
    %cst_64 = arith.constant dense<0.000000e+00> : vector<32xf32>
    %183 = vector.multi_reduction <add>, %180, %cst_64 [1] : vector<32x128xf32> to vector<32xf32>
    %184 = vector.shape_cast %183 : vector<32xf32> to vector<32x1xf32>
    %cst_65 = arith.constant 1.280000e+02 : f32
    %185 = vector.broadcast %cst_65 : f32 to vector<32x1xf32>
    %186 = arith.divf %184, %185 : vector<32x1xf32>
    %187 = vector.broadcast %186 : vector<32x1xf32> to vector<32x128xf32>
    %188 = arith.subf %180, %187 : vector<32x128xf32>
    %189 = arith.mulf %188, %188 : vector<32x128xf32>
    %cst_66 = arith.constant dense<0.000000e+00> : vector<32xf32>
    %190 = vector.multi_reduction <add>, %189, %cst_66 [1] : vector<32x128xf32> to vector<32xf32>
    %191 = vector.shape_cast %190 : vector<32xf32> to vector<32x1xf32>
    %cst_67 = arith.constant 1.280000e+02 : f32
    %192 = vector.broadcast %cst_67 : f32 to vector<32x1xf32>
    %193 = arith.divf %191, %192 : vector<32x1xf32>
    %194 = vector.broadcast %186 : vector<32x1xf32> to vector<32x128xf32>
    %195 = arith.subf %180, %194 : vector<32x128xf32>
    %cst_68 = arith.constant 9.99999974E-6 : f32
    %196 = vector.broadcast %cst_68 : f32 to vector<32x1xf32>
    %197 = arith.addf %193, %196 : vector<32x1xf32>
    %198 = math.rsqrt %197 : vector<32x1xf32>
    %199 = vector.broadcast %198 : vector<32x1xf32> to vector<32x128xf32>
    %200 = arith.mulf %195, %199 : vector<32x128xf32>
    %201 = vector.broadcast %181 : vector<1x128xf32> to vector<32x128xf32>
    %202 = arith.mulf %200, %201 : vector<32x128xf32>
    %203 = vector.broadcast %182 : vector<1x128xf32> to vector<32x128xf32>
    %204 = arith.addf %202, %203 : vector<32x128xf32>
    %205 = vector.shape_cast %204 : vector<32x128xf32> to vector<2x16x128xf32>
    %c0_69 = arith.constant 0 : index
    %c0_70 = arith.constant 0 : index
    %c0_71 = arith.constant 0 : index
    %206 = vector.load %arg15[%c0_69, %c0_70, %c0_71] : memref<2x16x128xf32, #tpu.memory_space<vmem>>, vector<2x16x128xf32>
    tpu.vector_store %arg15[%c0_69, %c0_70, %c0_71], %205 {strides = array<i32>} : memref<2x16x128xf32, #tpu.memory_space<vmem>>, vector<2x16x128xf32>,
    return
  }
  func.func @transform_0(%arg0: i32) -> (i32, i32, i32) {
    %c0_i32 = arith.constant 0 : i32
    %c0_i32_0 = arith.constant 0 : i32
    %c0_i32_1 = arith.constant 0 : i32
    return %arg0, %c0_i32, %c0_i32_0 : i32, i32, i32
  }
  func.func @transform_1(%arg0: i32) -> (i32, i32) {
    %c0_i32 = arith.constant 0 : i32
    %c0_i32_0 = arith.constant 0 : i32
    %c0_i32_1 = arith.constant 0 : i32
    return %c0_i32, %c0_i32_0 : i32, i32
  }
  func.func @transform_2(%arg0: i32) -> (i32, i32) {
    %c0_i32 = arith.constant 0 : i32
    %c0_i32_0 = arith.constant 0 : i32
    %c0_i32_1 = arith.constant 0 : i32
    return %c0_i32, %c0_i32_0 : i32, i32
  }
  func.func @transform_3(%arg0: i32) -> (i32, i32) {
    %c0_i32 = arith.constant 0 : i32
    %c0_i32_0 = arith.constant 0 : i32
    %c0_i32_1 = arith.constant 0 : i32
    return %c0_i32, %c0_i32_0 : i32, i32
  }
  func.func @transform_4(%arg0: i32) -> (i32, i32) {
    %c0_i32 = arith.constant 0 : i32
    %c0_i32_0 = arith.constant 0 : i32
    %c0_i32_1 = arith.constant 0 : i32
    return %c0_i32, %c0_i32_0 : i32, i32
  }
  func.func @transform_5(%arg0: i32) -> (i32, i32) {
    %c0_i32 = arith.constant 0 : i32
    %c0_i32_0 = arith.constant 0 : i32
    %c0_i32_1 = arith.constant 0 : i32
    return %c0_i32, %c0_i32_0 : i32, i32
  }
  func.func @transform_6(%arg0: i32) -> (i32, i32) {
    %c0_i32 = arith.constant 0 : i32
    %c0_i32_0 = arith.constant 0 : i32
    %c0_i32_1 = arith.constant 0 : i32
    return %c0_i32, %c0_i32_0 : i32, i32
  }
  func.func @transform_7(%arg0: i32) -> (i32, i32) {
    %c0_i32 = arith.constant 0 : i32
    %c0_i32_0 = arith.constant 0 : i32
    %c0_i32_1 = arith.constant 0 : i32
    return %c0_i32, %c0_i32_0 : i32, i32
  }
  func.func @transform_8(%arg0: i32) -> (i32, i32) {
    %c0_i32 = arith.constant 0 : i32
    %c0_i32_0 = arith.constant 0 : i32
    %c0_i32_1 = arith.constant 0 : i32
    return %c0_i32, %c0_i32_0 : i32, i32
  }
  func.func @transform_9(%arg0: i32) -> (i32, i32) {
    %c0_i32 = arith.constant 0 : i32
    %c0_i32_0 = arith.constant 0 : i32
    %c0_i32_1 = arith.constant 0 : i32
    return %c0_i32, %c0_i32_0 : i32, i32
  }
  func.func @transform_10(%arg0: i32) -> (i32, i32) {
    %c0_i32 = arith.constant 0 : i32
    %c0_i32_0 = arith.constant 0 : i32
    %c0_i32_1 = arith.constant 0 : i32
    return %c0_i32, %c0_i32_0 : i32, i32
  }
  func.func @transform_11(%arg0: i32) -> (i32, i32) {
    %c0_i32 = arith.constant 0 : i32
    %c0_i32_0 = arith.constant 0 : i32
    %c0_i32_1 = arith.constant 0 : i32
    return %c0_i32, %c0_i32_0 : i32, i32
  }
  func.func @transform_12(%arg0: i32) -> (i32, i32) {
    %c0_i32 = arith.constant 0 : i32
    %c0_i32_0 = arith.constant 0 : i32
    %c0_i32_1 = arith.constant 0 : i32
    return %c0_i32, %c0_i32_0 : i32, i32
  }
  func.func @transform_13(%arg0: i32) -> (i32, i32) {
    %c0_i32 = arith.constant 0 : i32
    %c0_i32_0 = arith.constant 0 : i32
    %c0_i32_1 = arith.constant 0 : i32
    return %c0_i32, %c0_i32_0 : i32, i32
  }
  func.func @transform_14(%arg0: i32) -> (i32, i32, i32) {
    %c0_i32 = arith.constant 0 : i32
    %c0_i32_0 = arith.constant 0 : i32
    %c0_i32_1 = arith.constant 0 : i32
    return %arg0, %c0_i32, %c0_i32_0 : i32, i32, i32
  }
}

</mosaic_0001>

<llo_original>
// kernel: tpu_custom_call.1
$region0: #{tpu_custom_call.1}
  #allocation0 [shape = 'u32[]', space=smem, size = 0x4, offset = 0x4, fixed_abs, tag = 'smem constant byte address 0x4 - core index']
  #allocation1 [shape = 'u32[144,128]{1,0:T(1,128)}', space=vmem, size = 0x12000, scoped, tag = 'internal scratch']
  %s0 = inlined_call_operand.hbm [shape: f32[4,16,128], index: 0, kind: input, shape index: {}]
  %s1 = inlined_call_operand.hbm [shape: f32[16,16], index: 1, kind: input, shape index: {}]
  %s2 = inlined_call_operand.hbm [shape: bf16[128,384], index: 2, kind: input, shape index: {}]
  %s3 = inlined_call_operand.vmem [shape: f32[1,384], index: 3, kind: input, shape index: {}]
  %s4 = inlined_call_operand.hbm [shape: bf16[128,128], index: 4, kind: input, shape index: {}]
  %s5 = inlined_call_operand.vmem [shape: f32[1,128], index: 5, kind: input, shape index: {}]
  %s6 = inlined_call_operand.vmem [shape: f32[1,128], index: 6, kind: input, shape index: {}]
  %s7 = inlined_call_operand.vmem [shape: f32[1,128], index: 7, kind: input, shape index: {}]
  %s8 = inlined_call_operand.hbm [shape: bf16[128,256], index: 8, kind: input, shape index: {}]
  %s9 = inlined_call_operand.vmem [shape: f32[1,256], index: 9, kind: input, shape index: {}]
  %s10 = inlined_call_operand.hbm [shape: bf16[256,128], index: 10, kind: input, shape index: {}]
  %s11 = inlined_call_operand.vmem [shape: f32[1,128], index: 11, kind: input, shape index: {}]
  %s12 = inlined_call_operand.vmem [shape: f32[1,128], index: 12, kind: input, shape index: {}]
  %s13 = inlined_call_operand.vmem [shape: f32[1,128], index: 13, kind: input, shape index: {}]
  %s14 = inlined_call_operand.hbm [shape: f32[4,16,128], index: 14, kind: output, shape index: {}]
  %s15 = sld [smem:[#allocation0]]
  $region113: #{tpu_custom_call.1} parent=0
    _
  %s17 = ssub.s32 1, %s15
  %s18 = scalar_select 0, %s17, %s15
  $region1: #{tpu_custom_call.1} parent=0
    #allocation2 [shape = 'u8[32768]{0}', space=vmem, size = 0x8000, scoped, tag = 'input window, operand 0']
    #allocation3 [shape = 's32[2]{0}', space=sflag, size = 0x8, scoped, tag = 'scoped memory for tpu_custom_call.1']
    #allocation4 [shape = 's32[2]{0}', space=sflag, size = 0x8, scoped, tag = 'scoped memory for tpu_custom_call.1']
    #allocation5 [shape = 'u8[8192]{0}', space=vmem, size = 0x2000, scoped, tag = 'input window, operand 1, single buffered']
    #allocation6 [shape = 's32[1]{0}', space=sflag, size = 0x4, scoped, tag = 'scoped memory for tpu_custom_call.1']
    #allocation7 [shape = 'u8[98304]{0}', space=vmem, size = 0x18000, scoped, tag = 'input window, operand 2, single buffered']
    #allocation8 [shape = 'u8[32768]{0}', space=vmem, size = 0x8000, scoped, tag = 'input window, operand 4, single buffered']
    #allocation9 [shape = 's32[1]{0}', space=sflag, size = 0x4, scoped, tag = 'scoped memory for tpu_custom_call.1']
    #allocation10 [shape = 'u8[65536]{0}', space=vmem, size = 0x10000, scoped, tag = 'input window, operand 8, single buffered']
    #allocation11 [shape = 'u8[65536]{0}', space=vmem, size = 0x10000, scoped, tag = 'input window, operand 10, single buffered']
    #allocation12 [shape = 's32[1]{0}', space=sflag, size = 0x4, scoped, tag = 'scoped memory for tpu_custom_call.1']
    #allocation13 [shape = 'u8[32768]{0}', space=vmem, size = 0x8000, scoped, tag = 'output window, operand 0']
    %19 = vsyncpa [#allocation3], 0
    %s20 = scalar_lea.sflag [#allocation3], 1
    %21 = vsyncpa %s20, 0
    %22 = vsyncpa [#allocation6], 0
    %23 = vsyncpa [#allocation9], 0
    %24 = vsyncpa [#allocation12], 0
    %25 = vsyncpa [#allocation4], 0
    %s26 = scalar_lea.sflag [#allocation4], 1
    %27 = vsyncpa %s26, 0
    loop: start=0, step=1, limit=4
    $region2: #{tpu_custom_call.1} parent=1 // loop_pre_header
      _
    $region3: #{tpu_custom_call.1} parent=1 // loop_header
      %s29 = sphi 0, %s33
      %p30 = scmp.ge.s32.totalorder %s29, 4
      %s39 = sphi 0, %s41
      %s42 = sphi 0, %s39
      %s43 = sphi 0, %s42
      %s59 = sphi 0, %s43
      %s63 = sphi 0, %s63
      %s65 = sphi 0, %s63
      %s66 = sphi 0, %s65
      %s80 = sphi 0, %s66
      %s84 = sphi 0, %s84
      %s86 = sphi 0, %s84
      %s87 = sphi 0, %s86
      %s101 = sphi 0, %s87
      %s105 = sphi 0, %s105
      %s107 = sphi 0, %s105
      %s108 = sphi 0, %s107
      %s122 = sphi 0, %s108
      %s126 = sphi 0, %s126
      %s128 = sphi 0, %s126
      %s129 = sphi 0, %s128
      %s143 = sphi 0, %s129
      %s147 = sphi 0, %s147
      %s149 = sphi 0, %s147
      %s150 = sphi 0, %s149
      %s164 = sphi 0, %s150
      %s168 = sphi 0, %s168
      %s170 = sphi 0, %s168
      %s171 = sphi 0, %s170
      %s185 = sphi 0, %s171
      %s189 = sphi 0, %s189
      %s191 = sphi 0, %s189
      %s192 = sphi 0, %s191
      %s206 = sphi 0, %s192
      %s210 = sphi 0, %s210
      %s212 = sphi 0, %s210
      %s213 = sphi 0, %s212
      %s227 = sphi 0, %s213
      %s231 = sphi 0, %s231
      %s233 = sphi 0, %s231
      %s234 = sphi 0, %s233
      %s248 = sphi 0, %s234
      %s252 = sphi 0, %s252
      %s254 = sphi 0, %s252
      %s255 = sphi 0, %s254
      %s269 = sphi 0, %s255
      %s273 = sphi 0, %s273
      %s275 = sphi 0, %s273
      %s276 = sphi 0, %s275
      %s290 = sphi 0, %s276
      %s294 = sphi 0, %s294
      %s296 = sphi 0, %s294
      %s297 = sphi 0, %s296
      %s311 = sphi 0, %s297
      %s315 = sphi 0, %s315
      %s317 = sphi 0, %s315
      %s318 = sphi 0, %s317
      %s332 = sphi 0, %s318
      %s338 = sphi 0, %s340
      %s341 = sphi 0, %s338
      %s342 = sphi 0, %s341
      %s358 = sphi 0, %s342
    $region4: #{tpu_custom_call.1} parent=1 // loop_header_branch
      %32 = sbr.rel (%p30) target = $region8
    $region5: #{tpu_custom_call.1} parent=1 // loop_body
      %s34 = ssub.s32 %s29, 1
      %s35 = ssub.s32 %s29, 2
      %s36 = sadd.s32 %s29, 1
      %s37 = ssub.s32 %s29, %s36
      %p38 = scmp.eq.s32.totalorder %s37, 0
      %s40 = sadd.s32 %s39, 1
      %s41 = scalar_select %p38, %s39, %s40
      %p44 = pneg %p38
      %p45 = scmp.eq.s32.totalorder %s29, 1
      %p46 = por %p44, %p45
      %p47 = scmp.ne.s32.totalorder %s39, %s42
      %p48 = scmp.eq.s32.totalorder %s29, 0
      %p49 = por %p47, %p48
      %p50 = scmp.ne.s32.totalorder %s39, %s42
      %p51 = scmp.eq.s32.totalorder %s34, 1
      %p52 = por %p50, %p51
      %p53 = scmp.ne.s32.totalorder %s42, %s43
      %p54 = scmp.eq.s32.totalorder %s34, 0
      %p55 = por %p53, %p54
      %p56 = scmp.ne.s32.totalorder %s42, %s43
      %p57 = scmp.eq.s32.totalorder %s35, 1
      %p58 = por %p56, %p57
      %p60 = scmp.ne.s32.totalorder %s43, %s59
      %p61 = scmp.eq.s32.totalorder %s35, 0
      %p62 = por %p60, %p61
      %s64 = sadd.s32 %s63, 1
      %p67 = scmp.eq.s32.totalorder %s29, 1
      %p68 = scmp.ne.s32.totalorder %s63, %s65
      %p69 = scmp.eq.s32.totalorder %s29, 0
      %p70 = por %p68, %p69
      %p71 = scmp.ne.s32.totalorder %s63, %s65
      %p72 = scmp.eq.s32.totalorder %s34, 1
      %p73 = por %p71, %p72
      %p74 = scmp.ne.s32.totalorder %s65, %s66
      %p75 = scmp.eq.s32.totalorder %s34, 0
      %p76 = por %p74, %p75
      %p77 = scmp.ne.s32.totalorder %s65, %s66
      %p78 = scmp.eq.s32.totalorder %s35, 1
      %p79 = por %p77, %p78
      %p81 = scmp.ne.s32.totalorder %s66, %s80
      %p82 = scmp.eq.s32.totalorder %s35, 0
      %p83 = por %p81, %p82
      %s85 = sadd.s32 %s84, 1
      %p88 = scmp.eq.s32.totalorder %s29, 1
      %p89 = scmp.ne.s32.totalorder %s84, %s86
      %p90 = scmp.eq.s32.totalorder %s29, 0
      %p91 = por %p89, %p90
      %p92 = scmp.ne.s32.totalorder %s84, %s86
      %p93 = scmp.eq.s32.totalorder %s34, 1
      %p94 = por %p92, %p93
      %p95 = scmp.ne.s32.totalorder %s86, %s87
      %p96 = scmp.eq.s32.totalorder %s34, 0
      %p97 = por %p95, %p96
      %p98 = scmp.ne.s32.totalorder %s86, %s87
      %p99 = scmp.eq.s32.totalorder %s35, 1
      %p100 = por %p98, %p99
      %p102 = scmp.ne.s32.totalorder %s87, %s101
      %p103 = scmp.eq.s32.totalorder %s35, 0
      %p104 = por %p102, %p103
      %s106 = sadd.s32 %s105, 1
      %p109 = scmp.eq.s32.totalorder %s29, 1
      %p110 = scmp.ne.s32.totalorder %s105, %s107
      %p111 = scmp.eq.s32.totalorder %s29, 0
      %p112 = por %p110, %p111
      %p113 = scmp.ne.s32.totalorder %s105, %s107
      %p114 = scmp.eq.s32.totalorder %s34, 1
      %p115 = por %p113, %p114
      %p116 = scmp.ne.s32.totalorder %s107, %s108
      %p117 = scmp.eq.s32.totalorder %s34, 0
      %p118 = por %p116, %p117
      %p119 = scmp.ne.s32.totalorder %s107, %s108
      %p120 = scmp.eq.s32.totalorder %s35, 1
      %p121 = por %p119, %p120
      %p123 = scmp.ne.s32.totalorder %s108, %s122
      %p124 = scmp.eq.s32.totalorder %s35, 0
      %p125 = por %p123, %p124
      %s127 = sadd.s32 %s126, 1
      %p130 = scmp.eq.s32.totalorder %s29, 1
      %p131 = scmp.ne.s32.totalorder %s126, %s128
      %p132 = scmp.eq.s32.totalorder %s29, 0
      %p133 = por %p131, %p132
      %p134 = scmp.ne.s32.totalorder %s126, %s128
      %p135 = scmp.eq.s32.totalorder %s34, 1
      %p136 = por %p134, %p135
      %p137 = scmp.ne.s32.totalorder %s128, %s129
      %p138 = scmp.eq.s32.totalorder %s34, 0
      %p139 = por %p137, %p138
      %p140 = scmp.ne.s32.totalorder %s128, %s129
      %p141 = scmp.eq.s32.totalorder %s35, 1
      %p142 = por %p140, %p141
      %p144 = scmp.ne.s32.totalorder %s129, %s143
      %p145 = scmp.eq.s32.totalorder %s35, 0
      %p146 = por %p144, %p145
      %s148 = sadd.s32 %s147, 1
      %p151 = scmp.eq.s32.totalorder %s29, 1
      %p152 = scmp.ne.s32.totalorder %s147, %s149
      %p153 = scmp.eq.s32.totalorder %s29, 0
      %p154 = por %p152, %p153
      %p155 = scmp.ne.s32.totalorder %s147, %s149
      %p156 = scmp.eq.s32.totalorder %s34, 1
      %p157 = por %p155, %p156
      %p158 = scmp.ne.s32.totalorder %s149, %s150
      %p159 = scmp.eq.s32.totalorder %s34, 0
      %p160 = por %p158, %p159
      %p161 = scmp.ne.s32.totalorder %s149, %s150
      %p162 = scmp.eq.s32.totalorder %s35, 1
      %p163 = por %p161, %p162
      %p165 = scmp.ne.s32.totalorder %s150, %s164
      %p166 = scmp.eq.s32.totalorder %s35, 0
      %p167 = por %p165, %p166
      %s169 = sadd.s32 %s168, 1
      %p172 = scmp.eq.s32.totalorder %s29, 1
      %p173 = scmp.ne.s32.totalorder %s168, %s170
      %p174 = scmp.eq.s32.totalorder %s29, 0
      %p175 = por %p173, %p174
      %p176 = scmp.ne.s32.totalorder %s168, %s170
      %p177 = scmp.eq.s32.totalorder %s34, 1
      %p178 = por %p176, %p177
      %p179 = scmp.ne.s32.totalorder %s170, %s171
      %p180 = scmp.eq.s32.totalorder %s34, 0
      %p181 = por %p179, %p180
      %p182 = scmp.ne.s32.totalorder %s170, %s171
      %p183 = scmp.eq.s32.totalorder %s35, 1
      %p184 = por %p182, %p183
      %p186 = scmp.ne.s32.totalorder %s171, %s185
      %p187 = scmp.eq.s32.totalorder %s35, 0
      %p188 = por %p186, %p187
      %s190 = sadd.s32 %s189, 1
      %p193 = scmp.eq.s32.totalorder %s29, 1
      %p194 = scmp.ne.s32.totalorder %s189, %s191
      %p195 = scmp.eq.s32.totalorder %s29, 0
      %p196 = por %p194, %p195
      %p197 = scmp.ne.s32.totalorder %s189, %s191
      %p198 = scmp.eq.s32.totalorder %s34, 1
      %p199 = por %p197, %p198
      %p200 = scmp.ne.s32.totalorder %s191, %s192
      %p201 = scmp.eq.s32.totalorder %s34, 0
      %p202 = por %p200, %p201
      %p203 = scmp.ne.s32.totalorder %s191, %s192
      %p204 = scmp.eq.s32.totalorder %s35, 1
      %p205 = por %p203, %p204
      %p207 = scmp.ne.s32.totalorder %s192, %s206
      %p208 = scmp.eq.s32.totalorder %s35, 0
      %p209 = por %p207, %p208
      %s211 = sadd.s32 %s210, 1
      %p214 = scmp.eq.s32.totalorder %s29, 1
      %p215 = scmp.ne.s32.totalorder %s210, %s212
      %p216 = scmp.eq.s32.totalorder %s29, 0
      %p217 = por %p215, %p216
      %p218 = scmp.ne.s32.totalorder %s210, %s212
      %p219 = scmp.eq.s32.totalorder %s34, 1
      %p220 = por %p218, %p219
      %p221 = scmp.ne.s32.totalorder %s212, %s213
      %p222 = scmp.eq.s32.totalorder %s34, 0
      %p223 = por %p221, %p222
      %p224 = scmp.ne.s32.totalorder %s212, %s213
      %p225 = scmp.eq.s32.totalorder %s35, 1
      %p226 = por %p224, %p225
      %p228 = scmp.ne.s32.totalorder %s213, %s227
      %p229 = scmp.eq.s32.totalorder %s35, 0
      %p230 = por %p228, %p229
      %s232 = sadd.s32 %s231, 1
      %p235 = scmp.eq.s32.totalorder %s29, 1
      %p236 = scmp.ne.s32.totalorder %s231, %s233
      %p237 = scmp.eq.s32.totalorder %s29, 0
      %p238 = por %p236, %p237
      %p239 = scmp.ne.s32.totalorder %s231, %s233
      %p240 = scmp.eq.s32.totalorder %s34, 1
      %p241 = por %p239, %p240
      %p242 = scmp.ne.s32.totalorder %s233, %s234
      %p243 = scmp.eq.s32.totalorder %s34, 0
      %p244 = por %p242, %p243
      %p245 = scmp.ne.s32.totalorder %s233, %s234
      %p246 = scmp.eq.s32.totalorder %s35, 1
      %p247 = por %p245, %p246
      %p249 = scmp.ne.s32.totalorder %s234, %s248
      %p250 = scmp.eq.s32.totalorder %s35, 0
      %p251 = por %p249, %p250
      %s253 = sadd.s32 %s252, 1
      %p256 = scmp.eq.s32.totalorder %s29, 1
      %p257 = scmp.ne.s32.totalorder %s252, %s254
      %p258 = scmp.eq.s32.totalorder %s29, 0
      %p259 = por %p257, %p258
      %p260 = scmp.ne.s32.totalorder %s252, %s254
      %p261 = scmp.eq.s32.totalorder %s34, 1
      %p262 = por %p260, %p261
      %p263 = scmp.ne.s32.totalorder %s254, %s255
      %p264 = scmp.eq.s32.totalorder %s34, 0
      %p265 = por %p263, %p264
      %p266 = scmp.ne.s32.totalorder %s254, %s255
      %p267 = scmp.eq.s32.totalorder %s35, 1
      %p268 = por %p266, %p267
      %p270 = scmp.ne.s32.totalorder %s255, %s269
      %p271 = scmp.eq.s32.totalorder %s35, 0
      %p272 = por %p270, %p271
      %s274 = sadd.s32 %s273, 1
      %p277 = scmp.eq.s32.totalorder %s29, 1
      %p278 = scmp.ne.s32.totalorder %s273, %s275
      %p279 = scmp.eq.s32.totalorder %s29, 0
      %p280 = por %p278, %p279
      %p281 = scmp.ne.s32.totalorder %s273, %s275
      %p282 = scmp.eq.s32.totalorder %s34, 1
      %p283 = por %p281, %p282
      %p284 = scmp.ne.s32.totalorder %s275, %s276
      %p285 = scmp.eq.s32.totalorder %s34, 0
      %p286 = por %p284, %p285
      %p287 = scmp.ne.s32.totalorder %s275, %s276
      %p288 = scmp.eq.s32.totalorder %s35, 1
      %p289 = por %p287, %p288
      %p291 = scmp.ne.s32.totalorder %s276, %s290
      %p292 = scmp.eq.s32.totalorder %s35, 0
      %p293 = por %p291, %p292
      %s295 = sadd.s32 %s294, 1
      %p298 = scmp.eq.s32.totalorder %s29, 1
      %p299 = scmp.ne.s32.totalorder %s294, %s296
      %p300 = scmp.eq.s32.totalorder %s29, 0
      %p301 = por %p299, %p300
      %p302 = scmp.ne.s32.totalorder %s294, %s296
      %p303 = scmp.eq.s32.totalorder %s34, 1
      %p304 = por %p302, %p303
      %p305 = scmp.ne.s32.totalorder %s296, %s297
      %p306 = scmp.eq.s32.totalorder %s34, 0
      %p307 = por %p305, %p306
      %p308 = scmp.ne.s32.totalorder %s296, %s297
      %p309 = scmp.eq.s32.totalorder %s35, 1
      %p310 = por %p308, %p309
      %p312 = scmp.ne.s32.totalorder %s297, %s311
      %p313 = scmp.eq.s32.totalorder %s35, 0
      %p314 = por %p312, %p313
      %s316 = sadd.s32 %s315, 1
      %p319 = scmp.eq.s32.totalorder %s29, 1
      %p320 = scmp.ne.s32.totalorder %s315, %s317
      %p321 = scmp.eq.s32.totalorder %s29, 0
      %p322 = por %p320, %p321
      %p323 = scmp.ne.s32.totalorder %s315, %s317
      %p324 = scmp.eq.s32.totalorder %s34, 1
      %p325 = por %p323, %p324
      %p326 = scmp.ne.s32.totalorder %s317, %s318
      %p327 = scmp.eq.s32.totalorder %s34, 0
      %p328 = por %p326, %p327
      %p329 = scmp.ne.s32.totalorder %s317, %s318
      %p330 = scmp.eq.s32.totalorder %s35, 1
      %p331 = por %p329, %p330
      %p333 = scmp.ne.s32.totalorder %s318, %s332
      %p334 = scmp.eq.s32.totalorder %s35, 0
      %p335 = por %p333, %p334
      %s336 = ssub.s32 %s29, %s36
      %p337 = scmp.eq.s32.totalorder %s336, 0
      %s339 = sadd.s32 %s338, 1
      %s340 = scalar_select %p337, %s338, %s339
      %p343 = pneg %p337
      %p344 = scmp.eq.s32.totalorder %s29, 1
      %p345 = por %p343, %p344
      %p346 = scmp.ne.s32.totalorder %s338, %s341
      %p347 = scmp.eq.s32.totalorder %s29, 0
      %p348 = por %p346, %p347
      %p349 = scmp.ne.s32.totalorder %s338, %s341
      %p350 = scmp.eq.s32.totalorder %s34, 1
      %p351 = por %p349, %p350
      %p352 = scmp.ne.s32.totalorder %s341, %s342
      %p353 = scmp.eq.s32.totalorder %s34, 0
      %p354 = por %p352, %p353
      %p355 = scmp.ne.s32.totalorder %s341, %s342
      %p356 = scmp.eq.s32.totalorder %s35, 1
      %p357 = por %p355, %p356
      %p359 = scmp.ne.s32.totalorder %s342, %s358
      %p360 = scmp.eq.s32.totalorder %s35, 0
      %p361 = por %p359, %p360
      %p362 = scmp.le.s32.totalorder 1, %s29
      %p363 = scmp.lt.s32.totalorder %s29, 3
      %p364 = pnand %p362, %p363
      %p365 = pneg %p364
      // Predicated region
      $region9: #{tpu_custom_call.1} parent=5 // pred_check
        _
      $region10: #{tpu_custom_call.1} parent=5 // pred_check_branch
        %367 = sbr.rel (%p364) target = $region12
      $region11: #{tpu_custom_call.1} parent=5 // pred_region
        %s368 = ssub.s32 %s29, 1
        // Predicated region
        $region13: #{tpu_custom_call.1} parent=11 // pred_check
          %p369 = pneg %p76
        $region14: #{tpu_custom_call.1} parent=11 // pred_check_branch
          %371 = sbr.rel (%p369) target = $region16
        $region15: #{tpu_custom_call.1} parent=11 // pred_region
          %s373 = ssub.s32 256, 256
          %374 = vsyncadd [#allocation6], %s373
          %s375 = sshll.u32 [#allocation5], 4
          %s376 = int_to_ptr.vmem [resolvable:$true] %s375
          %381 = dma.hbm_to_vmem [thread:$0]  %s1, 256, %s376, [#allocation6], 128, 128, 8
        $region16: #{tpu_custom_call.1} parent=11 // pred_fallthru
          _
        // Predicated region
        $region17: #{tpu_custom_call.1} parent=11 // pred_check
          %p382 = pneg %p97
        $region18: #{tpu_custom_call.1} parent=11 // pred_check_branch
          %384 = sbr.rel (%p382) target = $region20
        $region19: #{tpu_custom_call.1} parent=11 // pred_region
          %s386 = ssub.s32 3072, 3072
          %387 = vsyncadd [#allocation6], %s386
          %s388 = sshll.u32 [#allocation7], 4
          %s389 = int_to_ptr.vmem [resolvable:$true] %s388
          %394 = dma.hbm_to_vmem [thread:$0]  %s2, 3072, %s389, [#allocation6], 192, 192, 12
        $region20: #{tpu_custom_call.1} parent=11 // pred_fallthru
          _
        // Predicated region
        $region21: #{tpu_custom_call.1} parent=11 // pred_check
          %p395 = pneg %p118
        $region22: #{tpu_custom_call.1} parent=11 // pred_check_branch
          %397 = sbr.rel (%p395) target = $region24
        $region23: #{tpu_custom_call.1} parent=11 // pred_region
          _
        $region24: #{tpu_custom_call.1} parent=11 // pred_fallthru
          _
        // Predicated region
        $region25: #{tpu_custom_call.1} parent=11 // pred_check
          %p398 = pneg %p139
        $region26: #{tpu_custom_call.1} parent=11 // pred_check_branch
          %400 = sbr.rel (%p398) target = $region28
        $region27: #{tpu_custom_call.1} parent=11 // pred_region
          %s402 = ssub.s32 1024, 1024
          %403 = vsyncadd [#allocation9], %s402
          %s404 = sshll.u32 [#allocation8], 4
          %s405 = int_to_ptr.vmem [resolvable:$true] %s404
          %410 = dma.hbm_to_vmem [thread:$0]  %s4, 1024, %s405, [#allocation9], 64, 64, 4
        $region28: #{tpu_custom_call.1} parent=11 // pred_fallthru
          _
        // Predicated region
        $region29: #{tpu_custom_call.1} parent=11 // pred_check
          %p411 = pneg %p160
        $region30: #{tpu_custom_call.1} parent=11 // pred_check_branch
          %413 = sbr.rel (%p411) target = $region32
        $region31: #{tpu_custom_call.1} parent=11 // pred_region
          _
        $region32: #{tpu_custom_call.1} parent=11 // pred_fallthru
          _
        // Predicated region
        $region33: #{tpu_custom_call.1} parent=11 // pred_check
          %p414 = pneg %p181
        $region34: #{tpu_custom_call.1} parent=11 // pred_check_branch
          %416 = sbr.rel (%p414) target = $region36
        $region35: #{tpu_custom_call.1} parent=11 // pred_region
          _
        $region36: #{tpu_custom_call.1} parent=11 // pred_fallthru
          _
        // Predicated region
        $region37: #{tpu_custom_call.1} parent=11 // pred_check
          %p417 = pneg %p202
        $region38: #{tpu_custom_call.1} parent=11 // pred_check_branch
          %419 = sbr.rel (%p417) target = $region40
        $region39: #{tpu_custom_call.1} parent=11 // pred_region
          _
        $region40: #{tpu_custom_call.1} parent=11 // pred_fallthru
          _
        // Predicated region
        $region41: #{tpu_custom_call.1} parent=11 // pred_check
          %p420 = pneg %p223
        $region42: #{tpu_custom_call.1} parent=11 // pred_check_branch
          %422 = sbr.rel (%p420) target = $region44
        $region43: #{tpu_custom_call.1} parent=11 // pred_region
          %s424 = ssub.s32 2048, 2048
          %425 = vsyncadd [#allocation9], %s424
          %s426 = sshll.u32 [#allocation10], 4
          %s427 = int_to_ptr.vmem [resolvable:$true] %s426
          %432 = dma.hbm_to_vmem [thread:$0]  %s8, 2048, %s427, [#allocation9], 128, 128, 8
        $region44: #{tpu_custom_call.1} parent=11 // pred_fallthru
          _
        // Predicated region
        $region45: #{tpu_custom_call.1} parent=11 // pred_check
          %p433 = pneg %p244
        $region46: #{tpu_custom_call.1} parent=11 // pred_check_branch
          %435 = sbr.rel (%p433) target = $region48
        $region47: #{tpu_custom_call.1} parent=11 // pred_region
          _
        $region48: #{tpu_custom_call.1} parent=11 // pred_fallthru
          _
        // Predicated region
        $region49: #{tpu_custom_call.1} parent=11 // pred_check
          %p436 = pneg %p265
        $region50: #{tpu_custom_call.1} parent=11 // pred_check_branch
          %438 = sbr.rel (%p436) target = $region52
        $region51: #{tpu_custom_call.1} parent=11 // pred_region
          %s440 = ssub.s32 2048, 2048
          %441 = vsyncadd [#allocation12], %s440
          %s442 = sshll.u32 [#allocation11], 4
          %s443 = int_to_ptr.vmem [resolvable:$true] %s442
          %448 = dma.hbm_to_vmem [thread:$0]  %s10, 2048, %s443, [#allocation12], 64, 64, 4
        $region52: #{tpu_custom_call.1} parent=11 // pred_fallthru
          _
        // Predicated region
        $region53: #{tpu_custom_call.1} parent=11 // pred_check
          %p449 = pneg %p286
        $region54: #{tpu_custom_call.1} parent=11 // pred_check_branch
          %451 = sbr.rel (%p449) target = $region56
        $region55: #{tpu_custom_call.1} parent=11 // pred_region
          _
        $region56: #{tpu_custom_call.1} parent=11 // pred_fallthru
          _
        // Predicated region
        $region57: #{tpu_custom_call.1} parent=11 // pred_check
          %p452 = pneg %p307
        $region58: #{tpu_custom_call.1} parent=11 // pred_check_branch
          %454 = sbr.rel (%p452) target = $region60
        $region59: #{tpu_custom_call.1} parent=11 // pred_region
          _
        $region60: #{tpu_custom_call.1} parent=11 // pred_fallthru
          _
        // Predicated region
        $region61: #{tpu_custom_call.1} parent=11 // pred_check
          %p455 = pneg %p328
        $region62: #{tpu_custom_call.1} parent=11 // pred_check_branch
          %457 = sbr.rel (%p455) target = $region64
        $region63: #{tpu_custom_call.1} parent=11 // pred_region
          _
        $region64: #{tpu_custom_call.1} parent=11 // pred_fallthru
          _
      $region12: #{tpu_custom_call.1} parent=5 // pred_fallthru
        _
      %p458 = scmp.lt.s32.totalorder %s29, 2
      // Predicated region
      $region65: #{tpu_custom_call.1} parent=5 // pred_check
        %p459 = pneg %p458
      $region66: #{tpu_custom_call.1} parent=5 // pred_check_branch
        %461 = sbr.rel (%p459) target = $region68
      $region67: #{tpu_custom_call.1} parent=5 // pred_region
        // Predicated region
        $region69: #{tpu_custom_call.1} parent=67 // pred_check
          %p462 = pneg %p49
        $region70: #{tpu_custom_call.1} parent=67 // pred_check_branch
          %464 = sbr.rel (%p462) target = $region72
        $region71: #{tpu_custom_call.1} parent=67 // pred_region
          %s465 = sand.u32 %s39, 1
          %s466 = scalar_lea.sflag [#allocation3], %s465
          %s467 = sand.u32 %s39, 1
          %s468 = smul.addr %s467, 32
          %s469 = scalar_lea.vmem [#allocation2], %s468
          %s470 = smul.u32 2, %s29
          %s472 = ssub.s32 512, 512
          %473 = vsyncadd %s466, %s472
          %s474 = smul.addr %s470, 2
          %s475 = smul.addr %s474, 128
          %s476 = scalar_lea.hbm %s0, %s475
          %s477 = sshll.u32 %s469, 4
          %s478 = int_to_ptr.vmem [resolvable:$true] %s477
          %483 = dma.hbm_to_vmem [thread:$0]  %s476, 512, %s478, %s466, 128, 128, 8
        $region72: #{tpu_custom_call.1} parent=67 // pred_fallthru
          _
      $region68: #{tpu_custom_call.1} parent=5 // pred_fallthru
        _
      %p484 = scmp.le.s32.totalorder 1, %s29
      %p485 = scmp.lt.s32.totalorder %s29, 3
      %p486 = pnand %p484, %p485
      %p487 = pneg %p486
      // Predicated region
      $region73: #{tpu_custom_call.1} parent=5 // pred_check
        _
      $region74: #{tpu_custom_call.1} parent=5 // pred_check_branch
        %489 = sbr.rel (%p486) target = $region76
      $region75: #{tpu_custom_call.1} parent=5 // pred_region
        %s490 = ssub.s32 %s29, 1
        %s491 = sand.u32 %s42, 1
        %s492 = scalar_lea.sflag [#allocation3], %s491
        %s493 = sand.u32 %s42, 1
        %s494 = smul.addr %s493, 32
        %s495 = scalar_lea.vmem [#allocation2], %s494
        // Predicated region
        $region77: #{tpu_custom_call.1} parent=75 // pred_check
          %p496 = pneg %p55
        $region78: #{tpu_custom_call.1} parent=75 // pred_check_branch
          %498 = sbr.rel (%p496) target = $region80
        $region79: #{tpu_custom_call.1} parent=75 // pred_region
          %499 = dma.done %s492, 512
        $region80: #{tpu_custom_call.1} parent=75 // pred_fallthru
          _
        // Predicated region
        $region81: #{tpu_custom_call.1} parent=75 // pred_check
          %p500 = pneg %p76
        $region82: #{tpu_custom_call.1} parent=75 // pred_check_branch
          %502 = sbr.rel (%p500) target = $region84
        $region83: #{tpu_custom_call.1} parent=75 // pred_region
          %503 = dma.done [#allocation6], 256
        $region84: #{tpu_custom_call.1} parent=75 // pred_fallthru
          _
        // Predicated region
        $region85: #{tpu_custom_call.1} parent=75 // pred_check
          %p504 = pneg %p97
        $region86: #{tpu_custom_call.1} parent=75 // pred_check_branch
          %506 = sbr.rel (%p504) target = $region88
        $region87: #{tpu_custom_call.1} parent=75 // pred_region
          %507 = dma.done [#allocation6], 3072
        $region88: #{tpu_custom_call.1} parent=75 // pred_fallthru
          _
        // Predicated region
        $region89: #{tpu_custom_call.1} parent=75 // pred_check
          %p508 = pneg %p139
        $region90: #{tpu_custom_call.1} parent=75 // pred_check_branch
          %510 = sbr.rel (%p508) target = $region92
        $region91: #{tpu_custom_call.1} parent=75 // pred_region
          %511 = dma.done [#allocation9], 1024
        $region92: #{tpu_custom_call.1} parent=75 // pred_fallthru
          _
        // Predicated region
        $region93: #{tpu_custom_call.1} parent=75 // pred_check
          %p512 = pneg %p223
        $region94: #{tpu_custom_call.1} parent=75 // pred_check_branch
          %514 = sbr.rel (%p512) target = $region96
        $region95: #{tpu_custom_call.1} parent=75 // pred_region
          %515 = dma.done [#allocation9], 2048
        $region96: #{tpu_custom_call.1} parent=75 // pred_fallthru
          _
        // Predicated region
        $region97: #{tpu_custom_call.1} parent=75 // pred_check
          %p516 = pneg %p265
        $region98: #{tpu_custom_call.1} parent=75 // pred_check_branch
          %518 = sbr.rel (%p516) target = $region100
        $region99: #{tpu_custom_call.1} parent=75 // pred_region
          %519 = dma.done [#allocation12], 2048
        $region100: #{tpu_custom_call.1} parent=75 // pred_fallthru
          _
        %s520 = sand.u32 %s42, 1
        %s521 = scalar_lea.sflag [#allocation3], %s520
        %s522 = sand.u32 %s42, 1
        %s523 = smul.addr %s522, 32
        %s524 = scalar_lea.vmem [#allocation2], %s523
        %p525 = pneg %p55
        %p526 = pneg %p52
        %p527 = pneg %p76
        %p528 = pneg %p73
        %p529 = pneg %p97
        %p530 = pneg %p94
        %p531 = pneg %p118
        %p532 = pneg %p115
        %p533 = pneg %p139
        %p534 = pneg %p136
        %p535 = pneg %p160
        %p536 = pneg %p157
        %p537 = pneg %p181
        %p538 = pneg %p178
        %p539 = pneg %p202
        %p540 = pneg %p199
        %p541 = pneg %p223
        %p542 = pneg %p220
        %p543 = pneg %p244
        %p544 = pneg %p241
        %p545 = pneg %p265
        %p546 = pneg %p262
        %p547 = pneg %p286
        %p548 = pneg %p283
        %p549 = pneg %p307
        %p550 = pneg %p304
        %p551 = pneg %p328
        %p552 = pneg %p325
        %p553 = pneg %p354
        %p554 = pneg %p351
        %s555 = sand.u32 %s341, 1
        %s556 = scalar_lea.sflag [#allocation4], %s555
        %s557 = sand.u32 %s341, 1
        %s558 = smul.addr %s557, 32
        %s559 = scalar_lea.vmem [#allocation13], %s558
        %s560 = smul.u32 2, %s34
        %s561 = smul.u32 2, %s34
        %v563 = vld [vmem:[%s495] sm:$0xff]
        %v564 = vld [vmem:[%s495 + $0x8] sm:$0xff]
        %v565 = vld [vmem:[%s495 + $0x10] sm:$0xff]
        %v566 = vld [vmem:[%s495 + $0x18] sm:$0xff]
        %v567 = vpack.c.bf16 %v564, %v563
        %v568 = vpack.c.bf16 %v566, %v565
        %v569 = vld [vmem:[#allocation5] sm:$0xff]
        %v570 = vld [vmem:[#allocation5 + $0x8] sm:$0xff]
        %v571 = vld [vmem:[#allocation7] sm:$0xff]
        %v572 = vld [vmem:[#allocation7 + $0x8] sm:$0xf]
        %v573 = vld [vmem:[#allocation7 + $0xc] sm:$0xff]
        %v574 = vld [vmem:[#allocation7 + $0x14] sm:$0xf]
        %v575 = vld [vmem:[#allocation7 + $0x18] sm:$0xff]
        %v576 = vld [vmem:[#allocation7 + $0x20] sm:$0xf]
        %v577 = vld [vmem:[#allocation7 + $0x24] sm:$0xff]
        %v578 = vld [vmem:[#allocation7 + $0x2c] sm:$0xf]
        %v579 = vld [vmem:[#allocation7 + $0x30] sm:$0xff]
        %v580 = vld [vmem:[#allocation7 + $0x38] sm:$0xf]
        %v581 = vld [vmem:[#allocation7 + $0x3c] sm:$0xff]
        %v582 = vld [vmem:[#allocation7 + $0x44] sm:$0xf]
        %v583 = vld [vmem:[#allocation7 + $0x48] sm:$0xff]
        %v584 = vld [vmem:[#allocation7 + $0x50] sm:$0xf]
        %v585 = vld [vmem:[#allocation7 + $0x54] sm:$0xff]
        %v586 = vld [vmem:[#allocation7 + $0x5c] sm:$0xf]
        %v587 = vld [vmem:[#allocation7 + $0x60] sm:$0xff]
        %v588 = vld [vmem:[#allocation7 + $0x68] sm:$0xf]
        %v589 = vld [vmem:[#allocation7 + $0x6c] sm:$0xff]
        %v590 = vld [vmem:[#allocation7 + $0x74] sm:$0xf]
        %v591 = vld [vmem:[#allocation7 + $0x78] sm:$0xff]
        %v592 = vld [vmem:[#allocation7 + $0x80] sm:$0xf]
        %v593 = vld [vmem:[#allocation7 + $0x84] sm:$0xff]
        %v594 = vld [vmem:[#allocation7 + $0x8c] sm:$0xf]
        %v595 = vld [vmem:[#allocation7 + $0x90] sm:$0xff]
        %v596 = vld [vmem:[#allocation7 + $0x98] sm:$0xf]
        %v597 = vld [vmem:[#allocation7 + $0x9c] sm:$0xff]
        %v598 = vld [vmem:[#allocation7 + $0xa4] sm:$0xf]
        %v599 = vld [vmem:[#allocation7 + $0xa8] sm:$0xff]
        %v600 = vld [vmem:[#allocation7 + $0xb0] sm:$0xf]
        %v601 = vld [vmem:[#allocation7 + $0xb4] sm:$0xff]
        %v602 = vld [vmem:[#allocation7 + $0xbc] sm:$0xf]
        %v603 = vld [vmem:[%s3] sm:$0x7]
        %v605 = vlaneseq
        %v606 = vshrl.u32 %v605, 7
        %v607 = vsub.s32 0, %v606
        %v608 = vrot.slane %v603, %v607
        %v609 = vlaneseq
        %v610 = vshrl.u32 %v609, 7
        %v611 = vsub.s32 1, %v610
        %v612 = vrot.slane %v603, %v611
        %v613 = vlaneseq
        %v614 = vshrl.u32 %v613, 7
        %v615 = vsub.s32 2, %v614
        %v616 = vrot.slane %v603, %v615
        %v652 = vunpack.c.l.b16 %v571
        %v653 = vunpack.c.h.b16 %v571
        %v654 = vunpack.c.l.b16 %v572
        %v655 = vunpack.c.l.b16 %v573
        %v656 = vunpack.c.h.b16 %v573
        %v657 = vunpack.c.l.b16 %v574
        %v658 = vunpack.c.l.b16 %v575
        %v659 = vunpack.c.h.b16 %v575
        %v660 = vunpack.c.l.b16 %v576
        %v661 = vunpack.c.l.b16 %v577
        %v662 = vunpack.c.h.b16 %v577
        %v663 = vunpack.c.l.b16 %v578
        %v664 = vunpack.c.l.b16 %v579
        %v665 = vunpack.c.h.b16 %v579
        %v666 = vunpack.c.l.b16 %v580
        %v667 = vunpack.c.l.b16 %v581
        %v668 = vunpack.c.h.b16 %v581
        %v669 = vunpack.c.l.b16 %v582
        %v670 = vunpack.c.l.b16 %v583
        %v671 = vunpack.c.h.b16 %v583
        %v672 = vunpack.c.l.b16 %v584
        %v673 = vunpack.c.l.b16 %v585
        %v674 = vunpack.c.h.b16 %v585
        %v675 = vunpack.c.l.b16 %v586
        %v676 = vunpack.c.l.b16 %v587
        %v677 = vunpack.c.h.b16 %v587
        %v678 = vunpack.c.l.b16 %v588
        %v679 = vunpack.c.l.b16 %v589
        %v680 = vunpack.c.h.b16 %v589
        %v681 = vunpack.c.l.b16 %v590
        %v682 = vunpack.c.l.b16 %v591
        %v683 = vunpack.c.h.b16 %v591
        %v684 = vunpack.c.l.b16 %v592
        %v685 = vunpack.c.l.b16 %v593
        %v686 = vunpack.c.h.b16 %v593
        %v687 = vunpack.c.l.b16 %v594
        %v688 = vunpack.c.l.b16 %v595
        %v689 = vunpack.c.h.b16 %v595
        %v690 = vunpack.c.l.b16 %v596
        %v691 = vunpack.c.l.b16 %v597
        %v692 = vunpack.c.h.b16 %v597
        %v693 = vunpack.c.l.b16 %v598
        %v694 = vunpack.c.l.b16 %v599
        %v695 = vunpack.c.h.b16 %v599
        %v696 = vunpack.c.l.b16 %v600
        %v697 = vunpack.c.l.b16 %v601
        %v698 = vunpack.c.h.b16 %v601
        %v699 = vunpack.c.l.b16 %v602
        %v700 = vpack.c.b16 %v655, %v652
        %v701 = vpack.c.b16 %v656, %v653
        %v702 = vpack.c.b16 %v657, %v654
        %v703 = vpack.c.b16 %v661, %v658
        %v704 = vpack.c.b16 %v662, %v659
        %v705 = vpack.c.b16 %v663, %v660
        %v706 = vpack.c.b16 %v667, %v664
        %v707 = vpack.c.b16 %v668, %v665
        %v708 = vpack.c.b16 %v669, %v666
        %v709 = vpack.c.b16 %v673, %v670
        %v710 = vpack.c.b16 %v674, %v671
        %v711 = vpack.c.b16 %v675, %v672
        %v712 = vpack.c.b16 %v679, %v676
        %v713 = vpack.c.b16 %v680, %v677
        %v714 = vpack.c.b16 %v681, %v678
        %v715 = vpack.c.b16 %v685, %v682
        %v716 = vpack.c.b16 %v686, %v683
        %v717 = vpack.c.b16 %v687, %v684
        %v718 = vpack.c.b16 %v691, %v688
        %v719 = vpack.c.b16 %v692, %v689
        %v720 = vpack.c.b16 %v693, %v690
        %v721 = vpack.c.b16 %v697, %v694
        %v722 = vpack.c.b16 %v698, %v695
        %v723 = vpack.c.b16 %v699, %v696
        %748 = vmatprep.subr.bf16.mxu0 %v701
        %749 = vmatpush1.bf16.msra.mxu0 %v700
        %750 = vmatprep.subr.bf16.mxu0 %v704
        %751 = vmatpush1.bf16.msra.mxu0 %v703
        %752 = vmatprep.subr.bf16.mxu0 %v707
        %753 = vmatpush1.bf16.msra.mxu0 %v706
        %754 = vmatprep.subr.bf16.mxu0 %v710
        %755 = vmatpush1.bf16.msra.mxu0 %v709
        %756 = vmatprep.subr.bf16.mxu0 %v713
        %757 = vmatpush1.bf16.msra.mxu0 %v712
        %758 = vmatprep.subr.bf16.mxu0 %v716
        %759 = vmatpush1.bf16.msra.mxu0 %v715
        %760 = vmatprep.subr.bf16.mxu0 %v719
        %761 = vmatpush1.bf16.msra.mxu0 %v718
        %762 = vmatprep.subr.bf16.mxu0 %v722
        %763 = vmatpush1.bf16.msra.mxu0 %v721
        %764 = vmatprep.subr.bf16.mxu0 0
        %765 = vmatpush1.bf16.msra.mxu0 0
        %766 = vmatprep.subr.bf16.mxu0 0
        %767 = vmatpush1.bf16.msra.mxu0 0
        %768 = vmatprep.subr.bf16.mxu0 0
        %769 = vmatpush1.bf16.msra.mxu0 0
        %770 = vmatprep.subr.bf16.mxu0 0
        %771 = vmatpush1.bf16.msra.mxu0 0
        %772 = vmatprep.subr.bf16.mxu0 0
        %773 = vmatpush1.bf16.msra.mxu0 0
        %774 = vmatprep.subr.bf16.mxu0 0
        %775 = vmatpush1.bf16.msra.mxu0 0
        %776 = vmatprep.subr.bf16.mxu0 0
        %777 = vmatpush1.bf16.msra.mxu0 0
        %778 = vmatprep.subr.bf16.mxu0 0
        %779 = vmatpush1.bf16.msra.mxu0 0
        %780 = vmatprep.mubr.bf16.mxu0 0
        %781 = vmatmul.mubr.bf16.gmra.mrb[0].mxu0 %v567
        %v782 = vpop.f32.mrb[0].mxu0
        %v783 = vadd.f32 %v608, %v782
        %v784 = vpop.f32.mrb[0].mxu0
        %v785 = vadd.f32 %v612, %v784
        %v786 = vpop.f32.mrb[0].mxu0
        %v787 = vadd.f32 %v608, %v786
        %v788 = vpop.f32.mrb[0].mxu0
        %v789 = vadd.f32 %v612, %v788
        %790 = vmatprep.mubr.bf16.mxu0 0
        %791 = vmatmul.mubr.bf16.gmra.mrb[0].mxu0 %v568
        %v792 = vpop.f32.mrb[0].mxu0
        %v793 = vadd.f32 %v608, %v792
        %v794 = vpop.f32.mrb[0].mxu0
        %v795 = vadd.f32 %v612, %v794
        %v796 = vpop.f32.mrb[0].mxu0
        %v797 = vadd.f32 %v608, %v796
        %v798 = vpop.f32.mrb[0].mxu0
        %v799 = vadd.f32 %v612, %v798
        %800 = vdwg.mxu0
        %801 = vmatprep.subr.bf16.mxu0 0
        %802 = vmatpush1.bf16.msra.mxu0 %v702
        %803 = vmatprep.subr.bf16.mxu0 0
        %804 = vmatpush1.bf16.msra.mxu0 %v705
        %805 = vmatprep.subr.bf16.mxu0 0
        %806 = vmatpush1.bf16.msra.mxu0 %v708
        %807 = vmatprep.subr.bf16.mxu0 0
        %808 = vmatpush1.bf16.msra.mxu0 %v711
        %809 = vmatprep.subr.bf16.mxu0 0
        %810 = vmatpush1.bf16.msra.mxu0 %v714
        %811 = vmatprep.subr.bf16.mxu0 0
        %812 = vmatpush1.bf16.msra.mxu0 %v717
        %813 = vmatprep.subr.bf16.mxu0 0
        %814 = vmatpush1.bf16.msra.mxu0 %v720
        %815 = vmatprep.subr.bf16.mxu0 0
        %816 = vmatpush1.bf16.msra.mxu0 %v723
        %817 = vmatprep.subr.bf16.mxu0 0
        %818 = vmatpush1.bf16.msra.mxu0 0
        %819 = vmatprep.subr.bf16.mxu0 0
        %820 = vmatpush1.bf16.msra.mxu0 0
        %821 = vmatprep.subr.bf16.mxu0 0
        %822 = vmatpush1.bf16.msra.mxu0 0
        %823 = vmatprep.subr.bf16.mxu0 0
        %824 = vmatpush1.bf16.msra.mxu0 0
        %825 = vmatprep.subr.bf16.mxu0 0
        %826 = vmatpush1.bf16.msra.mxu0 0
        %827 = vmatprep.subr.bf16.mxu0 0
        %828 = vmatpush1.bf16.msra.mxu0 0
        %829 = vmatprep.subr.bf16.mxu0 0
        %830 = vmatpush1.bf16.msra.mxu0 0
        %831 = vmatprep.subr.bf16.mxu0 0
        %832 = vmatpush1.bf16.msra.mxu0 0
        %833 = vmatprep.mubr.bf16.mxu0 0
        %834 = vmatmul.mubr.bf16.gmra.mrb[0].mxu0 %v567
        %v835 = vpop.f32.mrb[0].mxu0
        %v836 = vadd.f32 %v616, %v835
        %v837 = vpop.f32.mrb[0].mxu0
        %v838 = vpop.f32.mrb[0].mxu0
        %v839 = vadd.f32 %v616, %v838
        %v840 = vpop.f32.mrb[0].mxu0
        %841 = vmatprep.mubr.bf16.mxu0 0
        %842 = vmatmul.mubr.bf16.gmra.mrb[0].mxu0 %v568
        %v843 = vpop.f32.mrb[0].mxu0
        %v844 = vadd.f32 %v616, %v843
        %v845 = vpop.f32.mrb[0].mxu0
        %v846 = vpop.f32.mrb[0].mxu0
        %v847 = vadd.f32 %v616, %v846
        %v848 = vpop.f32.mrb[0].mxu0
        %849 = vdwg.mxu0
        %v850 = vmul.f32 %v783, 0.17677669
        %v851 = vmul.f32 %v787, 0.17677669
        %v852 = vmul.f32 %v793, 0.17677669
        %v853 = vmul.f32 %v797, 0.17677669
        %v854 = vpack.c.bf16 %v851, %v850
        %v855 = vpack.c.bf16 %v853, %v852
        %v856 = vpack.c.bf16 %v789, %v785
        %v857 = vpack.c.bf16 %v799, %v795
        %v858 = vpack.c.bf16 %v839, %v836
        %v859 = vpack.c.bf16 %v847, %v844
        %vm860 = vcmask 261120
        %v862 = vsel %vm860, %v854, 0
        %v865 = vsel %vm860, %v856, 0
        %867 = vmatprep.subr.bf16.mxu0 0
        %868 = vmatpush1.bf16.xpose.msra.mxu0 %v865
        %869 = vmatprep.subr.bf16.mxu0 0
        %870 = vmatpush1.bf16.xpose.msra.mxu0 0
        %871 = vmatprep.subr.bf16.mxu0 0
        %872 = vmatpush1.bf16.xpose.msra.mxu0 0
        %873 = vmatprep.subr.bf16.mxu0 0
        %874 = vmatpush1.bf16.xpose.msra.mxu0 0
        %875 = vmatprep.subr.bf16.mxu0 0
        %876 = vmatpush1.bf16.xpose.msra.mxu0 0
        %877 = vmatprep.subr.bf16.mxu0 0
        %878 = vmatpush1.bf16.xpose.msra.mxu0 0
        %879 = vmatprep.subr.bf16.mxu0 0
        %880 = vmatpush1.bf16.xpose.msra.mxu0 0
        %881 = vmatprep.subr.bf16.mxu0 0
        %882 = vmatpush1.bf16.xpose.msra.mxu0 0
        %883 = vmatprep.subr.bf16.mxu0 0
        %884 = vmatpush1.bf16.xpose.msra.mxu0 0
        %885 = vmatprep.subr.bf16.mxu0 0
        %886 = vmatpush1.bf16.xpose.msra.mxu0 0
        %887 = vmatprep.subr.bf16.mxu0 0
        %888 = vmatpush1.bf16.xpose.msra.mxu0 0
        %889 = vmatprep.subr.bf16.mxu0 0
        %890 = vmatpush1.bf16.xpose.msra.mxu0 0
        %891 = vmatprep.subr.bf16.mxu0 0
        %892 = vmatpush1.bf16.xpose.msra.mxu0 0
        %893 = vmatprep.subr.bf16.mxu0 0
        %894 = vmatpush1.bf16.xpose.msra.mxu0 0
        %895 = vmatprep.subr.bf16.mxu0 0
        %896 = vmatpush1.bf16.xpose.msra.mxu0 0
        %897 = vmatprep.subr.bf16.mxu0 0
        %898 = vmatpush1.bf16.xpose.msra.mxu0 0
        %899 = vmatprep.mubr.bf16.mxu0 0
        %900 = vmatmul.mubr.bf16.gmra.mrb[0].mxu0 %v862
        %v901 = vpop.f32.mrb[0].mxu0
        %v902 = vadd.f32 %v569, %v901
        %v903 = vpop.f32.mrb[0].mxu0
        %v904 = vpop.f32.mrb[0].mxu0
        %v905 = vadd.f32 %v570, %v904
        %v906 = vpop.f32.mrb[0].mxu0
        %907 = vdwg.mxu0
        %v909 = vsel %vm860, %v855, 0
        %v912 = vsel %vm860, %v857, 0
        %914 = vmatprep.subr.bf16.mxu0 0
        %915 = vmatpush1.bf16.xpose.msra.mxu0 %v912
        %916 = vmatprep.subr.bf16.mxu0 0
        %917 = vmatpush1.bf16.xpose.msra.mxu0 0
        %918 = vmatprep.subr.bf16.mxu0 0
        %919 = vmatpush1.bf16.xpose.msra.mxu0 0
        %920 = vmatprep.subr.bf16.mxu0 0
        %921 = vmatpush1.bf16.xpose.msra.mxu0 0
        %922 = vmatprep.subr.bf16.mxu0 0
        %923 = vmatpush1.bf16.xpose.msra.mxu0 0
        %924 = vmatprep.subr.bf16.mxu0 0
        %925 = vmatpush1.bf16.xpose.msra.mxu0 0
        %926 = vmatprep.subr.bf16.mxu0 0
        %927 = vmatpush1.bf16.xpose.msra.mxu0 0
        %928 = vmatprep.subr.bf16.mxu0 0
        %929 = vmatpush1.bf16.xpose.msra.mxu0 0
        %930 = vmatprep.subr.bf16.mxu0 0
        %931 = vmatpush1.bf16.xpose.msra.mxu0 0
        %932 = vmatprep.subr.bf16.mxu0 0
        %933 = vmatpush1.bf16.xpose.msra.mxu0 0
        %934 = vmatprep.subr.bf16.mxu0 0
        %935 = vmatpush1.bf16.xpose.msra.mxu0 0
        %936 = vmatprep.subr.bf16.mxu0 0
        %937 = vmatpush1.bf16.xpose.msra.mxu0 0
        %938 = vmatprep.subr.bf16.mxu0 0
        %939 = vmatpush1.bf16.xpose.msra.mxu0 0
        %940 = vmatprep.subr.bf16.mxu0 0
        %941 = vmatpush1.bf16.xpose.msra.mxu0 0
        %942 = vmatprep.subr.bf16.mxu0 0
        %943 = vmatpush1.bf16.xpose.msra.mxu0 0
        %944 = vmatprep.subr.bf16.mxu0 0
        %945 = vmatpush1.bf16.xpose.msra.mxu0 0
        %946 = vmatprep.mubr.bf16.mxu0 0
        %947 = vmatmul.mubr.bf16.gmra.mrb[0].mxu0 %v909
        %v948 = vpop.f32.mrb[0].mxu0
        %v949 = vadd.f32 %v569, %v948
        %v950 = vpop.f32.mrb[0].mxu0
        %v951 = vpop.f32.mrb[0].mxu0
        %v952 = vadd.f32 %v570, %v951
        %v953 = vpop.f32.mrb[0].mxu0
        %954 = vdwg.mxu0
        %vm955 = vcmask 130048
        %v956 = vsel %vm955, %v902, -inf
        %957 = vmax.xlane.f32.xlu0 %v956
        %v958 = vpop.xlane.xlu0 %957
        %v959 = vsel %vm955, %v905, -inf
        %960 = vmax.xlane.f32.xlu0 %v959
        %v961 = vpop.xlane.xlu0 %960
        %v962 = vsel %vm955, %v949, -inf
        %963 = vmax.xlane.f32.xlu0 %v962
        %v964 = vpop.xlane.xlu0 %963
        %v965 = vsel %vm955, %v952, -inf
        %966 = vmax.xlane.f32.xlu0 %v965
        %v967 = vpop.xlane.xlu0 %966
        %v968 = vsub.f32 %v902, %v958
        %v969 = vsub.f32 %v905, %v961
        %v970 = vsub.f32 %v949, %v964
        %v971 = vsub.f32 %v952, %v967
        %v972 = vmul.f32 %v968, 1.442695
        %v973 = vpow.pop %v972
        %v974 = vmul.f32 %v969, 1.442695
        %v975 = vpow.pop %v974
        %v976 = vmul.f32 %v970, 1.442695
        %v977 = vpow.pop %v976
        %v978 = vmul.f32 %v971, 1.442695
        %v979 = vpow.pop %v978
        %v980 = vsel %vm955, %v973, 0.0
        %981 = vadd.xlane.f32.xlu0 %v980
        %v982 = vpop.xlane.xlu0 %981
        %v983 = vsel %vm955, %v975, 0.0
        %984 = vadd.xlane.f32.xlu0 %v983
        %v985 = vpop.xlane.xlu0 %984
        %v986 = vsel %vm955, %v977, 0.0
        %987 = vadd.xlane.f32.xlu0 %v986
        %v988 = vpop.xlane.xlu0 %987
        %v989 = vsel %vm955, %v979, 0.0
        %990 = vadd.xlane.f32.xlu0 %v989
        %v991 = vpop.xlane.xlu0 %990
        %v992 = vrcp.pop %v982
        %v993 = vrcp.pop %v985
        %v994 = vrcp.pop %v988
        %v995 = vrcp.pop %v991
        %v996 = vmul.f32 %v973, %v992
        %v997 = vmul.f32 %v975, %v993
        %v998 = vmul.f32 %v977, %v994
        %v999 = vmul.f32 %v979, %v995
        %v1000 = vpack.c.bf16 %v997, %v996
        %v1001 = vpack.c.bf16 %v999, %v998
        %v1003 = vsel %vm955, %v1000, 0
        %1005 = vmatprep.subr.bf16.mxu0 0
        %1006 = vmatpush1.bf16.msra.mxu0 %v858
        %1007 = vmatprep.subr.bf16.mxu0 0
        %1008 = vmatpush1.bf16.msra.mxu0 0
        %1009 = vmatprep.subr.bf16.mxu0 0
        %1010 = vmatpush1.bf16.msra.mxu0 0
        %1011 = vmatprep.subr.bf16.mxu0 0
        %1012 = vmatpush1.bf16.msra.mxu0 0
        %1013 = vmatprep.subr.bf16.mxu0 0
        %1014 = vmatpush1.bf16.msra.mxu0 0
        %1015 = vmatprep.subr.bf16.mxu0 0
        %1016 = vmatpush1.bf16.msra.mxu0 0
        %1017 = vmatprep.subr.bf16.mxu0 0
        %1018 = vmatpush1.bf16.msra.mxu0 0
        %1019 = vmatprep.subr.bf16.mxu0 0
        %1020 = vmatpush1.bf16.msra.mxu0 0
        %1021 = vmatprep.subr.bf16.mxu0 0
        %1022 = vmatpush1.bf16.msra.mxu0 0
        %1023 = vmatprep.subr.bf16.mxu0 0
        %1024 = vmatpush1.bf16.msra.mxu0 0
        %1025 = vmatprep.subr.bf16.mxu0 0
        %1026 = vmatpush1.bf16.msra.mxu0 0
        %1027 = vmatprep.subr.bf16.mxu0 0
        %1028 = vmatpush1.bf16.msra.mxu0 0
        %1029 = vmatprep.subr.bf16.mxu0 0
        %1030 = vmatpush1.bf16.msra.mxu0 0
        %1031 = vmatprep.subr.bf16.mxu0 0
        %1032 = vmatpush1.bf16.msra.mxu0 0
        %1033 = vmatprep.subr.bf16.mxu0 0
        %1034 = vmatpush1.bf16.msra.mxu0 0
        %1035 = vmatprep.subr.bf16.mxu0 0
        %1036 = vmatpush1.bf16.msra.mxu0 0
        %1037 = vmatprep.mubr.bf16.mxu0 0
        %1038 = vmatmul.mubr.bf16.gmra.mrb[0].mxu0 %v1003
        %v1039 = vpop.f32.mrb[0].mxu0
        %v1040 = vadd.f32 0.0, %v1039
        %v1041 = vpop.f32.mrb[0].mxu0
        %v1042 = vpop.f32.mrb[0].mxu0
        %v1043 = vadd.f32 0.0, %v1042
        %v1044 = vpop.f32.mrb[0].mxu0
        %1045 = vdwg.mxu0
        %v1047 = vsel %vm955, %v1001, 0
        %1049 = vmatprep.subr.bf16.mxu0 0
        %1050 = vmatpush1.bf16.msra.mxu0 %v859
        %1051 = vmatprep.subr.bf16.mxu0 0
        %1052 = vmatpush1.bf16.msra.mxu0 0
        %1053 = vmatprep.subr.bf16.mxu0 0
        %1054 = vmatpush1.bf16.msra.mxu0 0
        %1055 = vmatprep.subr.bf16.mxu0 0
        %1056 = vmatpush1.bf16.msra.mxu0 0
        %1057 = vmatprep.subr.bf16.mxu0 0
        %1058 = vmatpush1.bf16.msra.mxu0 0
        %1059 = vmatprep.subr.bf16.mxu0 0
        %1060 = vmatpush1.bf16.msra.mxu0 0
        %1061 = vmatprep.subr.bf16.mxu0 0
        %1062 = vmatpush1.bf16.msra.mxu0 0
        %1063 = vmatprep.subr.bf16.mxu0 0
        %1064 = vmatpush1.bf16.msra.mxu0 0
        %1065 = vmatprep.subr.bf16.mxu0 0
        %1066 = vmatpush1.bf16.msra.mxu0 0
        %1067 = vmatprep.subr.bf16.mxu0 0
        %1068 = vmatpush1.bf16.msra.mxu0 0
        %1069 = vmatprep.subr.bf16.mxu0 0
        %1070 = vmatpush1.bf16.msra.mxu0 0
        %1071 = vmatprep.subr.bf16.mxu0 0
        %1072 = vmatpush1.bf16.msra.mxu0 0
        %1073 = vmatprep.subr.bf16.mxu0 0
        %1074 = vmatpush1.bf16.msra.mxu0 0
        %1075 = vmatprep.subr.bf16.mxu0 0
        %1076 = vmatpush1.bf16.msra.mxu0 0
        %1077 = vmatprep.subr.bf16.mxu0 0
        %1078 = vmatpush1.bf16.msra.mxu0 0
        %1079 = vmatprep.subr.bf16.mxu0 0
        %1080 = vmatpush1.bf16.msra.mxu0 0
        %1081 = vmatprep.mubr.bf16.mxu0 0
        %1082 = vmatmul.mubr.bf16.gmra.mrb[0].mxu0 %v1047
        %v1083 = vpop.f32.mrb[0].mxu0
        %v1084 = vadd.f32 0.0, %v1083
        %v1085 = vpop.f32.mrb[0].mxu0
        %v1086 = vpop.f32.mrb[0].mxu0
        %v1087 = vadd.f32 0.0, %v1086
        %v1088 = vpop.f32.mrb[0].mxu0
        %1089 = vdwg.mxu0
        %v1090 = vpack.c.bf16 %v1043, %v1040
        %v1091 = vpack.c.bf16 %v1087, %v1084
        %v1092 = vld [vmem:[#allocation8] sm:$0xf]
        %v1093 = vld [vmem:[#allocation8 + $0x4] sm:$0xf]
        %v1094 = vld [vmem:[#allocation8 + $0x8] sm:$0xf]
        %v1095 = vld [vmem:[#allocation8 + $0xc] sm:$0xf]
        %1097 = vrot.lane.b32.xlu0 %v854, 96
        %v1098 = vpop.permute.xlu0 %1097
        %1100 = vrot.lane.b32.xlu0 %v856, 96
        %v1101 = vpop.permute.xlu0 %1100
        %v1103 = vsel %vm860, %v1098, 0
        %v1106 = vsel %vm860, %v1101, 0
        %1108 = vmatprep.subr.bf16.mxu0 0
        %1109 = vmatpush1.bf16.xpose.msra.mxu0 %v1106
        %1110 = vmatprep.subr.bf16.mxu0 0
        %1111 = vmatpush1.bf16.xpose.msra.mxu0 0
        %1112 = vmatprep.subr.bf16.mxu0 0
        %1113 = vmatpush1.bf16.xpose.msra.mxu0 0
        %1114 = vmatprep.subr.bf16.mxu0 0
        %1115 = vmatpush1.bf16.xpose.msra.mxu0 0
        %1116 = vmatprep.subr.bf16.mxu0 0
        %1117 = vmatpush1.bf16.xpose.msra.mxu0 0
        %1118 = vmatprep.subr.bf16.mxu0 0
        %1119 = vmatpush1.bf16.xpose.msra.mxu0 0
        %1120 = vmatprep.subr.bf16.mxu0 0
        %1121 = vmatpush1.bf16.xpose.msra.mxu0 0
        %1122 = vmatprep.subr.bf16.mxu0 0
        %1123 = vmatpush1.bf16.xpose.msra.mxu0 0
        %1124 = vmatprep.subr.bf16.mxu0 0
        %1125 = vmatpush1.bf16.xpose.msra.mxu0 0
        %1126 = vmatprep.subr.bf16.mxu0 0
        %1127 = vmatpush1.bf16.xpose.msra.mxu0 0
        %1128 = vmatprep.subr.bf16.mxu0 0
        %1129 = vmatpush1.bf16.xpose.msra.mxu0 0
        %1130 = vmatprep.subr.bf16.mxu0 0
        %1131 = vmatpush1.bf16.xpose.msra.mxu0 0
        %1132 = vmatprep.subr.bf16.mxu0 0
        %1133 = vmatpush1.bf16.xpose.msra.mxu0 0
        %1134 = vmatprep.subr.bf16.mxu0 0
        %1135 = vmatpush1.bf16.xpose.msra.mxu0 0
        %1136 = vmatprep.subr.bf16.mxu0 0
        %1137 = vmatpush1.bf16.xpose.msra.mxu0 0
        %1138 = vmatprep.subr.bf16.mxu0 0
        %1139 = vmatpush1.bf16.xpose.msra.mxu0 0
        %1140 = vmatprep.mubr.bf16.mxu0 0
        %1141 = vmatmul.mubr.bf16.gmra.mrb[0].mxu0 %v1103
        %v1142 = vpop.f32.mrb[0].mxu0
        %v1143 = vadd.f32 %v569, %v1142
        %v1144 = vpop.f32.mrb[0].mxu0
        %v1145 = vpop.f32.mrb[0].mxu0
        %v1146 = vadd.f32 %v570, %v1145
        %v1147 = vpop.f32.mrb[0].mxu0
        %1148 = vdwg.mxu0
        %1150 = vrot.lane.b32.xlu0 %v855, 96
        %v1151 = vpop.permute.xlu0 %1150
        %1153 = vrot.lane.b32.xlu0 %v857, 96
        %v1154 = vpop.permute.xlu0 %1153
        %v1156 = vsel %vm860, %v1151, 0
        %v1159 = vsel %vm860, %v1154, 0
        %1161 = vmatprep.subr.bf16.mxu0 0
        %1162 = vmatpush1.bf16.xpose.msra.mxu0 %v1159
        %1163 = vmatprep.subr.bf16.mxu0 0
        %1164 = vmatpush1.bf16.xpose.msra.mxu0 0
        %1165 = vmatprep.subr.bf16.mxu0 0
        %1166 = vmatpush1.bf16.xpose.msra.mxu0 0
        %1167 = vmatprep.subr.bf16.mxu0 0
        %1168 = vmatpush1.bf16.xpose.msra.mxu0 0
        %1169 = vmatprep.subr.bf16.mxu0 0
        %1170 = vmatpush1.bf16.xpose.msra.mxu0 0
        %1171 = vmatprep.subr.bf16.mxu0 0
        %1172 = vmatpush1.bf16.xpose.msra.mxu0 0
        %1173 = vmatprep.subr.bf16.mxu0 0
        %1174 = vmatpush1.bf16.xpose.msra.mxu0 0
        %1175 = vmatprep.subr.bf16.mxu0 0
        %1176 = vmatpush1.bf16.xpose.msra.mxu0 0
        %1177 = vmatprep.subr.bf16.mxu0 0
        %1178 = vmatpush1.bf16.xpose.msra.mxu0 0
        %1179 = vmatprep.subr.bf16.mxu0 0
        %1180 = vmatpush1.bf16.xpose.msra.mxu0 0
        %1181 = vmatprep.subr.bf16.mxu0 0
        %1182 = vmatpush1.bf16.xpose.msra.mxu0 0
        %1183 = vmatprep.subr.bf16.mxu0 0
        %1184 = vmatpush1.bf16.xpose.msra.mxu0 0
        %1185 = vmatprep.subr.bf16.mxu0 0
        %1186 = vmatpush1.bf16.xpose.msra.mxu0 0
        %1187 = vmatprep.subr.bf16.mxu0 0
        %1188 = vmatpush1.bf16.xpose.msra.mxu0 0
        %1189 = vmatprep.subr.bf16.mxu0 0
        %1190 = vmatpush1.bf16.xpose.msra.mxu0 0
        %1191 = vmatprep.subr.bf16.mxu0 0
        %1192 = vmatpush1.bf16.xpose.msra.mxu0 0
        %1193 = vmatprep.mubr.bf16.mxu0 0
        %1194 = vmatmul.mubr.bf16.gmra.mrb[0].mxu0 %v1156
        %v1195 = vpop.f32.mrb[0].mxu0
        %v1196 = vadd.f32 %v569, %v1195
        %v1197 = vpop.f32.mrb[0].mxu0
        %v1198 = vpop.f32.mrb[0].mxu0
        %v1199 = vadd.f32 %v570, %v1198
        %v1200 = vpop.f32.mrb[0].mxu0
        %1201 = vdwg.mxu0
        %v1202 = vsel %vm955, %v1143, -inf
        %1203 = vmax.xlane.f32.xlu0 %v1202
        %v1204 = vpop.xlane.xlu0 %1203
        %v1205 = vsel %vm955, %v1146, -inf
        %1206 = vmax.xlane.f32.xlu0 %v1205
        %v1207 = vpop.xlane.xlu0 %1206
        %v1208 = vsel %vm955, %v1196, -inf
        %1209 = vmax.xlane.f32.xlu0 %v1208
        %v1210 = vpop.xlane.xlu0 %1209
        %v1211 = vsel %vm955, %v1199, -inf
        %1212 = vmax.xlane.f32.xlu0 %v1211
        %v1213 = vpop.xlane.xlu0 %1212
        %v1214 = vsub.f32 %v1143, %v1204
        %v1215 = vsub.f32 %v1146, %v1207
        %v1216 = vsub.f32 %v1196, %v1210
        %v1217 = vsub.f32 %v1199, %v1213
        %v1218 = vmul.f32 %v1214, 1.442695
        %v1219 = vpow.pop %v1218
        %v1220 = vmul.f32 %v1215, 1.442695
        %v1221 = vpow.pop %v1220
        %v1222 = vmul.f32 %v1216, 1.442695
        %v1223 = vpow.pop %v1222
        %v1224 = vmul.f32 %v1217, 1.442695
        %v1225 = vpow.pop %v1224
        %v1226 = vsel %vm955, %v1219, 0.0
        %1227 = vadd.xlane.f32.xlu0 %v1226
        %v1228 = vpop.xlane.xlu0 %1227
        %v1229 = vsel %vm955, %v1221, 0.0
        %1230 = vadd.xlane.f32.xlu0 %v1229
        %v1231 = vpop.xlane.xlu0 %1230
        %v1232 = vsel %vm955, %v1223, 0.0
        %1233 = vadd.xlane.f32.xlu0 %v1232
        %v1234 = vpop.xlane.xlu0 %1233
        %v1235 = vsel %vm955, %v1225, 0.0
        %1236 = vadd.xlane.f32.xlu0 %v1235
        %v1237 = vpop.xlane.xlu0 %1236
        %v1238 = vrcp.pop %v1228
        %v1239 = vrcp.pop %v1231
        %v1240 = vrcp.pop %v1234
        %v1241 = vrcp.pop %v1237
        %v1242 = vmul.f32 %v1219, %v1238
        %v1243 = vmul.f32 %v1221, %v1239
        %v1244 = vmul.f32 %v1223, %v1240
        %v1245 = vmul.f32 %v1225, %v1241
        %v1246 = vpack.c.bf16 %v1243, %v1242
        %v1247 = vpack.c.bf16 %v1245, %v1244
        %1249 = vrot.lane.b32.xlu0 %v858, 96
        %v1250 = vpop.permute.xlu0 %1249
        %v1253 = vsel %vm955, %v1246, 0
        %1255 = vmatprep.subr.bf16.mxu0 0
        %1256 = vmatpush1.bf16.msra.mxu0 %v1250
        %1257 = vmatprep.subr.bf16.mxu0 0
        %1258 = vmatpush1.bf16.msra.mxu0 0
        %1259 = vmatprep.subr.bf16.mxu0 0
        %1260 = vmatpush1.bf16.msra.mxu0 0
        %1261 = vmatprep.subr.bf16.mxu0 0
        %1262 = vmatpush1.bf16.msra.mxu0 0
        %1263 = vmatprep.subr.bf16.mxu0 0
        %1264 = vmatpush1.bf16.msra.mxu0 0
        %1265 = vmatprep.subr.bf16.mxu0 0
        %1266 = vmatpush1.bf16.msra.mxu0 0
        %1267 = vmatprep.subr.bf16.mxu0 0
        %1268 = vmatpush1.bf16.msra.mxu0 0
        %1269 = vmatprep.subr.bf16.mxu0 0
        %1270 = vmatpush1.bf16.msra.mxu0 0
        %1271 = vmatprep.subr.bf16.mxu0 0
        %1272 = vmatpush1.bf16.msra.mxu0 0
        %1273 = vmatprep.subr.bf16.mxu0 0
        %1274 = vmatpush1.bf16.msra.mxu0 0
        %1275 = vmatprep.subr.bf16.mxu0 0
        %1276 = vmatpush1.bf16.msra.mxu0 0
        %1277 = vmatprep.subr.bf16.mxu0 0
        %1278 = vmatpush1.bf16.msra.mxu0 0
        %1279 = vmatprep.subr.bf16.mxu0 0
        %1280 = vmatpush1.bf16.msra.mxu0 0
        %1281 = vmatprep.subr.bf16.mxu0 0
        %1282 = vmatpush1.bf16.msra.mxu0 0
        %1283 = vmatprep.subr.bf16.mxu0 0
        %1284 = vmatpush1.bf16.msra.mxu0 0
        %1285 = vmatprep.subr.bf16.mxu0 0
        %1286 = vmatpush1.bf16.msra.mxu0 0
        %1287 = vmatprep.mubr.bf16.mxu0 0
        %1288 = vmatmul.mubr.bf16.gmra.mrb[0].mxu0 %v1253
        %v1289 = vpop.f32.mrb[0].mxu0
        %v1290 = vadd.f32 0.0, %v1289
        %v1291 = vpop.f32.mrb[0].mxu0
        %v1292 = vpop.f32.mrb[0].mxu0
        %v1293 = vadd.f32 0.0, %v1292
        %v1294 = vpop.f32.mrb[0].mxu0
        %1295 = vdwg.mxu0
        %1297 = vrot.lane.b32.xlu0 %v859, 96
        %v1298 = vpop.permute.xlu0 %1297
        %v1301 = vsel %vm955, %v1247, 0
        %1303 = vmatprep.subr.bf16.mxu0 0
        %1304 = vmatpush1.bf16.msra.mxu0 %v1298
        %1305 = vmatprep.subr.bf16.mxu0 0
        %1306 = vmatpush1.bf16.msra.mxu0 0
        %1307 = vmatprep.subr.bf16.mxu0 0
        %1308 = vmatpush1.bf16.msra.mxu0 0
        %1309 = vmatprep.subr.bf16.mxu0 0
        %1310 = vmatpush1.bf16.msra.mxu0 0
        %1311 = vmatprep.subr.bf16.mxu0 0
        %1312 = vmatpush1.bf16.msra.mxu0 0
        %1313 = vmatprep.subr.bf16.mxu0 0
        %1314 = vmatpush1.bf16.msra.mxu0 0
        %1315 = vmatprep.subr.bf16.mxu0 0
        %1316 = vmatpush1.bf16.msra.mxu0 0
        %1317 = vmatprep.subr.bf16.mxu0 0
        %1318 = vmatpush1.bf16.msra.mxu0 0
        %1319 = vmatprep.subr.bf16.mxu0 0
        %1320 = vmatpush1.bf16.msra.mxu0 0
        %1321 = vmatprep.subr.bf16.mxu0 0
        %1322 = vmatpush1.bf16.msra.mxu0 0
        %1323 = vmatprep.subr.bf16.mxu0 0
        %1324 = vmatpush1.bf16.msra.mxu0 0
        %1325 = vmatprep.subr.bf16.mxu0 0
        %1326 = vmatpush1.bf16.msra.mxu0 0
        %1327 = vmatprep.subr.bf16.mxu0 0
        %1328 = vmatpush1.bf16.msra.mxu0 0
        %1329 = vmatprep.subr.bf16.mxu0 0
        %1330 = vmatpush1.bf16.msra.mxu0 0
        %1331 = vmatprep.subr.bf16.mxu0 0
        %1332 = vmatpush1.bf16.msra.mxu0 0
        %1333 = vmatprep.subr.bf16.mxu0 0
        %1334 = vmatpush1.bf16.msra.mxu0 0
        %1335 = vmatprep.mubr.bf16.mxu0 0
        %1336 = vmatmul.mubr.bf16.gmra.mrb[0].mxu0 %v1301
        %v1337 = vpop.f32.mrb[0].mxu0
        %v1338 = vadd.f32 0.0, %v1337
        %v1339 = vpop.f32.mrb[0].mxu0
        %v1340 = vpop.f32.mrb[0].mxu0
        %v1341 = vadd.f32 0.0, %v1340
        %v1342 = vpop.f32.mrb[0].mxu0
        %1343 = vdwg.mxu0
        %v1344 = vpack.c.bf16 %v1293, %v1290
        %v1345 = vpack.c.bf16 %v1341, %v1338
        %v1346 = vld [vmem:[#allocation8 + $0x10] sm:$0xf]
        %v1347 = vld [vmem:[#allocation8 + $0x14] sm:$0xf]
        %v1348 = vld [vmem:[#allocation8 + $0x18] sm:$0xf]
        %v1349 = vld [vmem:[#allocation8 + $0x1c] sm:$0xf]
        %v1354 = vunpack.c.l.b16 %v1346
        %v1355 = vunpack.c.l.b16 %v1347
        %v1356 = vunpack.c.l.b16 %v1348
        %v1357 = vunpack.c.l.b16 %v1349
        %v1358 = vpack.c.b16 %v1355, %v1354
        %v1359 = vpack.c.b16 %v1357, %v1356
        %v1363 = vsel %vm860, %v1344, 0
        %v1366 = vsel %vm860, %v1345, 0
        %1368 = vmatprep.subr.bf16.mxu0 0
        %1369 = vmatpush1.bf16.msra.mxu0 %v1358
        %1370 = vmatprep.subr.bf16.mxu0 0
        %1371 = vmatpush1.bf16.msra.mxu0 %v1359
        %1372 = vmatprep.subr.bf16.mxu0 0
        %1373 = vmatpush1.bf16.msra.mxu0 0
        %1374 = vmatprep.subr.bf16.mxu0 0
        %1375 = vmatpush1.bf16.msra.mxu0 0
        %1376 = vmatprep.subr.bf16.mxu0 0
        %1377 = vmatpush1.bf16.msra.mxu0 0
        %1378 = vmatprep.subr.bf16.mxu0 0
        %1379 = vmatpush1.bf16.msra.mxu0 0
        %1380 = vmatprep.subr.bf16.mxu0 0
        %1381 = vmatpush1.bf16.msra.mxu0 0
        %1382 = vmatprep.subr.bf16.mxu0 0
        %1383 = vmatpush1.bf16.msra.mxu0 0
        %1384 = vmatprep.subr.bf16.mxu0 0
        %1385 = vmatpush1.bf16.msra.mxu0 0
        %1386 = vmatprep.subr.bf16.mxu0 0
        %1387 = vmatpush1.bf16.msra.mxu0 0
        %1388 = vmatprep.subr.bf16.mxu0 0
        %1389 = vmatpush1.bf16.msra.mxu0 0
        %1390 = vmatprep.subr.bf16.mxu0 0
        %1391 = vmatpush1.bf16.msra.mxu0 0
        %1392 = vmatprep.subr.bf16.mxu0 0
        %1393 = vmatpush1.bf16.msra.mxu0 0
        %1394 = vmatprep.subr.bf16.mxu0 0
        %1395 = vmatpush1.bf16.msra.mxu0 0
        %1396 = vmatprep.subr.bf16.mxu0 0
        %1397 = vmatpush1.bf16.msra.mxu0 0
        %1398 = vmatprep.subr.bf16.mxu0 0
        %1399 = vmatpush1.bf16.msra.mxu0 0
        %1400 = vmatprep.mubr.bf16.mxu0 0
        %1401 = vmatmul.mubr.bf16.gmra.mrb[0].mxu0 %v1363
        %v1402 = vpop.f32.mrb[0].mxu0
        %v1403 = vadd.f32 0.0, %v1402
        %v1404 = vpop.f32.mrb[0].mxu0
        %v1405 = vpop.f32.mrb[0].mxu0
        %v1406 = vadd.f32 0.0, %v1405
        %v1407 = vpop.f32.mrb[0].mxu0
        %1408 = vmatprep.mubr.bf16.mxu0 0
        %1409 = vmatmul.mubr.bf16.gmra.mrb[0].mxu0 %v1366
        %v1410 = vpop.f32.mrb[0].mxu0
        %v1411 = vadd.f32 0.0, %v1410
        %v1412 = vpop.f32.mrb[0].mxu0
        %v1413 = vpop.f32.mrb[0].mxu0
        %v1414 = vadd.f32 0.0, %v1413
        %v1415 = vpop.f32.mrb[0].mxu0
        %1416 = vdwg.mxu0
        %v1421 = vunpack.c.l.b16 %v1092
        %v1422 = vunpack.c.l.b16 %v1093
        %v1423 = vunpack.c.l.b16 %v1094
        %v1424 = vunpack.c.l.b16 %v1095
        %v1425 = vpack.c.b16 %v1422, %v1421
        %v1426 = vpack.c.b16 %v1424, %v1423
        %v1430 = vsel %vm860, %v1090, 0
        %v1433 = vsel %vm860, %v1091, 0
        %1435 = vmatprep.subr.bf16.mxu0 0
        %1436 = vmatpush1.bf16.msra.mxu0 %v1425
        %1437 = vmatprep.subr.bf16.mxu0 0
        %1438 = vmatpush1.bf16.msra.mxu0 %v1426
        %1439 = vmatprep.subr.bf16.mxu0 0
        %1440 = vmatpush1.bf16.msra.mxu0 0
        %1441 = vmatprep.subr.bf16.mxu0 0
        %1442 = vmatpush1.bf16.msra.mxu0 0
        %1443 = vmatprep.subr.bf16.mxu0 0
        %1444 = vmatpush1.bf16.msra.mxu0 0
        %1445 = vmatprep.subr.bf16.mxu0 0
        %1446 = vmatpush1.bf16.msra.mxu0 0
        %1447 = vmatprep.subr.bf16.mxu0 0
        %1448 = vmatpush1.bf16.msra.mxu0 0
        %1449 = vmatprep.subr.bf16.mxu0 0
        %1450 = vmatpush1.bf16.msra.mxu0 0
        %1451 = vmatprep.subr.bf16.mxu0 0
        %1452 = vmatpush1.bf16.msra.mxu0 0
        %1453 = vmatprep.subr.bf16.mxu0 0
        %1454 = vmatpush1.bf16.msra.mxu0 0
        %1455 = vmatprep.subr.bf16.mxu0 0
        %1456 = vmatpush1.bf16.msra.mxu0 0
        %1457 = vmatprep.subr.bf16.mxu0 0
        %1458 = vmatpush1.bf16.msra.mxu0 0
        %1459 = vmatprep.subr.bf16.mxu0 0
        %1460 = vmatpush1.bf16.msra.mxu0 0
        %1461 = vmatprep.subr.bf16.mxu0 0
        %1462 = vmatpush1.bf16.msra.mxu0 0
        %1463 = vmatprep.subr.bf16.mxu0 0
        %1464 = vmatpush1.bf16.msra.mxu0 0
        %1465 = vmatprep.subr.bf16.mxu0 0
        %1466 = vmatpush1.bf16.msra.mxu0 0
        %1467 = vmatprep.mubr.bf16.mxu0 0
        %1468 = vmatmul.mubr.bf16.gmra.mrb[0].mxu0 %v1430
        %v1469 = vpop.f32.mrb[0].mxu0
        %v1470 = vadd.f32 %v1403, %v1469
        %v1471 = vpop.f32.mrb[0].mxu0
        %v1472 = vpop.f32.mrb[0].mxu0
        %v1473 = vadd.f32 %v1406, %v1472
        %v1474 = vpop.f32.mrb[0].mxu0
        %1475 = vmatprep.mubr.bf16.mxu0 0
        %1476 = vmatmul.mubr.bf16.gmra.mrb[0].mxu0 %v1433
        %v1477 = vpop.f32.mrb[0].mxu0
        %v1478 = vadd.f32 %v1411, %v1477
        %v1479 = vpop.f32.mrb[0].mxu0
        %v1480 = vpop.f32.mrb[0].mxu0
        %v1481 = vadd.f32 %v1414, %v1480
        %v1482 = vpop.f32.mrb[0].mxu0
        %1483 = vdwg.mxu0
        %1484 = vrot.lane.b32.xlu0 %v854, 64
        %v1485 = vpop.permute.xlu0 %1484
        %1486 = vrot.lane.b32.xlu0 %v856, 64
        %v1487 = vpop.permute.xlu0 %1486
        %v1489 = vsel %vm860, %v1485, 0
        %v1492 = vsel %vm860, %v1487, 0
        %1494 = vmatprep.subr.bf16.mxu0 0
        %1495 = vmatpush1.bf16.xpose.msra.mxu0 %v1492
        %1496 = vmatprep.subr.bf16.mxu0 0
        %1497 = vmatpush1.bf16.xpose.msra.mxu0 0
        %1498 = vmatprep.subr.bf16.mxu0 0
        %1499 = vmatpush1.bf16.xpose.msra.mxu0 0
        %1500 = vmatprep.subr.bf16.mxu0 0
        %1501 = vmatpush1.bf16.xpose.msra.mxu0 0
        %1502 = vmatprep.subr.bf16.mxu0 0
        %1503 = vmatpush1.bf16.xpose.msra.mxu0 0
        %1504 = vmatprep.subr.bf16.mxu0 0
        %1505 = vmatpush1.bf16.xpose.msra.mxu0 0
        %1506 = vmatprep.subr.bf16.mxu0 0
        %1507 = vmatpush1.bf16.xpose.msra.mxu0 0
        %1508 = vmatprep.subr.bf16.mxu0 0
        %1509 = vmatpush1.bf16.xpose.msra.mxu0 0
        %1510 = vmatprep.subr.bf16.mxu0 0
        %1511 = vmatpush1.bf16.xpose.msra.mxu0 0
        %1512 = vmatprep.subr.bf16.mxu0 0
        %1513 = vmatpush1.bf16.xpose.msra.mxu0 0
        %1514 = vmatprep.subr.bf16.mxu0 0
        %1515 = vmatpush1.bf16.xpose.msra.mxu0 0
        %1516 = vmatprep.subr.bf16.mxu0 0
        %1517 = vmatpush1.bf16.xpose.msra.mxu0 0
        %1518 = vmatprep.subr.bf16.mxu0 0
        %1519 = vmatpush1.bf16.xpose.msra.mxu0 0
        %1520 = vmatprep.subr.bf16.mxu0 0
        %1521 = vmatpush1.bf16.xpose.msra.mxu0 0
        %1522 = vmatprep.subr.bf16.mxu0 0
        %1523 = vmatpush1.bf16.xpose.msra.mxu0 0
        %1524 = vmatprep.subr.bf16.mxu0 0
        %1525 = vmatpush1.bf16.xpose.msra.mxu0 0
        %1526 = vmatprep.mubr.bf16.mxu0 0
        %1527 = vmatmul.mubr.bf16.gmra.mrb[0].mxu0 %v1489
        %v1528 = vpop.f32.mrb[0].mxu0
        %v1529 = vadd.f32 %v569, %v1528
        %v1530 = vpop.f32.mrb[0].mxu0
        %v1531 = vpop.f32.mrb[0].mxu0
        %v1532 = vadd.f32 %v570, %v1531
        %v1533 = vpop.f32.mrb[0].mxu0
        %1534 = vdwg.mxu0
        %1535 = vrot.lane.b32.xlu0 %v855, 64
        %v1536 = vpop.permute.xlu0 %1535
        %1537 = vrot.lane.b32.xlu0 %v857, 64
        %v1538 = vpop.permute.xlu0 %1537
        %v1540 = vsel %vm860, %v1536, 0
        %v1543 = vsel %vm860, %v1538, 0
        %1545 = vmatprep.subr.bf16.mxu0 0
        %1546 = vmatpush1.bf16.xpose.msra.mxu0 %v1543
        %1547 = vmatprep.subr.bf16.mxu0 0
        %1548 = vmatpush1.bf16.xpose.msra.mxu0 0
        %1549 = vmatprep.subr.bf16.mxu0 0
        %1550 = vmatpush1.bf16.xpose.msra.mxu0 0
        %1551 = vmatprep.subr.bf16.mxu0 0
        %1552 = vmatpush1.bf16.xpose.msra.mxu0 0
        %1553 = vmatprep.subr.bf16.mxu0 0
        %1554 = vmatpush1.bf16.xpose.msra.mxu0 0
        %1555 = vmatprep.subr.bf16.mxu0 0
        %1556 = vmatpush1.bf16.xpose.msra.mxu0 0
        %1557 = vmatprep.subr.bf16.mxu0 0
        %1558 = vmatpush1.bf16.xpose.msra.mxu0 0
        %1559 = vmatprep.subr.bf16.mxu0 0
        %1560 = vmatpush1.bf16.xpose.msra.mxu0 0
        %1561 = vmatprep.subr.bf16.mxu0 0
        %1562 = vmatpush1.bf16.xpose.msra.mxu0 0
        %1563 = vmatprep.subr.bf16.mxu0 0
        %1564 = vmatpush1.bf16.xpose.msra.mxu0 0
        %1565 = vmatprep.subr.bf16.mxu0 0
        %1566 = vmatpush1.bf16.xpose.msra.mxu0 0
        %1567 = vmatprep.subr.bf16.mxu0 0
        %1568 = vmatpush1.bf16.xpose.msra.mxu0 0
        %1569 = vmatprep.subr.bf16.mxu0 0
        %1570 = vmatpush1.bf16.xpose.msra.mxu0 0
        %1571 = vmatprep.subr.bf16.mxu0 0
        %1572 = vmatpush1.bf16.xpose.msra.mxu0 0
        %1573 = vmatprep.subr.bf16.mxu0 0
        %1574 = vmatpush1.bf16.xpose.msra.mxu0 0
        %1575 = vmatprep.subr.bf16.mxu0 0
        %1576 = vmatpush1.bf16.xpose.msra.mxu0 0
        %1577 = vmatprep.mubr.bf16.mxu0 0
        %1578 = vmatmul.mubr.bf16.gmra.mrb[0].mxu0 %v1540
        %v1579 = vpop.f32.mrb[0].mxu0
        %v1580 = vadd.f32 %v569, %v1579
        %v1581 = vpop.f32.mrb[0].mxu0
        %v1582 = vpop.f32.mrb[0].mxu0
        %v1583 = vadd.f32 %v570, %v1582
        %v1584 = vpop.f32.mrb[0].mxu0
        %1585 = vdwg.mxu0
        %v1586 = vsel %vm955, %v1529, -inf
        %1587 = vmax.xlane.f32.xlu0 %v1586
        %v1588 = vpop.xlane.xlu0 %1587
        %v1589 = vsel %vm955, %v1532, -inf
        %1590 = vmax.xlane.f32.xlu0 %v1589
        %v1591 = vpop.xlane.xlu0 %1590
        %v1592 = vsel %vm955, %v1580, -inf
        %1593 = vmax.xlane.f32.xlu0 %v1592
        %v1594 = vpop.xlane.xlu0 %1593
        %v1595 = vsel %vm955, %v1583, -inf
        %1596 = vmax.xlane.f32.xlu0 %v1595
        %v1597 = vpop.xlane.xlu0 %1596
        %v1598 = vsub.f32 %v1529, %v1588
        %v1599 = vsub.f32 %v1532, %v1591
        %v1600 = vsub.f32 %v1580, %v1594
        %v1601 = vsub.f32 %v1583, %v1597
        %v1602 = vmul.f32 %v1598, 1.442695
        %v1603 = vpow.pop %v1602
        %v1604 = vmul.f32 %v1599, 1.442695
        %v1605 = vpow.pop %v1604
        %v1606 = vmul.f32 %v1600, 1.442695
        %v1607 = vpow.pop %v1606
        %v1608 = vmul.f32 %v1601, 1.442695
        %v1609 = vpow.pop %v1608
        %v1610 = vsel %vm955, %v1603, 0.0
        %1611 = vadd.xlane.f32.xlu0 %v1610
        %v1612 = vpop.xlane.xlu0 %1611
        %v1613 = vsel %vm955, %v1605, 0.0
        %1614 = vadd.xlane.f32.xlu0 %v1613
        %v1615 = vpop.xlane.xlu0 %1614
        %v1616 = vsel %vm955, %v1607, 0.0
        %1617 = vadd.xlane.f32.xlu0 %v1616
        %v1618 = vpop.xlane.xlu0 %1617
        %v1619 = vsel %vm955, %v1609, 0.0
        %1620 = vadd.xlane.f32.xlu0 %v1619
        %v1621 = vpop.xlane.xlu0 %1620
        %v1622 = vrcp.pop %v1612
        %v1623 = vrcp.pop %v1615
        %v1624 = vrcp.pop %v1618
        %v1625 = vrcp.pop %v1621
        %v1626 = vmul.f32 %v1603, %v1622
        %v1627 = vmul.f32 %v1605, %v1623
        %v1628 = vmul.f32 %v1607, %v1624
        %v1629 = vmul.f32 %v1609, %v1625
        %v1630 = vpack.c.bf16 %v1627, %v1626
        %v1631 = vpack.c.bf16 %v1629, %v1628
        %1632 = vrot.lane.b32.xlu0 %v858, 64
        %v1633 = vpop.permute.xlu0 %1632
        %v1636 = vsel %vm955, %v1630, 0
        %1638 = vmatprep.subr.bf16.mxu0 0
        %1639 = vmatpush1.bf16.msra.mxu0 %v1633
        %1640 = vmatprep.subr.bf16.mxu0 0
        %1641 = vmatpush1.bf16.msra.mxu0 0
        %1642 = vmatprep.subr.bf16.mxu0 0
        %1643 = vmatpush1.bf16.msra.mxu0 0
        %1644 = vmatprep.subr.bf16.mxu0 0
        %1645 = vmatpush1.bf16.msra.mxu0 0
        %1646 = vmatprep.subr.bf16.mxu0 0
        %1647 = vmatpush1.bf16.msra.mxu0 0
        %1648 = vmatprep.subr.bf16.mxu0 0
        %1649 = vmatpush1.bf16.msra.mxu0 0
        %1650 = vmatprep.subr.bf16.mxu0 0
        %1651 = vmatpush1.bf16.msra.mxu0 0
        %1652 = vmatprep.subr.bf16.mxu0 0
        %1653 = vmatpush1.bf16.msra.mxu0 0
        %1654 = vmatprep.subr.bf16.mxu0 0
        %1655 = vmatpush1.bf16.msra.mxu0 0
        %1656 = vmatprep.subr.bf16.mxu0 0
        %1657 = vmatpush1.bf16.msra.mxu0 0
        %1658 = vmatprep.subr.bf16.mxu0 0
        %1659 = vmatpush1.bf16.msra.mxu0 0
        %1660 = vmatprep.subr.bf16.mxu0 0
        %1661 = vmatpush1.bf16.msra.mxu0 0
        %1662 = vmatprep.subr.bf16.mxu0 0
        %1663 = vmatpush1.bf16.msra.mxu0 0
        %1664 = vmatprep.subr.bf16.mxu0 0
        %1665 = vmatpush1.bf16.msra.mxu0 0
        %1666 = vmatprep.subr.bf16.mxu0 0
        %1667 = vmatpush1.bf16.msra.mxu0 0
        %1668 = vmatprep.subr.bf16.mxu0 0
        %1669 = vmatpush1.bf16.msra.mxu0 0
        %1670 = vmatprep.mubr.bf16.mxu0 0
        %1671 = vmatmul.mubr.bf16.gmra.mrb[0].mxu0 %v1636
        %v1672 = vpop.f32.mrb[0].mxu0
        %v1673 = vadd.f32 0.0, %v1672
        %v1674 = vpop.f32.mrb[0].mxu0
        %v1675 = vpop.f32.mrb[0].mxu0
        %v1676 = vadd.f32 0.0, %v1675
        %v1677 = vpop.f32.mrb[0].mxu0
        %1678 = vdwg.mxu0
        %1679 = vrot.lane.b32.xlu0 %v859, 64
        %v1680 = vpop.permute.xlu0 %1679
        %v1683 = vsel %vm955, %v1631, 0
        %1685 = vmatprep.subr.bf16.mxu0 0
        %1686 = vmatpush1.bf16.msra.mxu0 %v1680
        %1687 = vmatprep.subr.bf16.mxu0 0
        %1688 = vmatpush1.bf16.msra.mxu0 0
        %1689 = vmatprep.subr.bf16.mxu0 0
        %1690 = vmatpush1.bf16.msra.mxu0 0
        %1691 = vmatprep.subr.bf16.mxu0 0
        %1692 = vmatpush1.bf16.msra.mxu0 0
        %1693 = vmatprep.subr.bf16.mxu0 0
        %1694 = vmatpush1.bf16.msra.mxu0 0
        %1695 = vmatprep.subr.bf16.mxu0 0
        %1696 = vmatpush1.bf16.msra.mxu0 0
        %1697 = vmatprep.subr.bf16.mxu0 0
        %1698 = vmatpush1.bf16.msra.mxu0 0
        %1699 = vmatprep.subr.bf16.mxu0 0
        %1700 = vmatpush1.bf16.msra.mxu0 0
        %1701 = vmatprep.subr.bf16.mxu0 0
        %1702 = vmatpush1.bf16.msra.mxu0 0
        %1703 = vmatprep.subr.bf16.mxu0 0
        %1704 = vmatpush1.bf16.msra.mxu0 0
        %1705 = vmatprep.subr.bf16.mxu0 0
        %1706 = vmatpush1.bf16.msra.mxu0 0
        %1707 = vmatprep.subr.bf16.mxu0 0
        %1708 = vmatpush1.bf16.msra.mxu0 0
        %1709 = vmatprep.subr.bf16.mxu0 0
        %1710 = vmatpush1.bf16.msra.mxu0 0
        %1711 = vmatprep.subr.bf16.mxu0 0
        %1712 = vmatpush1.bf16.msra.mxu0 0
        %1713 = vmatprep.subr.bf16.mxu0 0
        %1714 = vmatpush1.bf16.msra.mxu0 0
        %1715 = vmatprep.subr.bf16.mxu0 0
        %1716 = vmatpush1.bf16.msra.mxu0 0
        %1717 = vmatprep.mubr.bf16.mxu0 0
        %1718 = vmatmul.mubr.bf16.gmra.mrb[0].mxu0 %v1683
        %v1719 = vpop.f32.mrb[0].mxu0
        %v1720 = vadd.f32 0.0, %v1719
        %v1721 = vpop.f32.mrb[0].mxu0
        %v1722 = vpop.f32.mrb[0].mxu0
        %v1723 = vadd.f32 0.0, %v1722
        %v1724 = vpop.f32.mrb[0].mxu0
        %1725 = vdwg.mxu0
        %v1726 = vpack.c.bf16 %v1676, %v1673
        %v1727 = vpack.c.bf16 %v1723, %v1720
        %v1728 = vld [vmem:[#allocation8 + $0x20] sm:$0xf]
        %v1729 = vld [vmem:[#allocation8 + $0x24] sm:$0xf]
        %v1730 = vld [vmem:[#allocation8 + $0x28] sm:$0xf]
        %v1731 = vld [vmem:[#allocation8 + $0x2c] sm:$0xf]
        %v1736 = vunpack.c.l.b16 %v1728
        %v1737 = vunpack.c.l.b16 %v1729
        %v1738 = vunpack.c.l.b16 %v1730
        %v1739 = vunpack.c.l.b16 %v1731
        %v1740 = vpack.c.b16 %v1737, %v1736
        %v1741 = vpack.c.b16 %v1739, %v1738
        %v1745 = vsel %vm860, %v1726, 0
        %v1748 = vsel %vm860, %v1727, 0
        %1750 = vmatprep.subr.bf16.mxu0 0
        %1751 = vmatpush1.bf16.msra.mxu0 %v1740
        %1752 = vmatprep.subr.bf16.mxu0 0
        %1753 = vmatpush1.bf16.msra.mxu0 %v1741
        %1754 = vmatprep.subr.bf16.mxu0 0
        %1755 = vmatpush1.bf16.msra.mxu0 0
        %1756 = vmatprep.subr.bf16.mxu0 0
        %1757 = vmatpush1.bf16.msra.mxu0 0
        %1758 = vmatprep.subr.bf16.mxu0 0
        %1759 = vmatpush1.bf16.msra.mxu0 0
        %1760 = vmatprep.subr.bf16.mxu0 0
        %1761 = vmatpush1.bf16.msra.mxu0 0
        %1762 = vmatprep.subr.bf16.mxu0 0
        %1763 = vmatpush1.bf16.msra.mxu0 0
        %1764 = vmatprep.subr.bf16.mxu0 0
        %1765 = vmatpush1.bf16.msra.mxu0 0
        %1766 = vmatprep.subr.bf16.mxu0 0
        %1767 = vmatpush1.bf16.msra.mxu0 0
        %1768 = vmatprep.subr.bf16.mxu0 0
        %1769 = vmatpush1.bf16.msra.mxu0 0
        %1770 = vmatprep.subr.bf16.mxu0 0
        %1771 = vmatpush1.bf16.msra.mxu0 0
        %1772 = vmatprep.subr.bf16.mxu0 0
        %1773 = vmatpush1.bf16.msra.mxu0 0
        %1774 = vmatprep.subr.bf16.mxu0 0
        %1775 = vmatpush1.bf16.msra.mxu0 0
        %1776 = vmatprep.subr.bf16.mxu0 0
        %1777 = vmatpush1.bf16.msra.mxu0 0
        %1778 = vmatprep.subr.bf16.mxu0 0
        %1779 = vmatpush1.bf16.msra.mxu0 0
        %1780 = vmatprep.subr.bf16.mxu0 0
        %1781 = vmatpush1.bf16.msra.mxu0 0
        %1782 = vmatprep.mubr.bf16.mxu0 0
        %1783 = vmatmul.mubr.bf16.gmra.mrb[0].mxu0 %v1745
        %v1784 = vpop.f32.mrb[0].mxu0
        %v1785 = vadd.f32 0.0, %v1784
        %v1786 = vpop.f32.mrb[0].mxu0
        %v1787 = vpop.f32.mrb[0].mxu0
        %v1788 = vadd.f32 0.0, %v1787
        %v1789 = vpop.f32.mrb[0].mxu0
        %1790 = vmatprep.mubr.bf16.mxu0 0
        %1791 = vmatmul.mubr.bf16.gmra.mrb[0].mxu0 %v1748
        %v1792 = vpop.f32.mrb[0].mxu0
        %v1793 = vadd.f32 0.0, %v1792
        %v1794 = vpop.f32.mrb[0].mxu0
        %v1795 = vpop.f32.mrb[0].mxu0
        %v1796 = vadd.f32 0.0, %v1795
        %v1797 = vpop.f32.mrb[0].mxu0
        %1798 = vdwg.mxu0
        %v1799 = vadd.f32 %v1470, %v1785
        %v1800 = vadd.f32 %v1473, %v1788
        %v1801 = vadd.f32 %v1478, %v1793
        %v1802 = vadd.f32 %v1481, %v1796
        %1803 = vrot.lane.b32.xlu0 %v854, 32
        %v1804 = vpop.permute.xlu0 %1803
        %1805 = vrot.lane.b32.xlu0 %v856, 32
        %v1806 = vpop.permute.xlu0 %1805
        %v1808 = vsel %vm860, %v1804, 0
        %v1811 = vsel %vm860, %v1806, 0
        %1813 = vmatprep.subr.bf16.mxu0 0
        %1814 = vmatpush1.bf16.xpose.msra.mxu0 %v1811
        %1815 = vmatprep.subr.bf16.mxu0 0
        %1816 = vmatpush1.bf16.xpose.msra.mxu0 0
        %1817 = vmatprep.subr.bf16.mxu0 0
        %1818 = vmatpush1.bf16.xpose.msra.mxu0 0
        %1819 = vmatprep.subr.bf16.mxu0 0
        %1820 = vmatpush1.bf16.xpose.msra.mxu0 0
        %1821 = vmatprep.subr.bf16.mxu0 0
        %1822 = vmatpush1.bf16.xpose.msra.mxu0 0
        %1823 = vmatprep.subr.bf16.mxu0 0
        %1824 = vmatpush1.bf16.xpose.msra.mxu0 0
        %1825 = vmatprep.subr.bf16.mxu0 0
        %1826 = vmatpush1.bf16.xpose.msra.mxu0 0
        %1827 = vmatprep.subr.bf16.mxu0 0
        %1828 = vmatpush1.bf16.xpose.msra.mxu0 0
        %1829 = vmatprep.subr.bf16.mxu0 0
        %1830 = vmatpush1.bf16.xpose.msra.mxu0 0
        %1831 = vmatprep.subr.bf16.mxu0 0
        %1832 = vmatpush1.bf16.xpose.msra.mxu0 0
        %1833 = vmatprep.subr.bf16.mxu0 0
        %1834 = vmatpush1.bf16.xpose.msra.mxu0 0
        %1835 = vmatprep.subr.bf16.mxu0 0
        %1836 = vmatpush1.bf16.xpose.msra.mxu0 0
        %1837 = vmatprep.subr.bf16.mxu0 0
        %1838 = vmatpush1.bf16.xpose.msra.mxu0 0
        %1839 = vmatprep.subr.bf16.mxu0 0
        %1840 = vmatpush1.bf16.xpose.msra.mxu0 0
        %1841 = vmatprep.subr.bf16.mxu0 0
        %1842 = vmatpush1.bf16.xpose.msra.mxu0 0
        %1843 = vmatprep.subr.bf16.mxu0 0
        %1844 = vmatpush1.bf16.xpose.msra.mxu0 0
        %1845 = vmatprep.mubr.bf16.mxu0 0
        %1846 = vmatmul.mubr.bf16.gmra.mrb[0].mxu0 %v1808
        %v1847 = vpop.f32.mrb[0].mxu0
        %v1848 = vadd.f32 %v569, %v1847
        %v1849 = vpop.f32.mrb[0].mxu0
        %v1850 = vpop.f32.mrb[0].mxu0
        %v1851 = vadd.f32 %v570, %v1850
        %v1852 = vpop.f32.mrb[0].mxu0
        %1853 = vdwg.mxu0
        %1854 = vrot.lane.b32.xlu0 %v855, 32
        %v1855 = vpop.permute.xlu0 %1854
        %1856 = vrot.lane.b32.xlu0 %v857, 32
        %v1857 = vpop.permute.xlu0 %1856
        %v1859 = vsel %vm860, %v1855, 0
        %v1862 = vsel %vm860, %v1857, 0
        %1864 = vmatprep.subr.bf16.mxu0 0
        %1865 = vmatpush1.bf16.xpose.msra.mxu0 %v1862
        %1866 = vmatprep.subr.bf16.mxu0 0
        %1867 = vmatpush1.bf16.xpose.msra.mxu0 0
        %1868 = vmatprep.subr.bf16.mxu0 0
        %1869 = vmatpush1.bf16.xpose.msra.mxu0 0
        %1870 = vmatprep.subr.bf16.mxu0 0
        %1871 = vmatpush1.bf16.xpose.msra.mxu0 0
        %1872 = vmatprep.subr.bf16.mxu0 0
        %1873 = vmatpush1.bf16.xpose.msra.mxu0 0
        %1874 = vmatprep.subr.bf16.mxu0 0
        %1875 = vmatpush1.bf16.xpose.msra.mxu0 0
        %1876 = vmatprep.subr.bf16.mxu0 0
        %1877 = vmatpush1.bf16.xpose.msra.mxu0 0
        %1878 = vmatprep.subr.bf16.mxu0 0
        %1879 = vmatpush1.bf16.xpose.msra.mxu0 0
        %1880 = vmatprep.subr.bf16.mxu0 0
        %1881 = vmatpush1.bf16.xpose.msra.mxu0 0
        %1882 = vmatprep.subr.bf16.mxu0 0
        %1883 = vmatpush1.bf16.xpose.msra.mxu0 0
        %1884 = vmatprep.subr.bf16.mxu0 0
        %1885 = vmatpush1.bf16.xpose.msra.mxu0 0
        %1886 = vmatprep.subr.bf16.mxu0 0
        %1887 = vmatpush1.bf16.xpose.msra.mxu0 0
        %1888 = vmatprep.subr.bf16.mxu0 0
        %1889 = vmatpush1.bf16.xpose.msra.mxu0 0
        %1890 = vmatprep.subr.bf16.mxu0 0
        %1891 = vmatpush1.bf16.xpose.msra.mxu0 0
        %1892 = vmatprep.subr.bf16.mxu0 0
        %1893 = vmatpush1.bf16.xpose.msra.mxu0 0
        %1894 = vmatprep.subr.bf16.mxu0 0
        %1895 = vmatpush1.bf16.xpose.msra.mxu0 0
        %1896 = vmatprep.mubr.bf16.mxu0 0
        %1897 = vmatmul.mubr.bf16.gmra.mrb[0].mxu0 %v1859
        %v1898 = vpop.f32.mrb[0].mxu0
        %v1899 = vadd.f32 %v569, %v1898
        %v1900 = vpop.f32.mrb[0].mxu0
        %v1901 = vpop.f32.mrb[0].mxu0
        %v1902 = vadd.f32 %v570, %v1901
        %v1903 = vpop.f32.mrb[0].mxu0
        %1904 = vdwg.mxu0
        %v1905 = vsel %vm955, %v1848, -inf
        %1906 = vmax.xlane.f32.xlu0 %v1905
        %v1907 = vpop.xlane.xlu0 %1906
        %v1908 = vsel %vm955, %v1851, -inf
        %1909 = vmax.xlane.f32.xlu0 %v1908
        %v1910 = vpop.xlane.xlu0 %1909
        %v1911 = vsel %vm955, %v1899, -inf
        %1912 = vmax.xlane.f32.xlu0 %v1911
        %v1913 = vpop.xlane.xlu0 %1912
        %v1914 = vsel %vm955, %v1902, -inf
        %1915 = vmax.xlane.f32.xlu0 %v1914
        %v1916 = vpop.xlane.xlu0 %1915
        %v1917 = vsub.f32 %v1848, %v1907
        %v1918 = vsub.f32 %v1851, %v1910
        %v1919 = vsub.f32 %v1899, %v1913
        %v1920 = vsub.f32 %v1902, %v1916
        %v1921 = vmul.f32 %v1917, 1.442695
        %v1922 = vpow.pop %v1921
        %v1923 = vmul.f32 %v1918, 1.442695
        %v1924 = vpow.pop %v1923
        %v1925 = vmul.f32 %v1919, 1.442695
        %v1926 = vpow.pop %v1925
        %v1927 = vmul.f32 %v1920, 1.442695
        %v1928 = vpow.pop %v1927
        %v1929 = vsel %vm955, %v1922, 0.0
        %1930 = vadd.xlane.f32.xlu0 %v1929
        %v1931 = vpop.xlane.xlu0 %1930
        %v1932 = vsel %vm955, %v1924, 0.0
        %1933 = vadd.xlane.f32.xlu0 %v1932
        %v1934 = vpop.xlane.xlu0 %1933
        %v1935 = vsel %vm955, %v1926, 0.0
        %1936 = vadd.xlane.f32.xlu0 %v1935
        %v1937 = vpop.xlane.xlu0 %1936
        %v1938 = vsel %vm955, %v1928, 0.0
        %1939 = vadd.xlane.f32.xlu0 %v1938
        %v1940 = vpop.xlane.xlu0 %1939
        %v1941 = vrcp.pop %v1931
        %v1942 = vrcp.pop %v1934
        %v1943 = vrcp.pop %v1937
        %v1944 = vrcp.pop %v1940
        %v1945 = vmul.f32 %v1922, %v1941
        %v1946 = vmul.f32 %v1924, %v1942
        %v1947 = vmul.f32 %v1926, %v1943
        %v1948 = vmul.f32 %v1928, %v1944
        %v1949 = vpack.c.bf16 %v1946, %v1945
        %v1950 = vpack.c.bf16 %v1948, %v1947
        %1951 = vrot.lane.b32.xlu0 %v858, 32
        %v1952 = vpop.permute.xlu0 %1951
        %v1955 = vsel %vm955, %v1949, 0
        %1957 = vmatprep.subr.bf16.mxu0 0
        %1958 = vmatpush1.bf16.msra.mxu0 %v1952
        %1959 = vmatprep.subr.bf16.mxu0 0
        %1960 = vmatpush1.bf16.msra.mxu0 0
        %1961 = vmatprep.subr.bf16.mxu0 0
        %1962 = vmatpush1.bf16.msra.mxu0 0
        %1963 = vmatprep.subr.bf16.mxu0 0
        %1964 = vmatpush1.bf16.msra.mxu0 0
        %1965 = vmatprep.subr.bf16.mxu0 0
        %1966 = vmatpush1.bf16.msra.mxu0 0
        %1967 = vmatprep.subr.bf16.mxu0 0
        %1968 = vmatpush1.bf16.msra.mxu0 0
        %1969 = vmatprep.subr.bf16.mxu0 0
        %1970 = vmatpush1.bf16.msra.mxu0 0
        %1971 = vmatprep.subr.bf16.mxu0 0
        %1972 = vmatpush1.bf16.msra.mxu0 0
        %1973 = vmatprep.subr.bf16.mxu0 0
        %1974 = vmatpush1.bf16.msra.mxu0 0
        %1975 = vmatprep.subr.bf16.mxu0 0
        %1976 = vmatpush1.bf16.msra.mxu0 0
        %1977 = vmatprep.subr.bf16.mxu0 0
        %1978 = vmatpush1.bf16.msra.mxu0 0
        %1979 = vmatprep.subr.bf16.mxu0 0
        %1980 = vmatpush1.bf16.msra.mxu0 0
        %1981 = vmatprep.subr.bf16.mxu0 0
        %1982 = vmatpush1.bf16.msra.mxu0 0
        %1983 = vmatprep.subr.bf16.mxu0 0
        %1984 = vmatpush1.bf16.msra.mxu0 0
        %1985 = vmatprep.subr.bf16.mxu0 0
        %1986 = vmatpush1.bf16.msra.mxu0 0
        %1987 = vmatprep.subr.bf16.mxu0 0
        %1988 = vmatpush1.bf16.msra.mxu0 0
        %1989 = vmatprep.mubr.bf16.mxu0 0
        %1990 = vmatmul.mubr.bf16.gmra.mrb[0].mxu0 %v1955
        %v1991 = vpop.f32.mrb[0].mxu0
        %v1992 = vadd.f32 0.0, %v1991
        %v1993 = vpop.f32.mrb[0].mxu0
        %v1994 = vpop.f32.mrb[0].mxu0
        %v1995 = vadd.f32 0.0, %v1994
        %v1996 = vpop.f32.mrb[0].mxu0
        %1997 = vdwg.mxu0
        %1998 = vrot.lane.b32.xlu0 %v859, 32
        %v1999 = vpop.permute.xlu0 %1998
        %v2002 = vsel %vm955, %v1950, 0
        %2004 = vmatprep.subr.bf16.mxu0 0
        %2005 = vmatpush1.bf16.msra.mxu0 %v1999
        %2006 = vmatprep.subr.bf16.mxu0 0
        %2007 = vmatpush1.bf16.msra.mxu0 0
        %2008 = vmatprep.subr.bf16.mxu0 0
        %2009 = vmatpush1.bf16.msra.mxu0 0
        %2010 = vmatprep.subr.bf16.mxu0 0
        %2011 = vmatpush1.bf16.msra.mxu0 0
        %2012 = vmatprep.subr.bf16.mxu0 0
        %2013 = vmatpush1.bf16.msra.mxu0 0
        %2014 = vmatprep.subr.bf16.mxu0 0
        %2015 = vmatpush1.bf16.msra.mxu0 0
        %2016 = vmatprep.subr.bf16.mxu0 0
        %2017 = vmatpush1.bf16.msra.mxu0 0
        %2018 = vmatprep.subr.bf16.mxu0 0
        %2019 = vmatpush1.bf16.msra.mxu0 0
        %2020 = vmatprep.subr.bf16.mxu0 0
        %2021 = vmatpush1.bf16.msra.mxu0 0
        %2022 = vmatprep.subr.bf16.mxu0 0
        %2023 = vmatpush1.bf16.msra.mxu0 0
        %2024 = vmatprep.subr.bf16.mxu0 0
        %2025 = vmatpush1.bf16.msra.mxu0 0
        %2026 = vmatprep.subr.bf16.mxu0 0
        %2027 = vmatpush1.bf16.msra.mxu0 0
        %2028 = vmatprep.subr.bf16.mxu0 0
        %2029 = vmatpush1.bf16.msra.mxu0 0
        %2030 = vmatprep.subr.bf16.mxu0 0
        %2031 = vmatpush1.bf16.msra.mxu0 0
        %2032 = vmatprep.subr.bf16.mxu0 0
        %2033 = vmatpush1.bf16.msra.mxu0 0
        %2034 = vmatprep.subr.bf16.mxu0 0
        %2035 = vmatpush1.bf16.msra.mxu0 0
        %2036 = vmatprep.mubr.bf16.mxu0 0
        %2037 = vmatmul.mubr.bf16.gmra.mrb[0].mxu0 %v2002
        %v2038 = vpop.f32.mrb[0].mxu0
        %v2039 = vadd.f32 0.0, %v2038
        %v2040 = vpop.f32.mrb[0].mxu0
        %v2041 = vpop.f32.mrb[0].mxu0
        %v2042 = vadd.f32 0.0, %v2041
        %v2043 = vpop.f32.mrb[0].mxu0
        %2044 = vdwg.mxu0
        %v2045 = vpack.c.bf16 %v1995, %v1992
        %v2046 = vpack.c.bf16 %v2042, %v2039
        %v2047 = vld [vmem:[#allocation8 + $0x30] sm:$0xf]
        %v2048 = vld [vmem:[#allocation8 + $0x34] sm:$0xf]
        %v2049 = vld [vmem:[#allocation8 + $0x38] sm:$0xf]
        %v2050 = vld [vmem:[#allocation8 + $0x3c] sm:$0xf]
        %v2055 = vunpack.c.l.b16 %v2047
        %v2056 = vunpack.c.l.b16 %v2048
        %v2057 = vunpack.c.l.b16 %v2049
        %v2058 = vunpack.c.l.b16 %v2050
        %v2059 = vpack.c.b16 %v2056, %v2055
        %v2060 = vpack.c.b16 %v2058, %v2057
        %v2064 = vsel %vm860, %v2045, 0
        %v2067 = vsel %vm860, %v2046, 0
        %2069 = vmatprep.subr.bf16.mxu0 0
        %2070 = vmatpush1.bf16.msra.mxu0 %v2059
        %2071 = vmatprep.subr.bf16.mxu0 0
        %2072 = vmatpush1.bf16.msra.mxu0 %v2060
        %2073 = vmatprep.subr.bf16.mxu0 0
        %2074 = vmatpush1.bf16.msra.mxu0 0
        %2075 = vmatprep.subr.bf16.mxu0 0
        %2076 = vmatpush1.bf16.msra.mxu0 0
        %2077 = vmatprep.subr.bf16.mxu0 0
        %2078 = vmatpush1.bf16.msra.mxu0 0
        %2079 = vmatprep.subr.bf16.mxu0 0
        %2080 = vmatpush1.bf16.msra.mxu0 0
        %2081 = vmatprep.subr.bf16.mxu0 0
        %2082 = vmatpush1.bf16.msra.mxu0 0
        %2083 = vmatprep.subr.bf16.mxu0 0
        %2084 = vmatpush1.bf16.msra.mxu0 0
        %2085 = vmatprep.subr.bf16.mxu0 0
        %2086 = vmatpush1.bf16.msra.mxu0 0
        %2087 = vmatprep.subr.bf16.mxu0 0
        %2088 = vmatpush1.bf16.msra.mxu0 0
        %2089 = vmatprep.subr.bf16.mxu0 0
        %2090 = vmatpush1.bf16.msra.mxu0 0
        %2091 = vmatprep.subr.bf16.mxu0 0
        %2092 = vmatpush1.bf16.msra.mxu0 0
        %2093 = vmatprep.subr.bf16.mxu0 0
        %2094 = vmatpush1.bf16.msra.mxu0 0
        %2095 = vmatprep.subr.bf16.mxu0 0
        %2096 = vmatpush1.bf16.msra.mxu0 0
        %2097 = vmatprep.subr.bf16.mxu0 0
        %2098 = vmatpush1.bf16.msra.mxu0 0
        %2099 = vmatprep.subr.bf16.mxu0 0
        %2100 = vmatpush1.bf16.msra.mxu0 0
        %2101 = vmatprep.mubr.bf16.mxu0 0
        %2102 = vmatmul.mubr.bf16.gmra.mrb[0].mxu0 %v2064
        %v2103 = vpop.f32.mrb[0].mxu0
        %v2104 = vadd.f32 0.0, %v2103
        %v2105 = vpop.f32.mrb[0].mxu0
        %v2106 = vpop.f32.mrb[0].mxu0
        %v2107 = vadd.f32 0.0, %v2106
        %v2108 = vpop.f32.mrb[0].mxu0
        %2109 = vmatprep.mubr.bf16.mxu0 0
        %2110 = vmatmul.mubr.bf16.gmra.mrb[0].mxu0 %v2067
        %v2111 = vpop.f32.mrb[0].mxu0
        %v2112 = vadd.f32 0.0, %v2111
        %v2113 = vpop.f32.mrb[0].mxu0
        %v2114 = vpop.f32.mrb[0].mxu0
        %v2115 = vadd.f32 0.0, %v2114
        %v2116 = vpop.f32.mrb[0].mxu0
        %2117 = vdwg.mxu0
        %v2118 = vadd.f32 %v1799, %v2104
        %v2119 = vadd.f32 %v1800, %v2107
        %v2120 = vadd.f32 %v1801, %v2112
        %v2121 = vadd.f32 %v1802, %v2115
        %v2122 = vld [vmem:[%s5] sm:$0x1]
        %v2124 = vlaneseq
        %v2125 = vshrl.u32 %v2124, 7
        %v2126 = vsub.s32 0, %v2125
        %v2127 = vrot.slane %v2122, %v2126
        %v2129 = vadd.f32 %v2118, %v2127
        %v2130 = vadd.f32 %v2119, %v2127
        %v2131 = vadd.f32 %v2120, %v2127
        %v2132 = vadd.f32 %v2121, %v2127
        %v2133 = vadd.f32 %v563, %v2129
        %v2134 = vadd.f32 %v564, %v2130
        %v2135 = vadd.f32 %v565, %v2131
        %v2136 = vadd.f32 %v566, %v2132
        %v2137 = vld [vmem:[%s6] sm:$0x1]
        %v2138 = vld [vmem:[%s7] sm:$0x1]
        %2139 = vadd.xlane.f32.xlu0 %v2133
        %v2140 = vpop.xlane.xlu0 %2139
        %2141 = vadd.xlane.f32.xlu0 %v2134
        %v2142 = vpop.xlane.xlu0 %2141
        %2143 = vadd.xlane.f32.xlu0 %v2135
        %v2144 = vpop.xlane.xlu0 %2143
        %2145 = vadd.xlane.f32.xlu0 %v2136
        %v2146 = vpop.xlane.xlu0 %2145
        %v2147 = vrcp.pop 128.0
        %v2148 = vmul.f32 %v2140, %v2147
        %v2149 = vmul.f32 %v2142, %v2147
        %v2150 = vmul.f32 %v2144, %v2147
        %v2151 = vmul.f32 %v2146, %v2147
        %v2152 = vsub.f32 %v2133, %v2148
        %v2153 = vsub.f32 %v2134, %v2149
        %v2154 = vsub.f32 %v2135, %v2150
        %v2155 = vsub.f32 %v2136, %v2151
        %v2156 = vmul.f32 %v2152, %v2152
        %v2157 = vmul.f32 %v2153, %v2153
        %v2158 = vmul.f32 %v2154, %v2154
        %v2159 = vmul.f32 %v2155, %v2155
        %2160 = vadd.xlane.f32.xlu0 %v2156
        %v2161 = vpop.xlane.xlu0 %2160
        %2162 = vadd.xlane.f32.xlu0 %v2157
        %v2163 = vpop.xlane.xlu0 %2162
        %2164 = vadd.xlane.f32.xlu0 %v2158
        %v2165 = vpop.xlane.xlu0 %2164
        %2166 = vadd.xlane.f32.xlu0 %v2159
        %v2167 = vpop.xlane.xlu0 %2166
        %v2168 = vmul.f32 %v2161, %v2147
        %v2169 = vmul.f32 %v2163, %v2147
        %v2170 = vmul.f32 %v2165, %v2147
        %v2171 = vmul.f32 %v2167, %v2147
        %v2172 = vadd.f32 %v2168, 1e-05
        %v2173 = vadd.f32 %v2169, 1e-05
        %v2174 = vadd.f32 %v2170, 1e-05
        %v2175 = vadd.f32 %v2171, 1e-05
        %v2176 = vrsqrt.pop %v2172
        %v2177 = vrsqrt.pop %v2173
        %v2178 = vrsqrt.pop %v2174
        %v2179 = vrsqrt.pop %v2175
        %v2180 = vmul.f32 %v2152, %v2176
        %v2181 = vmul.f32 %v2153, %v2177
        %v2182 = vmul.f32 %v2154, %v2178
        %v2183 = vmul.f32 %v2155, %v2179
        %v2185 = vlaneseq
        %v2186 = vshrl.u32 %v2185, 7
        %v2187 = vsub.s32 0, %v2186
        %v2188 = vrot.slane %v2137, %v2187
        %v2190 = vmul.f32 %v2180, %v2188
        %v2191 = vmul.f32 %v2181, %v2188
        %v2192 = vmul.f32 %v2182, %v2188
        %v2193 = vmul.f32 %v2183, %v2188
        %v2195 = vlaneseq
        %v2196 = vshrl.u32 %v2195, 7
        %v2197 = vsub.s32 0, %v2196
        %v2198 = vrot.slane %v2138, %v2197
        %v2200 = vadd.f32 %v2190, %v2198
        %v2201 = vadd.f32 %v2191, %v2198
        %v2202 = vadd.f32 %v2192, %v2198
        %v2203 = vadd.f32 %v2193, %v2198
        %v2204 = vpack.c.bf16 %v2201, %v2200
        %v2205 = vpack.c.bf16 %v2203, %v2202
        %v2206 = vld [vmem:[#allocation10] sm:$0xff]
        %v2207 = vld [vmem:[#allocation10 + $0x8] sm:$0xff]
        %v2208 = vld [vmem:[#allocation10 + $0x10] sm:$0xff]
        %v2209 = vld [vmem:[#allocation10 + $0x18] sm:$0xff]
        %v2210 = vld [vmem:[#allocation10 + $0x20] sm:$0xff]
        %v2211 = vld [vmem:[#allocation10 + $0x28] sm:$0xff]
        %v2212 = vld [vmem:[#allocation10 + $0x30] sm:$0xff]
        %v2213 = vld [vmem:[#allocation10 + $0x38] sm:$0xff]
        %v2214 = vld [vmem:[#allocation10 + $0x40] sm:$0xff]
        %v2215 = vld [vmem:[#allocation10 + $0x48] sm:$0xff]
        %v2216 = vld [vmem:[#allocation10 + $0x50] sm:$0xff]
        %v2217 = vld [vmem:[#allocation10 + $0x58] sm:$0xff]
        %v2218 = vld [vmem:[#allocation10 + $0x60] sm:$0xff]
        %v2219 = vld [vmem:[#allocation10 + $0x68] sm:$0xff]
        %v2220 = vld [vmem:[#allocation10 + $0x70] sm:$0xff]
        %v2221 = vld [vmem:[#allocation10 + $0x78] sm:$0xff]
        %v2222 = vld [vmem:[%s9] sm:$0x3]
        %v2224 = vlaneseq
        %v2225 = vshrl.u32 %v2224, 7
        %v2226 = vsub.s32 0, %v2225
        %v2227 = vrot.slane %v2222, %v2226
        %v2228 = vlaneseq
        %v2229 = vshrl.u32 %v2228, 7
        %v2230 = vsub.s32 1, %v2229
        %v2231 = vrot.slane %v2222, %v2230
        %v2250 = vunpack.c.l.b16 %v2206
        %v2251 = vunpack.c.h.b16 %v2206
        %v2252 = vunpack.c.l.b16 %v2207
        %v2253 = vunpack.c.h.b16 %v2207
        %v2254 = vunpack.c.l.b16 %v2208
        %v2255 = vunpack.c.h.b16 %v2208
        %v2256 = vunpack.c.l.b16 %v2209
        %v2257 = vunpack.c.h.b16 %v2209
        %v2258 = vunpack.c.l.b16 %v2210
        %v2259 = vunpack.c.h.b16 %v2210
        %v2260 = vunpack.c.l.b16 %v2211
        %v2261 = vunpack.c.h.b16 %v2211
        %v2262 = vunpack.c.l.b16 %v2212
        %v2263 = vunpack.c.h.b16 %v2212
        %v2264 = vunpack.c.l.b16 %v2213
        %v2265 = vunpack.c.h.b16 %v2213
        %v2266 = vunpack.c.l.b16 %v2214
        %v2267 = vunpack.c.h.b16 %v2214
        %v2268 = vunpack.c.l.b16 %v2215
        %v2269 = vunpack.c.h.b16 %v2215
        %v2270 = vunpack.c.l.b16 %v2216
        %v2271 = vunpack.c.h.b16 %v2216
        %v2272 = vunpack.c.l.b16 %v2217
        %v2273 = vunpack.c.h.b16 %v2217
        %v2274 = vunpack.c.l.b16 %v2218
        %v2275 = vunpack.c.h.b16 %v2218
        %v2276 = vunpack.c.l.b16 %v2219
        %v2277 = vunpack.c.h.b16 %v2219
        %v2278 = vunpack.c.l.b16 %v2220
        %v2279 = vunpack.c.h.b16 %v2220
        %v2280 = vunpack.c.l.b16 %v2221
        %v2281 = vunpack.c.h.b16 %v2221
        %v2282 = vpack.c.b16 %v2252, %v2250
        %v2283 = vpack.c.b16 %v2253, %v2251
        %v2284 = vpack.c.b16 %v2256, %v2254
        %v2285 = vpack.c.b16 %v2257, %v2255
        %v2286 = vpack.c.b16 %v2260, %v2258
        %v2287 = vpack.c.b16 %v2261, %v2259
        %v2288 = vpack.c.b16 %v2264, %v2262
        %v2289 = vpack.c.b16 %v2265, %v2263
        %v2290 = vpack.c.b16 %v2268, %v2266
        %v2291 = vpack.c.b16 %v2269, %v2267
        %v2292 = vpack.c.b16 %v2272, %v2270
        %v2293 = vpack.c.b16 %v2273, %v2271
        %v2294 = vpack.c.b16 %v2276, %v2274
        %v2295 = vpack.c.b16 %v2277, %v2275
        %v2296 = vpack.c.b16 %v2280, %v2278
        %v2297 = vpack.c.b16 %v2281, %v2279
        %2314 = vmatprep.subr.bf16.mxu0 %v2283
        %2315 = vmatpush1.bf16.msra.mxu0 %v2282
        %2316 = vmatprep.subr.bf16.mxu0 %v2285
        %2317 = vmatpush1.bf16.msra.mxu0 %v2284
        %2318 = vmatprep.subr.bf16.mxu0 %v2287
        %2319 = vmatpush1.bf16.msra.mxu0 %v2286
        %2320 = vmatprep.subr.bf16.mxu0 %v2289
        %2321 = vmatpush1.bf16.msra.mxu0 %v2288
        %2322 = vmatprep.subr.bf16.mxu0 %v2291
        %2323 = vmatpush1.bf16.msra.mxu0 %v2290
        %2324 = vmatprep.subr.bf16.mxu0 %v2293
        %2325 = vmatpush1.bf16.msra.mxu0 %v2292
        %2326 = vmatprep.subr.bf16.mxu0 %v2295
        %2327 = vmatpush1.bf16.msra.mxu0 %v2294
        %2328 = vmatprep.subr.bf16.mxu0 %v2297
        %2329 = vmatpush1.bf16.msra.mxu0 %v2296
        %2330 = vmatprep.subr.bf16.mxu0 0
        %2331 = vmatpush1.bf16.msra.mxu0 0
        %2332 = vmatprep.subr.bf16.mxu0 0
        %2333 = vmatpush1.bf16.msra.mxu0 0
        %2334 = vmatprep.subr.bf16.mxu0 0
        %2335 = vmatpush1.bf16.msra.mxu0 0
        %2336 = vmatprep.subr.bf16.mxu0 0
        %2337 = vmatpush1.bf16.msra.mxu0 0
        %2338 = vmatprep.subr.bf16.mxu0 0
        %2339 = vmatpush1.bf16.msra.mxu0 0
        %2340 = vmatprep.subr.bf16.mxu0 0
        %2341 = vmatpush1.bf16.msra.mxu0 0
        %2342 = vmatprep.subr.bf16.mxu0 0
        %2343 = vmatpush1.bf16.msra.mxu0 0
        %2344 = vmatprep.subr.bf16.mxu0 0
        %2345 = vmatpush1.bf16.msra.mxu0 0
        %2346 = vmatprep.mubr.bf16.mxu0 0
        %2347 = vmatmul.mubr.bf16.gmra.mrb[0].mxu0 %v2204
        %v2348 = vpop.f32.mrb[0].mxu0
        %v2349 = vadd.f32 %v2227, %v2348
        %v2350 = vpop.f32.mrb[0].mxu0
        %v2351 = vadd.f32 %v2231, %v2350
        %v2352 = vpop.f32.mrb[0].mxu0
        %v2353 = vadd.f32 %v2227, %v2352
        %v2354 = vpop.f32.mrb[0].mxu0
        %v2355 = vadd.f32 %v2231, %v2354
        %2356 = vmatprep.mubr.bf16.mxu0 0
        %2357 = vmatmul.mubr.bf16.gmra.mrb[0].mxu0 %v2205
        %v2358 = vpop.f32.mrb[0].mxu0
        %v2359 = vadd.f32 %v2227, %v2358
        %v2360 = vpop.f32.mrb[0].mxu0
        %v2361 = vadd.f32 %v2231, %v2360
        %v2362 = vpop.f32.mrb[0].mxu0
        %v2363 = vadd.f32 %v2227, %v2362
        %v2364 = vpop.f32.mrb[0].mxu0
        %v2365 = vadd.f32 %v2231, %v2364
        %2366 = vdwg.mxu0
        %v2367 = vmax.f32 %v2349, 0.0
        %v2368 = vmax.f32 %v2351, 0.0
        %v2369 = vmax.f32 %v2353, 0.0
        %v2370 = vmax.f32 %v2355, 0.0
        %v2371 = vmax.f32 %v2359, 0.0
        %v2372 = vmax.f32 %v2361, 0.0
        %v2373 = vmax.f32 %v2363, 0.0
        %v2374 = vmax.f32 %v2365, 0.0
        %v2375 = vpack.c.bf16 %v2369, %v2367
        %v2376 = vpack.c.bf16 %v2370, %v2368
        %v2377 = vpack.c.bf16 %v2373, %v2371
        %v2378 = vpack.c.bf16 %v2374, %v2372
        %v2379 = vld [vmem:[#allocation11] sm:$0xf]
        %v2380 = vld [vmem:[#allocation11 + $0x4] sm:$0xf]
        %v2381 = vld [vmem:[#allocation11 + $0x8] sm:$0xf]
        %v2382 = vld [vmem:[#allocation11 + $0xc] sm:$0xf]
        %v2383 = vld [vmem:[#allocation11 + $0x10] sm:$0xf]
        %v2384 = vld [vmem:[#allocation11 + $0x14] sm:$0xf]
        %v2385 = vld [vmem:[#allocation11 + $0x18] sm:$0xf]
        %v2386 = vld [vmem:[#allocation11 + $0x1c] sm:$0xf]
        %v2387 = vld [vmem:[#allocation11 + $0x20] sm:$0xf]
        %v2388 = vld [vmem:[#allocation11 + $0x24] sm:$0xf]
        %v2389 = vld [vmem:[#allocation11 + $0x28] sm:$0xf]
        %v2390 = vld [vmem:[#allocation11 + $0x2c] sm:$0xf]
        %v2391 = vld [vmem:[#allocation11 + $0x30] sm:$0xf]
        %v2392 = vld [vmem:[#allocation11 + $0x34] sm:$0xf]
        %v2393 = vld [vmem:[#allocation11 + $0x38] sm:$0xf]
        %v2394 = vld [vmem:[#allocation11 + $0x3c] sm:$0xf]
        %v2395 = vld [vmem:[#allocation11 + $0x40] sm:$0xf]
        %v2396 = vld [vmem:[#allocation11 + $0x44] sm:$0xf]
        %v2397 = vld [vmem:[#allocation11 + $0x48] sm:$0xf]
        %v2398 = vld [vmem:[#allocation11 + $0x4c] sm:$0xf]
        %v2399 = vld [vmem:[#allocation11 + $0x50] sm:$0xf]
        %v2400 = vld [vmem:[#allocation11 + $0x54] sm:$0xf]
        %v2401 = vld [vmem:[#allocation11 + $0x58] sm:$0xf]
        %v2402 = vld [vmem:[#allocation11 + $0x5c] sm:$0xf]
        %v2403 = vld [vmem:[#allocation11 + $0x60] sm:$0xf]
        %v2404 = vld [vmem:[#allocation11 + $0x64] sm:$0xf]
        %v2405 = vld [vmem:[#allocation11 + $0x68] sm:$0xf]
        %v2406 = vld [vmem:[#allocation11 + $0x6c] sm:$0xf]
        %v2407 = vld [vmem:[#allocation11 + $0x70] sm:$0xf]
        %v2408 = vld [vmem:[#allocation11 + $0x74] sm:$0xf]
        %v2409 = vld [vmem:[#allocation11 + $0x78] sm:$0xf]
        %v2410 = vld [vmem:[#allocation11 + $0x7c] sm:$0xf]
        %v2411 = vld [vmem:[%s11] sm:$0x1]
        %v2413 = vlaneseq
        %v2414 = vshrl.u32 %v2413, 7
        %v2415 = vsub.s32 0, %v2414
        %v2416 = vrot.slane %v2411, %v2415
        %v2450 = vunpack.c.l.b16 %v2379
        %v2451 = vunpack.c.l.b16 %v2380
        %v2452 = vunpack.c.l.b16 %v2381
        %v2453 = vunpack.c.l.b16 %v2382
        %v2454 = vunpack.c.l.b16 %v2383
        %v2455 = vunpack.c.l.b16 %v2384
        %v2456 = vunpack.c.l.b16 %v2385
        %v2457 = vunpack.c.l.b16 %v2386
        %v2458 = vunpack.c.l.b16 %v2387
        %v2459 = vunpack.c.l.b16 %v2388
        %v2460 = vunpack.c.l.b16 %v2389
        %v2461 = vunpack.c.l.b16 %v2390
        %v2462 = vunpack.c.l.b16 %v2391
        %v2463 = vunpack.c.l.b16 %v2392
        %v2464 = vunpack.c.l.b16 %v2393
        %v2465 = vunpack.c.l.b16 %v2394
        %v2466 = vunpack.c.l.b16 %v2395
        %v2467 = vunpack.c.l.b16 %v2396
        %v2468 = vunpack.c.l.b16 %v2397
        %v2469 = vunpack.c.l.b16 %v2398
        %v2470 = vunpack.c.l.b16 %v2399
        %v2471 = vunpack.c.l.b16 %v2400
        %v2472 = vunpack.c.l.b16 %v2401
        %v2473 = vunpack.c.l.b16 %v2402
        %v2474 = vunpack.c.l.b16 %v2403
        %v2475 = vunpack.c.l.b16 %v2404
        %v2476 = vunpack.c.l.b16 %v2405
        %v2477 = vunpack.c.l.b16 %v2406
        %v2478 = vunpack.c.l.b16 %v2407
        %v2479 = vunpack.c.l.b16 %v2408
        %v2480 = vunpack.c.l.b16 %v2409
        %v2481 = vunpack.c.l.b16 %v2410
        %v2482 = vpack.c.b16 %v2451, %v2450
        %v2483 = vpack.c.b16 %v2453, %v2452
        %v2484 = vpack.c.b16 %v2455, %v2454
        %v2485 = vpack.c.b16 %v2457, %v2456
        %v2486 = vpack.c.b16 %v2459, %v2458
        %v2487 = vpack.c.b16 %v2461, %v2460
        %v2488 = vpack.c.b16 %v2463, %v2462
        %v2489 = vpack.c.b16 %v2465, %v2464
        %v2490 = vpack.c.b16 %v2467, %v2466
        %v2491 = vpack.c.b16 %v2469, %v2468
        %v2492 = vpack.c.b16 %v2471, %v2470
        %v2493 = vpack.c.b16 %v2473, %v2472
        %v2494 = vpack.c.b16 %v2475, %v2474
        %v2495 = vpack.c.b16 %v2477, %v2476
        %v2496 = vpack.c.b16 %v2479, %v2478
        %v2497 = vpack.c.b16 %v2481, %v2480
        %2514 = vmatprep.subr.bf16.mxu0 0
        %2515 = vmatpush1.bf16.msra.mxu0 %v2482
        %2516 = vmatprep.subr.bf16.mxu0 0
        %2517 = vmatpush1.bf16.msra.mxu0 %v2483
        %2518 = vmatprep.subr.bf16.mxu0 0
        %2519 = vmatpush1.bf16.msra.mxu0 %v2484
        %2520 = vmatprep.subr.bf16.mxu0 0
        %2521 = vmatpush1.bf16.msra.mxu0 %v2485
        %2522 = vmatprep.subr.bf16.mxu0 0
        %2523 = vmatpush1.bf16.msra.mxu0 %v2486
        %2524 = vmatprep.subr.bf16.mxu0 0
        %2525 = vmatpush1.bf16.msra.mxu0 %v2487
        %2526 = vmatprep.subr.bf16.mxu0 0
        %2527 = vmatpush1.bf16.msra.mxu0 %v2488
        %2528 = vmatprep.subr.bf16.mxu0 0
        %2529 = vmatpush1.bf16.msra.mxu0 %v2489
        %2530 = vmatprep.subr.bf16.mxu0 0
        %2531 = vmatpush1.bf16.msra.mxu0 %v2490
        %2532 = vmatprep.subr.bf16.mxu0 0
        %2533 = vmatpush1.bf16.msra.mxu0 %v2491
        %2534 = vmatprep.subr.bf16.mxu0 0
        %2535 = vmatpush1.bf16.msra.mxu0 %v2492
        %2536 = vmatprep.subr.bf16.mxu0 0
        %2537 = vmatpush1.bf16.msra.mxu0 %v2493
        %2538 = vmatprep.subr.bf16.mxu0 0
        %2539 = vmatpush1.bf16.msra.mxu0 %v2494
        %2540 = vmatprep.subr.bf16.mxu0 0
        %2541 = vmatpush1.bf16.msra.mxu0 %v2495
        %2542 = vmatprep.subr.bf16.mxu0 0
        %2543 = vmatpush1.bf16.msra.mxu0 %v2496
        %2544 = vmatprep.subr.bf16.mxu0 0
        %2545 = vmatpush1.bf16.msra.mxu0 %v2497
        %2546 = vmatprep.mubr.bf16.mxu0 %v2376
        %2547 = vmatmul.mubr.bf16.gmra.mrb[0].mxu0 %v2375
        %v2548 = vpop.f32.mrb[0].mxu0
        %v2549 = vadd.f32 %v2416, %v2548
        %v2550 = vpop.f32.mrb[0].mxu0
        %v2551 = vpop.f32.mrb[0].mxu0
        %v2552 = vadd.f32 %v2416, %v2551
        %v2553 = vpop.f32.mrb[0].mxu0
        %2554 = vmatprep.mubr.bf16.mxu0 %v2378
        %2555 = vmatmul.mubr.bf16.gmra.mrb[0].mxu0 %v2377
        %v2556 = vpop.f32.mrb[0].mxu0
        %v2557 = vadd.f32 %v2416, %v2556
        %v2558 = vpop.f32.mrb[0].mxu0
        %v2559 = vpop.f32.mrb[0].mxu0
        %v2560 = vadd.f32 %v2416, %v2559
        %v2561 = vpop.f32.mrb[0].mxu0
        %2562 = vdwg.mxu0
        %v2563 = vadd.f32 %v2200, %v2549
        %v2564 = vadd.f32 %v2201, %v2552
        %v2565 = vadd.f32 %v2202, %v2557
        %v2566 = vadd.f32 %v2203, %v2560
        %v2567 = vld [vmem:[%s12] sm:$0x1]
        %v2568 = vld [vmem:[%s13] sm:$0x1]
        %2569 = vadd.xlane.f32.xlu0 %v2563
        %v2570 = vpop.xlane.xlu0 %2569
        %2571 = vadd.xlane.f32.xlu0 %v2564
        %v2572 = vpop.xlane.xlu0 %2571
        %2573 = vadd.xlane.f32.xlu0 %v2565
        %v2574 = vpop.xlane.xlu0 %2573
        %2575 = vadd.xlane.f32.xlu0 %v2566
        %v2576 = vpop.xlane.xlu0 %2575
        %v2577 = vmul.f32 %v2570, %v2147
        %v2578 = vmul.f32 %v2572, %v2147
        %v2579 = vmul.f32 %v2574, %v2147
        %v2580 = vmul.f32 %v2576, %v2147
        %v2581 = vsub.f32 %v2563, %v2577
        %v2582 = vsub.f32 %v2564, %v2578
        %v2583 = vsub.f32 %v2565, %v2579
        %v2584 = vsub.f32 %v2566, %v2580
        %v2585 = vmul.f32 %v2581, %v2581
        %v2586 = vmul.f32 %v2582, %v2582
        %v2587 = vmul.f32 %v2583, %v2583
        %v2588 = vmul.f32 %v2584, %v2584
        %2589 = vadd.xlane.f32.xlu0 %v2585
        %v2590 = vpop.xlane.xlu0 %2589
        %2591 = vadd.xlane.f32.xlu0 %v2586
        %v2592 = vpop.xlane.xlu0 %2591
        %2593 = vadd.xlane.f32.xlu0 %v2587
        %v2594 = vpop.xlane.xlu0 %2593
        %2595 = vadd.xlane.f32.xlu0 %v2588
        %v2596 = vpop.xlane.xlu0 %2595
        %v2597 = vmul.f32 %v2590, %v2147
        %v2598 = vmul.f32 %v2592, %v2147
        %v2599 = vmul.f32 %v2594, %v2147
        %v2600 = vmul.f32 %v2596, %v2147
        %v2601 = vadd.f32 %v2597, 1e-05
        %v2602 = vadd.f32 %v2598, 1e-05
        %v2603 = vadd.f32 %v2599, 1e-05
        %v2604 = vadd.f32 %v2600, 1e-05
        %v2605 = vrsqrt.pop %v2601
        %v2606 = vrsqrt.pop %v2602
        %v2607 = vrsqrt.pop %v2603
        %v2608 = vrsqrt.pop %v2604
        %v2609 = vmul.f32 %v2581, %v2605
        %v2610 = vmul.f32 %v2582, %v2606
        %v2611 = vmul.f32 %v2583, %v2607
        %v2612 = vmul.f32 %v2584, %v2608
        %v2614 = vlaneseq
        %v2615 = vshrl.u32 %v2614, 7
        %v2616 = vsub.s32 0, %v2615
        %v2617 = vrot.slane %v2567, %v2616
        %v2619 = vmul.f32 %v2609, %v2617
        %v2620 = vmul.f32 %v2610, %v2617
        %v2621 = vmul.f32 %v2611, %v2617
        %v2622 = vmul.f32 %v2612, %v2617
        %v2624 = vlaneseq
        %v2625 = vshrl.u32 %v2624, 7
        %v2626 = vsub.s32 0, %v2625
        %v2627 = vrot.slane %v2568, %v2626
        %v2629 = vadd.f32 %v2619, %v2627
        %v2630 = vadd.f32 %v2620, %v2627
        %v2631 = vadd.f32 %v2621, %v2627
        %v2632 = vadd.f32 %v2622, %v2627
        %2633 = vst [vmem:[%s559] sm:$0xff] %v2629
        %2634 = vst [vmem:[%s559 + $0x8] sm:$0xff] %v2630
        %2635 = vst [vmem:[%s559 + $0x10] sm:$0xff] %v2631
        %2636 = vst [vmem:[%s559 + $0x18] sm:$0xff] %v2632
        %s2637 = sand.u32 %s341, 1
        %s2638 = scalar_lea.sflag [#allocation4], %s2637
        %s2639 = sand.u32 %s341, 1
        %s2640 = smul.addr %s2639, 32
        %s2641 = scalar_lea.vmem [#allocation13], %s2640
        // Predicated region
        $region101: #{tpu_custom_call.1} parent=75 // pred_check
          %p2642 = pneg %p351
        $region102: #{tpu_custom_call.1} parent=75 // pred_check_branch
          %2644 = sbr.rel (%p2642) target = $region104
        $region103: #{tpu_custom_call.1} parent=75 // pred_region
          %s2645 = smul.u32 2, %s34
          %s2647 = ssub.s32 512, 512
          %2648 = vsyncadd %s2638, %s2647
          %s2649 = smul.addr %s2645, 2
          %s2650 = smul.addr %s2649, 128
          %s2651 = scalar_lea.hbm %s14, %s2650
          %s2652 = sshll.u32 %s2641, 4
          %s2653 = int_to_ptr.vmem [resolvable:$true] %s2652
          %2658 = dma.vmem_to_hbm [thread:$0]  %s2653, 512, %s2651, %s2638, 128, 128, 8
        $region104: #{tpu_custom_call.1} parent=75 // pred_fallthru
          _
      $region76: #{tpu_custom_call.1} parent=5 // pred_fallthru
        _
      %p2659 = scmp.le.s32.totalorder 2, %s29
      // Predicated region
      $region105: #{tpu_custom_call.1} parent=5 // pred_check
        %p2660 = pneg %p2659
      $region106: #{tpu_custom_call.1} parent=5 // pred_check_branch
        %2662 = sbr.rel (%p2660) target = $region108
      $region107: #{tpu_custom_call.1} parent=5 // pred_region
        %s2663 = ssub.s32 %s29, 2
        // Predicated region
        $region109: #{tpu_custom_call.1} parent=107 // pred_check
          %p2664 = pneg %p357
        $region110: #{tpu_custom_call.1} parent=107 // pred_check_branch
          %2666 = sbr.rel (%p2664) target = $region112
        $region111: #{tpu_custom_call.1} parent=107 // pred_region
          %s2667 = sand.u32 %s342, 1
          %s2668 = scalar_lea.sflag [#allocation4], %s2667
          %s2669 = sand.u32 %s342, 1
          %s2670 = smul.addr %s2669, 32
          %s2671 = scalar_lea.vmem [#allocation13], %s2670
          %2672 = dma.done %s2668, 512
        $region112: #{tpu_custom_call.1} parent=107 // pred_fallthru
          _
      $region108: #{tpu_custom_call.1} parent=5 // pred_fallthru
        _
    $region6: #{tpu_custom_call.1} parent=1 // loop_footer
      %s33 = sadd.s32 1, %s29
    $region7: #{tpu_custom_call.1} parent=1 // loop_footer_branch
      %28 = sbr.rel target = $region3
    $region8: #{tpu_custom_call.1} parent=1 // loop_exit
      _
    %2673 = vsyncpa [#allocation3], 1
    %s2674 = scalar_lea.sflag [#allocation3], 1
    %2675 = vsyncpa %s2674, 1
    %2676 = vsyncpa [#allocation6], 1
    %2677 = vsyncpa [#allocation9], 1
    %2678 = vsyncpa [#allocation12], 1
    %2679 = vsyncpa [#allocation4], 1
    %s2680 = scalar_lea.sflag [#allocation4], 1
    %2681 = vsyncpa %s2680, 1

</llo_original>
